<compile_context>
chip_gen: v6e
topology: v6e:2x2x1
jax: 0.10.0
libtpu: 0.0.40
codegen_flags: <defaults>
</compile_context>

<pallas_src>
import functools

import jax
import jax.numpy as jnp
from jax import lax
from jax.experimental import pallas as pl
from jax.experimental.pallas import tpu as pltpu

EXPANSION = 4


# ----------------------------- fused kernel ---------------------------------

def _bottleneck_kernel(*refs, H, W, stride, has_ds):
    """Whole bottleneck block for one image (padded flat-slab layout)."""
    if has_ds:
        (x_ref, mask_ref, w1_ref, s1_ref, b1_ref, w2_ref, s2_ref, b2_ref,
         w3_ref, s3_ref, b3_ref, ws_ref, ss_ref, bs_ref, o_ref, y1_ref) = refs
    else:
        (x_ref, mask_ref, w1_ref, s1_ref, b1_ref, w2_ref, s2_ref, b2_ref,
         w3_ref, s3_ref, b3_ref, o_ref, y1_ref) = refs

    Wpad = W + 2
    Ho = (H - 1) // stride + 1
    Lout = Ho * Wpad                     # padded-width flattened output length
    planes = w1_ref.shape[1]

    # ---- conv1 (1x1) + bn1 + relu over the whole padded slab ----------------
    xb = x_ref[0].astype(jnp.bfloat16)                         # (slab, Cin)
    y1 = jnp.dot(xb, w1_ref[...], preferred_element_type=jnp.float32)
    y1 = jnp.maximum(y1 * s1_ref[...] + b1_ref[...], 0.0)
    # zero the spatial-padding rows: bn1's bias would otherwise leak non-zero
    # values into conv2's zero padding.
    y1_ref[...] = y1 * mask_ref[...]                           # f32 scratch

    # ---- conv2 (3x3, stride, pad=1) + bn2 + relu: 9 shifted slab windows ----
    acc = jnp.zeros((Lout, planes), jnp.float32)
    for kh in range(3):
        for kw in range(3):
            off = kh * Wpad + kw
            if stride == 1:
                win = y1_ref[off:off + Lout, :]
            else:
                win = y1_ref[pl.ds(off, Lout, stride=stride), :]
            acc += jnp.dot(win.astype(jnp.bfloat16), w2_ref[kh * 3 + kw],
                           preferred_element_type=jnp.float32)
    y2 = jnp.maximum(acc * s2_ref[...] + b2_ref[...], 0.0)

    # ---- conv3 (1x1) + bn3 ---------------------------------------------------
    y3 = jnp.dot(y2.astype(jnp.bfloat16), w3_ref[...],
                 preferred_element_type=jnp.float32)
    y3 = y3 * s3_ref[...] + b3_ref[...]

    # ---- shortcut (1x1 conv + bn, or identity) + residual add + relu ---------
    so = Wpad + 1                        # centre of the 3x3 window = identity
    if stride == 1:
        xs = x_ref[0, so:so + Lout, :]
    else:
        xs = x_ref[0, pl.ds(so, Lout, stride=stride), :]
    if has_ds:
        r = jnp.dot(xs.astype(jnp.bfloat16), ws_ref[...],
                    preferred_element_type=jnp.float32)
        r = r * ss_ref[...] + bs_ref[...]
    else:
        r = xs.astype(jnp.float32)
    o_ref[0] = jnp.maximum(y3 + r, 0.0).astype(o_ref.dtype)


# ----------------------------- wrapper ---------------------------------------

def bottleneck_forward(x_nchw, p, *, stride=1):
    """Pallas implementation of Bottleneck.forward (NCHW in / NCHW out)."""
    x = jnp.transpose(x_nchw, (0, 2, 3, 1))                  # NCHW -> NHWC
    N, H, W, Cin = x.shape
    planes = p["w1"].shape[1]
    cout = p["w3"].shape[1]                                   # EXPANSION*planes
    Hpad, Wpad = H + 2, W + 2
    Ho = (H - 1) // stride + 1
    Wo = (W - 1) // stride + 1
    Lout = Ho * Wpad

    # slab length: long enough for the farthest shifted window (junk lanes
    # included), rounded up to a sublane multiple.
    slab_len = max(Hpad * Wpad, stride * (Lout - 1) + 2 * Wpad + 3)
    slab_len = ((slab_len + 7) // 8) * 8

    # zero-pad spatially once and flatten (h, w) -> one leading axis per image.
    x_slab = jnp.pad(x, ((0, 0), (1, 1), (1, 1), (0, 0)))
    x_slab = x_slab.reshape(N, Hpad * Wpad, Cin)
    if slab_len > Hpad * Wpad:
        x_slab = jnp.pad(x_slab, ((0, 0), (0, slab_len - Hpad * Wpad), (0, 0)))

    # 1.0 at valid (non-padding) slab rows, 0.0 elsewhere.
    rows = jnp.arange(slab_len, dtype=jnp.int32)
    ph, pw = rows // Wpad, rows % Wpad
    mask = (((ph >= 1) & (ph <= H) & (pw >= 1) & (pw <= W))
            .astype(jnp.float32).reshape(slab_len, 1))

    has_ds = "ws" in p
    bf16 = jnp.bfloat16

    def resident(shape):                 # weight / BN blocks resident in VMEM
        return pl.BlockSpec(shape, lambda n: (0,) * len(shape))

    args = [
        x_slab, mask,
        p["w1"].astype(bf16), p["s1"].reshape(1, planes), p["b1"].reshape(1, planes),
        p["w2"].astype(bf16), p["s2"].reshape(1, planes), p["b2"].reshape(1, planes),
        p["w3"].astype(bf16), p["s3"].reshape(1, cout), p["b3"].reshape(1, cout),
    ]
    in_specs = [
        pl.BlockSpec((1, slab_len, Cin), lambda n: (n, 0, 0)),
        resident((slab_len, 1)),
        resident((Cin, planes)), resident((1, planes)), resident((1, planes)),
        resident((9, planes, planes)), resident((1, planes)), resident((1, planes)),
        resident((planes, cout)), resident((1, cout)), resident((1, cout)),
    ]
    if has_ds:
        args += [p["ws"].astype(bf16),
                 p["ss"].reshape(1, cout), p["bs"].reshape(1, cout)]
        in_specs += [resident((Cin, cout)), resident((1, cout)), resident((1, cout))]

    kern = functools.partial(_bottleneck_kernel, H=H, W=W, stride=stride,
                             has_ds=has_ds)
    out = pl.pallas_call(
        kern,
        grid=(N,),
        out_shape=jax.ShapeDtypeStruct((N, Lout, cout), jnp.float32),
        in_specs=in_specs,
        out_specs=pl.BlockSpec((1, Lout, cout), lambda n: (n, 0, 0)),
        scratch_shapes=[pltpu.VMEM((slab_len, planes), jnp.float32)],
        compiler_params=pltpu.CompilerParams(
            dimension_semantics=("parallel",)),
    )(*args)

    # strip the junk lanes of the padded-width layout, restore NCHW.
    out = out.reshape(N, Ho, Wpad, cout)[:, :, :Wo, :]
    return jnp.transpose(out, (0, 3, 1, 2)).astype(x_nchw.dtype)


# ----------------------------- parameters ------------------------------------

def init_params(key, in_planes, planes, stride):
    """Deterministic synthetic parameters (conv weights + folded BN)."""
    eps = 1e-5
    keys = iter(jax.random.split(key, 32))

    def bn_fold(c):
        gamma = 1.0 + 0.1 * jax.random.normal(next(keys), (c,), jnp.float32)
        beta = 0.1 * jax.random.normal(next(keys), (c,), jnp.float32)
        mean = 0.1 * jax.random.normal(next(keys), (c,), jnp.float32)
        var = 0.5 + jnp.abs(jax.random.normal(next(keys), (c,), jnp.float32))
        scale = gamma / jnp.sqrt(var + eps)
        bias = beta - mean * scale
        return scale, bias

    p = {}
    p["w1"] = 0.2 * jax.random.normal(next(keys), (in_planes, planes), jnp.float32)
    p["s1"], p["b1"] = bn_fold(planes)
    p["w2"] = 0.2 * jax.random.normal(next(keys), (9, planes, planes), jnp.float32)
    p["s2"], p["b2"] = bn_fold(planes)
    p["w3"] = 0.2 * jax.random.normal(
        next(keys), (planes, EXPANSION * planes), jnp.float32)
    p["s3"], p["b3"] = bn_fold(EXPANSION * planes)
    if stride != 1 or in_planes != EXPANSION * planes:
        p["ws"] = 0.2 * jax.random.normal(
            next(keys), (in_planes, EXPANSION * planes), jnp.float32)
        p["ss"], p["bs"] = bn_fold(EXPANSION * planes)
    return p


# ----------------------------- reference -------------------------------------

def ref_forward(x_nchw, p, *, stride=1):
    """Pure-JAX reference mirroring the kernel's bf16 rounding points."""
    f32, bf16 = jnp.float32, jnp.bfloat16
    x = jnp.transpose(x_nchw, (0, 2, 3, 1))
    planes = p["w1"].shape[1]

    y1 = jnp.einsum("nhwc,cd->nhwd", x.astype(bf16), p["w1"].astype(bf16),
                    preferred_element_type=f32)
    y1 = jax.nn.relu(y1 * p["s1"] + p["b1"])

    w2 = p["w2"].astype(bf16).reshape(3, 3, planes, planes)
    y2 = lax.conv_general_dilated(
        y1.astype(bf16), w2, (stride, stride), ((1, 1), (1, 1)),
        dimension_numbers=("NHWC", "HWIO", "NHWC"),
        preferred_element_type=f32)
    y2 = jax.nn.relu(y2 * p["s2"] + p["b2"])

    y3 = jnp.einsum("nhwc,cd->nhwd", y2.astype(bf16), p["w3"].astype(bf16),
                    preferred_element_type=f32)
    y3 = y3 * p["s3"] + p["b3"]

    xs = x[:, ::stride, ::stride, :] if stride != 1 else x
    if "ws" in p:
        r = jnp.einsum("nhwc,cd->nhwd", xs.astype(bf16), p["ws"].astype(bf16),
                       preferred_element_type=f32)
        r = r * p["ss"] + p["bs"]
    else:
        r = xs
    o = jax.nn.relu(y3 + r)
    return jnp.transpose(o, (0, 3, 1, 2))


# ------------------------------- main -----------------------------------------

if __name__ == "__main__":
    key = jax.random.PRNGKey(0)
    kx, kp = jax.random.split(key)

    in_planes, planes, stride = 4, 4, 1
    x = jax.random.normal(kx, (2, in_planes, 16, 16), jnp.float32)   # NCHW

    params = init_params(kp, in_planes, planes, stride)

    fwd = jax.jit(bottleneck_forward, static_argnames=("stride",))
    out = jax.block_until_ready(fwd(x, params, stride=stride))

    assert out.shape == (2, EXPANSION * planes, 16, 16), out.shape

    ref = ref_forward(x, params, stride=stride)
    err = float(jnp.max(jnp.abs(out - ref)))
    if err > 2e-3:
        raise AssertionError(f"Pallas output mismatch vs reference: {err}")

    print("KERNEL_OK")
</pallas_src>

<mosaic_0001>
module attributes {stable_mosaic.version = 11 : i64} {
  func.func @_bottleneck_kernel(%arg0: i32, %arg1: memref<1x328x4xf32, #tpu.memory_space<vmem>>, %arg2: memref<328x1xf32, #tpu.memory_space<vmem>>, %arg3: memref<4x4xbf16, #tpu.memory_space<vmem>>, %arg4: memref<1x4xf32, #tpu.memory_space<vmem>>, %arg5: memref<1x4xf32, #tpu.memory_space<vmem>>, %arg6: memref<9x4x4xbf16, #tpu.memory_space<vmem>>, %arg7: memref<1x4xf32, #tpu.memory_space<vmem>>, %arg8: memref<1x4xf32, #tpu.memory_space<vmem>>, %arg9: memref<4x16xbf16, #tpu.memory_space<vmem>>, %arg10: memref<1x16xf32, #tpu.memory_space<vmem>>, %arg11: memref<1x16xf32, #tpu.memory_space<vmem>>, %arg12: memref<4x16xbf16, #tpu.memory_space<vmem>>, %arg13: memref<1x16xf32, #tpu.memory_space<vmem>>, %arg14: memref<1x16xf32, #tpu.memory_space<vmem>>, %arg15: memref<1x288x16xf32, #tpu.memory_space<vmem>>, %arg16: memref<328x4xf32, #tpu.memory_space<vmem>>) attributes {dimension_semantics = [#tpu.dimension_semantics<parallel>], iteration_bounds = array<i64: 2>, scalar_prefetch = 0 : i64, scratch_operands = 1 : i64, tpu.core_type = #tpu.core_type<tc>, window_params = [{transform_indices = @transform_0, window_bounds = array<i64: 1, 328, 4>}, {pipeline_mode = #tpu.pipeline_mode<synchronous>, transform_indices = @transform_1, window_bounds = array<i64: 328, 1>}, {pipeline_mode = #tpu.pipeline_mode<synchronous>, transform_indices = @transform_2, window_bounds = array<i64: 4, 4>}, {pipeline_mode = #tpu.pipeline_mode<synchronous>, transform_indices = @transform_3, window_bounds = array<i64: 1, 4>}, {pipeline_mode = #tpu.pipeline_mode<synchronous>, transform_indices = @transform_4, window_bounds = array<i64: 1, 4>}, {pipeline_mode = #tpu.pipeline_mode<synchronous>, transform_indices = @transform_5, window_bounds = array<i64: 9, 4, 4>}, {pipeline_mode = #tpu.pipeline_mode<synchronous>, transform_indices = @transform_6, window_bounds = array<i64: 1, 4>}, {pipeline_mode = #tpu.pipeline_mode<synchronous>, transform_indices = @transform_7, window_bounds = array<i64: 1, 4>}, {pipeline_mode = #tpu.pipeline_mode<synchronous>, transform_indices = @transform_8, window_bounds = array<i64: 4, 16>}, {pipeline_mode = #tpu.pipeline_mode<synchronous>, transform_indices = @transform_9, window_bounds = array<i64: 1, 16>}, {pipeline_mode = #tpu.pipeline_mode<synchronous>, transform_indices = @transform_10, window_bounds = array<i64: 1, 16>}, {pipeline_mode = #tpu.pipeline_mode<synchronous>, transform_indices = @transform_11, window_bounds = array<i64: 4, 16>}, {pipeline_mode = #tpu.pipeline_mode<synchronous>, transform_indices = @transform_12, window_bounds = array<i64: 1, 16>}, {pipeline_mode = #tpu.pipeline_mode<synchronous>, transform_indices = @transform_13, window_bounds = array<i64: 1, 16>}, {transform_indices = @transform_14, window_bounds = array<i64: 1, 288, 16>}]} {
    %c0 = arith.constant 0 : index
    %c0_0 = arith.constant 0 : index
    %c0_1 = arith.constant 0 : index
    %0 = vector.load %arg1[%c0, %c0_0, %c0_1] : memref<1x328x4xf32, #tpu.memory_space<vmem>>, vector<1x328x4xf32>
    %1 = vector.shape_cast %0 : vector<1x328x4xf32> to vector<328x4xf32>
    %2 = arith.truncf %1 : vector<328x4xf32> to vector<328x4xbf16>
    %c0_2 = arith.constant 0 : index
    %c0_3 = arith.constant 0 : index
    %3 = vector.load %arg3[%c0_2, %c0_3] : memref<4x4xbf16, #tpu.memory_space<vmem>>, vector<4x4xbf16>
    %cst = arith.constant dense<0.000000e+00> : vector<328x4xf32>
    %4 = tpu.matmul %2, %3, %cst {dimension_numbers = #tpu.dot_dimension_numbers<[1], [0], [0], [1], [0, 0, 1, 1], [], []>} : vector<328x4xbf16>, vector<4x4xbf16>, vector<328x4xf32> -> vector<328x4xf32>
    %c0_4 = arith.constant 0 : index
    %c0_5 = arith.constant 0 : index
    %5 = vector.load %arg4[%c0_4, %c0_5] : memref<1x4xf32, #tpu.memory_space<vmem>>, vector<1x4xf32>
    %6 = vector.broadcast %5 : vector<1x4xf32> to vector<328x4xf32>
    %7 = arith.mulf %4, %6 : vector<328x4xf32>
    %c0_6 = arith.constant 0 : index
    %c0_7 = arith.constant 0 : index
    %8 = vector.load %arg5[%c0_6, %c0_7] : memref<1x4xf32, #tpu.memory_space<vmem>>, vector<1x4xf32>
    %9 = vector.broadcast %8 : vector<1x4xf32> to vector<328x4xf32>
    %10 = arith.addf %7, %9 : vector<328x4xf32>
    %cst_8 = arith.constant 0.000000e+00 : f32
    %11 = vector.broadcast %cst_8 : f32 to vector<328x4xf32>
    %12 = arith.maximumf %10, %11 : vector<328x4xf32>
    %c0_9 = arith.constant 0 : index
    %c0_10 = arith.constant 0 : index
    %13 = vector.load %arg2[%c0_9, %c0_10] : memref<328x1xf32, #tpu.memory_space<vmem>>, vector<328x1xf32>
    %14 = vector.broadcast %13 : vector<328x1xf32> to vector<328x4xf32>
    %15 = arith.mulf %12, %14 : vector<328x4xf32>
    %c0_11 = arith.constant 0 : index
    %c0_12 = arith.constant 0 : index
    %16 = vector.load %arg16[%c0_11, %c0_12] : memref<328x4xf32, #tpu.memory_space<vmem>>, vector<328x4xf32>
    tpu.vector_store %arg16[%c0_11, %c0_12], %15 {strides = array<i32>} : memref<328x4xf32, #tpu.memory_space<vmem>>, vector<328x4xf32>,
    %cst_13 = arith.constant 0.000000e+00 : f32
    %17 = vector.broadcast %cst_13 : f32 to vector<288x4xf32>
    %c0_14 = arith.constant 0 : index
    %c0_15 = arith.constant 0 : index
    %18 = vector.load %arg16[%c0_14, %c0_15] : memref<328x4xf32, #tpu.memory_space<vmem>>, vector<288x4xf32>
    %19 = arith.truncf %18 : vector<288x4xf32> to vector<288x4xbf16>
    %c0_16 = arith.constant 0 : index
    %c0_17 = arith.constant 0 : index
    %c0_18 = arith.constant 0 : index
    %20 = vector.load %arg6[%c0_16, %c0_17, %c0_18] : memref<9x4x4xbf16, #tpu.memory_space<vmem>>, vector<1x4x4xbf16>
    %21 = vector.shape_cast %20 : vector<1x4x4xbf16> to vector<4x4xbf16>
    %cst_19 = arith.constant dense<0.000000e+00> : vector<288x4xf32>
    %22 = tpu.matmul %19, %21, %cst_19 {dimension_numbers = #tpu.dot_dimension_numbers<[1], [0], [0], [1], [0, 0, 1, 1], [], []>} : vector<288x4xbf16>, vector<4x4xbf16>, vector<288x4xf32> -> vector<288x4xf32>
    %23 = arith.addf %17, %22 : vector<288x4xf32>
    %c1 = arith.constant 1 : index
    %c0_20 = arith.constant 0 : index
    %24 = vector.load %arg16[%c1, %c0_20] : memref<328x4xf32, #tpu.memory_space<vmem>>, vector<288x4xf32>
    %25 = arith.truncf %24 : vector<288x4xf32> to vector<288x4xbf16>
    %c1_21 = arith.constant 1 : index
    %c0_22 = arith.constant 0 : index
    %c0_23 = arith.constant 0 : index
    %26 = vector.load %arg6[%c1_21, %c0_22, %c0_23] : memref<9x4x4xbf16, #tpu.memory_space<vmem>>, vector<1x4x4xbf16>
    %27 = vector.shape_cast %26 : vector<1x4x4xbf16> to vector<4x4xbf16>
    %cst_24 = arith.constant dense<0.000000e+00> : vector<288x4xf32>
    %28 = tpu.matmul %25, %27, %cst_24 {dimension_numbers = #tpu.dot_dimension_numbers<[1], [0], [0], [1], [0, 0, 1, 1], [], []>} : vector<288x4xbf16>, vector<4x4xbf16>, vector<288x4xf32> -> vector<288x4xf32>
    %29 = arith.addf %23, %28 : vector<288x4xf32>
    %c2 = arith.constant 2 : index
    %c0_25 = arith.constant 0 : index
    %30 = vector.load %arg16[%c2, %c0_25] : memref<328x4xf32, #tpu.memory_space<vmem>>, vector<288x4xf32>
    %31 = arith.truncf %30 : vector<288x4xf32> to vector<288x4xbf16>
    %c2_26 = arith.constant 2 : index
    %c0_27 = arith.constant 0 : index
    %c0_28 = arith.constant 0 : index
    %32 = vector.load %arg6[%c2_26, %c0_27, %c0_28] : memref<9x4x4xbf16, #tpu.memory_space<vmem>>, vector<1x4x4xbf16>
    %33 = vector.shape_cast %32 : vector<1x4x4xbf16> to vector<4x4xbf16>
    %cst_29 = arith.constant dense<0.000000e+00> : vector<288x4xf32>
    %34 = tpu.matmul %31, %33, %cst_29 {dimension_numbers = #tpu.dot_dimension_numbers<[1], [0], [0], [1], [0, 0, 1, 1], [], []>} : vector<288x4xbf16>, vector<4x4xbf16>, vector<288x4xf32> -> vector<288x4xf32>
    %35 = arith.addf %29, %34 : vector<288x4xf32>
    %c18 = arith.constant 18 : index
    %c0_30 = arith.constant 0 : index
    %36 = vector.load %arg16[%c18, %c0_30] : memref<328x4xf32, #tpu.memory_space<vmem>>, vector<288x4xf32>
    %37 = arith.truncf %36 : vector<288x4xf32> to vector<288x4xbf16>
    %c3 = arith.constant 3 : index
    %c0_31 = arith.constant 0 : index
    %c0_32 = arith.constant 0 : index
    %38 = vector.load %arg6[%c3, %c0_31, %c0_32] : memref<9x4x4xbf16, #tpu.memory_space<vmem>>, vector<1x4x4xbf16>
    %39 = vector.shape_cast %38 : vector<1x4x4xbf16> to vector<4x4xbf16>
    %cst_33 = arith.constant dense<0.000000e+00> : vector<288x4xf32>
    %40 = tpu.matmul %37, %39, %cst_33 {dimension_numbers = #tpu.dot_dimension_numbers<[1], [0], [0], [1], [0, 0, 1, 1], [], []>} : vector<288x4xbf16>, vector<4x4xbf16>, vector<288x4xf32> -> vector<288x4xf32>
    %41 = arith.addf %35, %40 : vector<288x4xf32>
    %c19 = arith.constant 19 : index
    %c0_34 = arith.constant 0 : index
    %42 = vector.load %arg16[%c19, %c0_34] : memref<328x4xf32, #tpu.memory_space<vmem>>, vector<288x4xf32>
    %43 = arith.truncf %42 : vector<288x4xf32> to vector<288x4xbf16>
    %c4 = arith.constant 4 : index
    %c0_35 = arith.constant 0 : index
    %c0_36 = arith.constant 0 : index
    %44 = vector.load %arg6[%c4, %c0_35, %c0_36] : memref<9x4x4xbf16, #tpu.memory_space<vmem>>, vector<1x4x4xbf16>
    %45 = vector.shape_cast %44 : vector<1x4x4xbf16> to vector<4x4xbf16>
    %cst_37 = arith.constant dense<0.000000e+00> : vector<288x4xf32>
    %46 = tpu.matmul %43, %45, %cst_37 {dimension_numbers = #tpu.dot_dimension_numbers<[1], [0], [0], [1], [0, 0, 1, 1], [], []>} : vector<288x4xbf16>, vector<4x4xbf16>, vector<288x4xf32> -> vector<288x4xf32>
    %47 = arith.addf %41, %46 : vector<288x4xf32>
    %c20 = arith.constant 20 : index
    %c0_38 = arith.constant 0 : index
    %48 = vector.load %arg16[%c20, %c0_38] : memref<328x4xf32, #tpu.memory_space<vmem>>, vector<288x4xf32>
    %49 = arith.truncf %48 : vector<288x4xf32> to vector<288x4xbf16>
    %c5 = arith.constant 5 : index
    %c0_39 = arith.constant 0 : index
    %c0_40 = arith.constant 0 : index
    %50 = vector.load %arg6[%c5, %c0_39, %c0_40] : memref<9x4x4xbf16, #tpu.memory_space<vmem>>, vector<1x4x4xbf16>
    %51 = vector.shape_cast %50 : vector<1x4x4xbf16> to vector<4x4xbf16>
    %cst_41 = arith.constant dense<0.000000e+00> : vector<288x4xf32>
    %52 = tpu.matmul %49, %51, %cst_41 {dimension_numbers = #tpu.dot_dimension_numbers<[1], [0], [0], [1], [0, 0, 1, 1], [], []>} : vector<288x4xbf16>, vector<4x4xbf16>, vector<288x4xf32> -> vector<288x4xf32>
    %53 = arith.addf %47, %52 : vector<288x4xf32>
    %c36 = arith.constant 36 : index
    %c0_42 = arith.constant 0 : index
    %54 = vector.load %arg16[%c36, %c0_42] : memref<328x4xf32, #tpu.memory_space<vmem>>, vector<288x4xf32>
    %55 = arith.truncf %54 : vector<288x4xf32> to vector<288x4xbf16>
    %c6 = arith.constant 6 : index
    %c0_43 = arith.constant 0 : index
    %c0_44 = arith.constant 0 : index
    %56 = vector.load %arg6[%c6, %c0_43, %c0_44] : memref<9x4x4xbf16, #tpu.memory_space<vmem>>, vector<1x4x4xbf16>
    %57 = vector.shape_cast %56 : vector<1x4x4xbf16> to vector<4x4xbf16>
    %cst_45 = arith.constant dense<0.000000e+00> : vector<288x4xf32>
    %58 = tpu.matmul %55, %57, %cst_45 {dimension_numbers = #tpu.dot_dimension_numbers<[1], [0], [0], [1], [0, 0, 1, 1], [], []>} : vector<288x4xbf16>, vector<4x4xbf16>, vector<288x4xf32> -> vector<288x4xf32>
    %59 = arith.addf %53, %58 : vector<288x4xf32>
    %c37 = arith.constant 37 : index
    %c0_46 = arith.constant 0 : index
    %60 = vector.load %arg16[%c37, %c0_46] : memref<328x4xf32, #tpu.memory_space<vmem>>, vector<288x4xf32>
    %61 = arith.truncf %60 : vector<288x4xf32> to vector<288x4xbf16>
    %c7 = arith.constant 7 : index
    %c0_47 = arith.constant 0 : index
    %c0_48 = arith.constant 0 : index
    %62 = vector.load %arg6[%c7, %c0_47, %c0_48] : memref<9x4x4xbf16, #tpu.memory_space<vmem>>, vector<1x4x4xbf16>
    %63 = vector.shape_cast %62 : vector<1x4x4xbf16> to vector<4x4xbf16>
    %cst_49 = arith.constant dense<0.000000e+00> : vector<288x4xf32>
    %64 = tpu.matmul %61, %63, %cst_49 {dimension_numbers = #tpu.dot_dimension_numbers<[1], [0], [0], [1], [0, 0, 1, 1], [], []>} : vector<288x4xbf16>, vector<4x4xbf16>, vector<288x4xf32> -> vector<288x4xf32>
    %65 = arith.addf %59, %64 : vector<288x4xf32>
    %c38 = arith.constant 38 : index
    %c0_50 = arith.constant 0 : index
    %66 = vector.load %arg16[%c38, %c0_50] : memref<328x4xf32, #tpu.memory_space<vmem>>, vector<288x4xf32>
    %67 = arith.truncf %66 : vector<288x4xf32> to vector<288x4xbf16>
    %c8 = arith.constant 8 : index
    %c0_51 = arith.constant 0 : index
    %c0_52 = arith.constant 0 : index
    %68 = vector.load %arg6[%c8, %c0_51, %c0_52] : memref<9x4x4xbf16, #tpu.memory_space<vmem>>, vector<1x4x4xbf16>
    %69 = vector.shape_cast %68 : vector<1x4x4xbf16> to vector<4x4xbf16>
    %cst_53 = arith.constant dense<0.000000e+00> : vector<288x4xf32>
    %70 = tpu.matmul %67, %69, %cst_53 {dimension_numbers = #tpu.dot_dimension_numbers<[1], [0], [0], [1], [0, 0, 1, 1], [], []>} : vector<288x4xbf16>, vector<4x4xbf16>, vector<288x4xf32> -> vector<288x4xf32>
    %71 = arith.addf %65, %70 : vector<288x4xf32>
    %c0_54 = arith.constant 0 : index
    %c0_55 = arith.constant 0 : index
    %72 = vector.load %arg7[%c0_54, %c0_55] : memref<1x4xf32, #tpu.memory_space<vmem>>, vector<1x4xf32>
    %73 = vector.broadcast %72 : vector<1x4xf32> to vector<288x4xf32>
    %74 = arith.mulf %71, %73 : vector<288x4xf32>
    %c0_56 = arith.constant 0 : index
    %c0_57 = arith.constant 0 : index
    %75 = vector.load %arg8[%c0_56, %c0_57] : memref<1x4xf32, #tpu.memory_space<vmem>>, vector<1x4xf32>
    %76 = vector.broadcast %75 : vector<1x4xf32> to vector<288x4xf32>
    %77 = arith.addf %74, %76 : vector<288x4xf32>
    %cst_58 = arith.constant 0.000000e+00 : f32
    %78 = vector.broadcast %cst_58 : f32 to vector<288x4xf32>
    %79 = arith.maximumf %77, %78 : vector<288x4xf32>
    %80 = arith.truncf %79 : vector<288x4xf32> to vector<288x4xbf16>
    %c0_59 = arith.constant 0 : index
    %c0_60 = arith.constant 0 : index
    %81 = vector.load %arg9[%c0_59, %c0_60] : memref<4x16xbf16, #tpu.memory_space<vmem>>, vector<4x16xbf16>
    %cst_61 = arith.constant dense<0.000000e+00> : vector<288x16xf32>
    %82 = tpu.matmul %80, %81, %cst_61 {dimension_numbers = #tpu.dot_dimension_numbers<[1], [0], [0], [1], [0, 0, 1, 1], [], []>} : vector<288x4xbf16>, vector<4x16xbf16>, vector<288x16xf32> -> vector<288x16xf32>
    %c0_62 = arith.constant 0 : index
    %c0_63 = arith.constant 0 : index
    %83 = vector.load %arg10[%c0_62, %c0_63] : memref<1x16xf32, #tpu.memory_space<vmem>>, vector<1x16xf32>
    %84 = vector.broadcast %83 : vector<1x16xf32> to vector<288x16xf32>
    %85 = arith.mulf %82, %84 : vector<288x16xf32>
    %c0_64 = arith.constant 0 : index
    %c0_65 = arith.constant 0 : index
    %86 = vector.load %arg11[%c0_64, %c0_65] : memref<1x16xf32, #tpu.memory_space<vmem>>, vector<1x16xf32>
    %87 = vector.broadcast %86 : vector<1x16xf32> to vector<288x16xf32>
    %88 = arith.addf %85, %87 : vector<288x16xf32>
    %c0_66 = arith.constant 0 : index
    %c19_67 = arith.constant 19 : index
    %c0_68 = arith.constant 0 : index
    %89 = vector.load %arg1[%c0_66, %c19_67, %c0_68] : memref<1x328x4xf32, #tpu.memory_space<vmem>>, vector<1x288x4xf32>
    %90 = vector.shape_cast %89 : vector<1x288x4xf32> to vector<288x4xf32>
    %91 = arith.truncf %90 : vector<288x4xf32> to vector<288x4xbf16>
    %c0_69 = arith.constant 0 : index
    %c0_70 = arith.constant 0 : index
    %92 = vector.load %arg12[%c0_69, %c0_70] : memref<4x16xbf16, #tpu.memory_space<vmem>>, vector<4x16xbf16>
    %cst_71 = arith.constant dense<0.000000e+00> : vector<288x16xf32>
    %93 = tpu.matmul %91, %92, %cst_71 {dimension_numbers = #tpu.dot_dimension_numbers<[1], [0], [0], [1], [0, 0, 1, 1], [], []>} : vector<288x4xbf16>, vector<4x16xbf16>, vector<288x16xf32> -> vector<288x16xf32>
    %c0_72 = arith.constant 0 : index
    %c0_73 = arith.constant 0 : index
    %94 = vector.load %arg13[%c0_72, %c0_73] : memref<1x16xf32, #tpu.memory_space<vmem>>, vector<1x16xf32>
    %95 = vector.broadcast %94 : vector<1x16xf32> to vector<288x16xf32>
    %96 = arith.mulf %93, %95 : vector<288x16xf32>
    %c0_74 = arith.constant 0 : index
    %c0_75 = arith.constant 0 : index
    %97 = vector.load %arg14[%c0_74, %c0_75] : memref<1x16xf32, #tpu.memory_space<vmem>>, vector<1x16xf32>
    %98 = vector.broadcast %97 : vector<1x16xf32> to vector<288x16xf32>
    %99 = arith.addf %96, %98 : vector<288x16xf32>
    %100 = arith.addf %88, %99 : vector<288x16xf32>
    %cst_76 = arith.constant 0.000000e+00 : f32
    %101 = vector.broadcast %cst_76 : f32 to vector<288x16xf32>
    %102 = arith.maximumf %100, %101 : vector<288x16xf32>
    %c0_77 = arith.constant 0 : index
    %c0_78 = arith.constant 0 : index
    %c0_79 = arith.constant 0 : index
    %103 = vector.load %arg15[%c0_77, %c0_78, %c0_79] : memref<1x288x16xf32, #tpu.memory_space<vmem>>, vector<1x288x16xf32>
    %104 = vector.shape_cast %103 : vector<1x288x16xf32> to vector<288x16xf32>
    %105 = vector.shape_cast %102 : vector<288x16xf32> to vector<1x288x16xf32>
    tpu.vector_store %arg15[%c0_77, %c0_78, %c0_79], %105 {strides = array<i32>} : memref<1x288x16xf32, #tpu.memory_space<vmem>>, vector<1x288x16xf32>,
    return
  }
  func.func @transform_0(%arg0: i32) -> (i32, i32, i32) {
    %c0_i32 = arith.constant 0 : i32
    %c0_i32_0 = arith.constant 0 : i32
    %c0_i32_1 = arith.constant 0 : i32
    return %arg0, %c0_i32, %c0_i32_0 : i32, i32, i32
  }
  func.func @transform_1(%arg0: i32) -> (i32, i32) {
    %c0_i32 = arith.constant 0 : i32
    %c0_i32_0 = arith.constant 0 : i32
    %c0_i32_1 = arith.constant 0 : i32
    return %c0_i32, %c0_i32_0 : i32, i32
  }
  func.func @transform_2(%arg0: i32) -> (i32, i32) {
    %c0_i32 = arith.constant 0 : i32
    %c0_i32_0 = arith.constant 0 : i32
    %c0_i32_1 = arith.constant 0 : i32
    return %c0_i32, %c0_i32_0 : i32, i32
  }
  func.func @transform_3(%arg0: i32) -> (i32, i32) {
    %c0_i32 = arith.constant 0 : i32
    %c0_i32_0 = arith.constant 0 : i32
    %c0_i32_1 = arith.constant 0 : i32
    return %c0_i32, %c0_i32_0 : i32, i32
  }
  func.func @transform_4(%arg0: i32) -> (i32, i32) {
    %c0_i32 = arith.constant 0 : i32
    %c0_i32_0 = arith.constant 0 : i32
    %c0_i32_1 = arith.constant 0 : i32
    return %c0_i32, %c0_i32_0 : i32, i32
  }
  func.func @transform_5(%arg0: i32) -> (i32, i32, i32) {
    %c0_i32 = arith.constant 0 : i32
    %c0_i32_0 = arith.constant 0 : i32
    %c0_i32_1 = arith.constant 0 : i32
    %c0_i32_2 = arith.constant 0 : i32
    return %c0_i32, %c0_i32_0, %c0_i32_1 : i32, i32, i32
  }
  func.func @transform_6(%arg0: i32) -> (i32, i32) {
    %c0_i32 = arith.constant 0 : i32
    %c0_i32_0 = arith.constant 0 : i32
    %c0_i32_1 = arith.constant 0 : i32
    return %c0_i32, %c0_i32_0 : i32, i32
  }
  func.func @transform_7(%arg0: i32) -> (i32, i32) {
    %c0_i32 = arith.constant 0 : i32
    %c0_i32_0 = arith.constant 0 : i32
    %c0_i32_1 = arith.constant 0 : i32
    return %c0_i32, %c0_i32_0 : i32, i32
  }
  func.func @transform_8(%arg0: i32) -> (i32, i32) {
    %c0_i32 = arith.constant 0 : i32
    %c0_i32_0 = arith.constant 0 : i32
    %c0_i32_1 = arith.constant 0 : i32
    return %c0_i32, %c0_i32_0 : i32, i32
  }
  func.func @transform_9(%arg0: i32) -> (i32, i32) {
    %c0_i32 = arith.constant 0 : i32
    %c0_i32_0 = arith.constant 0 : i32
    %c0_i32_1 = arith.constant 0 : i32
    return %c0_i32, %c0_i32_0 : i32, i32
  }
  func.func @transform_10(%arg0: i32) -> (i32, i32) {
    %c0_i32 = arith.constant 0 : i32
    %c0_i32_0 = arith.constant 0 : i32
    %c0_i32_1 = arith.constant 0 : i32
    return %c0_i32, %c0_i32_0 : i32, i32
  }
  func.func @transform_11(%arg0: i32) -> (i32, i32) {
    %c0_i32 = arith.constant 0 : i32
    %c0_i32_0 = arith.constant 0 : i32
    %c0_i32_1 = arith.constant 0 : i32
    return %c0_i32, %c0_i32_0 : i32, i32
  }
  func.func @transform_12(%arg0: i32) -> (i32, i32) {
    %c0_i32 = arith.constant 0 : i32
    %c0_i32_0 = arith.constant 0 : i32
    %c0_i32_1 = arith.constant 0 : i32
    return %c0_i32, %c0_i32_0 : i32, i32
  }
  func.func @transform_13(%arg0: i32) -> (i32, i32) {
    %c0_i32 = arith.constant 0 : i32
    %c0_i32_0 = arith.constant 0 : i32
    %c0_i32_1 = arith.constant 0 : i32
    return %c0_i32, %c0_i32_0 : i32, i32
  }
  func.func @transform_14(%arg0: i32) -> (i32, i32, i32) {
    %c0_i32 = arith.constant 0 : i32
    %c0_i32_0 = arith.constant 0 : i32
    %c0_i32_1 = arith.constant 0 : i32
    return %arg0, %c0_i32, %c0_i32_0 : i32, i32, i32
  }
}

</mosaic_0001>

<llo_original>
// kernel: bottleneck_forward.1
$region0: #{bottleneck_forward.1}
  #allocation0 [shape = 'u32[]', space=smem, size = 0x4, offset = 0x4, fixed_abs, tag = 'smem constant byte address 0x4 - core index']
  #allocation1 [shape = 'u32[144,128]{1,0:T(1,128)}', space=vmem, size = 0x12000, scoped, tag = 'internal scratch']
  #allocation2 [shape = 'f32[328,4]{1,0:T(8,128)}', space=vmem, size = 0x29000, scoped, tag = 'scratch operand']
  %s0 = inlined_call_operand.vmem [shape: f32[2,328,4], index: 0, kind: input, shape index: {}]
  %s1 = inlined_call_operand.vmem [shape: f32[328,1], index: 1, kind: input, shape index: {}]
  %s2 = inlined_call_operand.vmem [shape: bf16[4,4], index: 2, kind: input, shape index: {}]
  %s3 = inlined_call_operand.vmem [shape: f32[1,4], index: 3, kind: input, shape index: {}]
  %s4 = inlined_call_operand.vmem [shape: f32[1,4], index: 4, kind: input, shape index: {}]
  %s5 = inlined_call_operand.vmem [shape: bf16[9,4,4], index: 5, kind: input, shape index: {}]
  %s6 = inlined_call_operand.vmem [shape: f32[1,4], index: 6, kind: input, shape index: {}]
  %s7 = inlined_call_operand.vmem [shape: f32[1,4], index: 7, kind: input, shape index: {}]
  %s8 = inlined_call_operand.vmem [shape: bf16[4,16], index: 8, kind: input, shape index: {}]
  %s9 = inlined_call_operand.vmem [shape: f32[1,16], index: 9, kind: input, shape index: {}]
  %s10 = inlined_call_operand.vmem [shape: f32[1,16], index: 10, kind: input, shape index: {}]
  %s11 = inlined_call_operand.vmem [shape: bf16[4,16], index: 11, kind: input, shape index: {}]
  %s12 = inlined_call_operand.vmem [shape: f32[1,16], index: 12, kind: input, shape index: {}]
  %s13 = inlined_call_operand.vmem [shape: f32[1,16], index: 13, kind: input, shape index: {}]
  %s14 = inlined_call_operand.vmem [shape: f32[2,288,16], index: 14, kind: output, shape index: {}]
  %s15 = sld [smem:[#allocation0]]
  $region89: #{bottleneck_forward.1} parent=0
    _
  %s17 = ssub.s32 1, %s15
  %s18 = scalar_select 0, %s17, %s15
  loop: start=0, step=1, limit=4
  $region2: #{bottleneck_forward.1} parent=0 // loop_pre_header
    _
  $region3: #{bottleneck_forward.1} parent=0 // loop_header
    %s20 = sphi 0, %s24
    %p21 = scmp.ge.s32.totalorder %s20, 4
    %s30 = sphi 0, %s32
    %s33 = sphi 0, %s30
    %s34 = sphi 0, %s33
    %s50 = sphi 0, %s34
    %s54 = sphi 0, %s54
    %s56 = sphi 0, %s54
    %s57 = sphi 0, %s56
    %s71 = sphi 0, %s57
    %s75 = sphi 0, %s75
    %s77 = sphi 0, %s75
    %s78 = sphi 0, %s77
    %s92 = sphi 0, %s78
    %s96 = sphi 0, %s96
    %s98 = sphi 0, %s96
    %s99 = sphi 0, %s98
    %s113 = sphi 0, %s99
    %s117 = sphi 0, %s117
    %s119 = sphi 0, %s117
    %s120 = sphi 0, %s119
    %s134 = sphi 0, %s120
    %s138 = sphi 0, %s138
    %s140 = sphi 0, %s138
    %s141 = sphi 0, %s140
    %s155 = sphi 0, %s141
    %s159 = sphi 0, %s159
    %s161 = sphi 0, %s159
    %s162 = sphi 0, %s161
    %s176 = sphi 0, %s162
    %s180 = sphi 0, %s180
    %s182 = sphi 0, %s180
    %s183 = sphi 0, %s182
    %s197 = sphi 0, %s183
    %s201 = sphi 0, %s201
    %s203 = sphi 0, %s201
    %s204 = sphi 0, %s203
    %s218 = sphi 0, %s204
    %s222 = sphi 0, %s222
    %s224 = sphi 0, %s222
    %s225 = sphi 0, %s224
    %s239 = sphi 0, %s225
    %s243 = sphi 0, %s243
    %s245 = sphi 0, %s243
    %s246 = sphi 0, %s245
    %s260 = sphi 0, %s246
    %s264 = sphi 0, %s264
    %s266 = sphi 0, %s264
    %s267 = sphi 0, %s266
    %s281 = sphi 0, %s267
    %s285 = sphi 0, %s285
    %s287 = sphi 0, %s285
    %s288 = sphi 0, %s287
    %s302 = sphi 0, %s288
    %s306 = sphi 0, %s306
    %s308 = sphi 0, %s306
    %s309 = sphi 0, %s308
    %s323 = sphi 0, %s309
    %s329 = sphi 0, %s331
    %s332 = sphi 0, %s329
    %s333 = sphi 0, %s332
    %s349 = sphi 0, %s333
  $region4: #{bottleneck_forward.1} parent=0 // loop_header_branch
    %23 = sbr.rel (%p21) target = $region8
  $region5: #{bottleneck_forward.1} parent=0 // loop_body
    %s25 = ssub.s32 %s20, 1
    %s26 = ssub.s32 %s20, 2
    %s27 = sadd.s32 %s20, 1
    %s28 = ssub.s32 %s20, %s27
    %p29 = scmp.eq.s32.totalorder %s28, 0
    %s31 = sadd.s32 %s30, 1
    %s32 = scalar_select %p29, %s30, %s31
    %p35 = pneg %p29
    %p36 = scmp.eq.s32.totalorder %s20, 1
    %p37 = por %p35, %p36
    %p38 = scmp.ne.s32.totalorder %s30, %s33
    %p39 = scmp.eq.s32.totalorder %s20, 0
    %p40 = por %p38, %p39
    %p41 = scmp.ne.s32.totalorder %s30, %s33
    %p42 = scmp.eq.s32.totalorder %s25, 1
    %p43 = por %p41, %p42
    %p44 = scmp.ne.s32.totalorder %s33, %s34
    %p45 = scmp.eq.s32.totalorder %s25, 0
    %p46 = por %p44, %p45
    %p47 = scmp.ne.s32.totalorder %s33, %s34
    %p48 = scmp.eq.s32.totalorder %s26, 1
    %p49 = por %p47, %p48
    %p51 = scmp.ne.s32.totalorder %s34, %s50
    %p52 = scmp.eq.s32.totalorder %s26, 0
    %p53 = por %p51, %p52
    %s55 = sadd.s32 %s54, 1
    %p58 = scmp.eq.s32.totalorder %s20, 1
    %p59 = scmp.ne.s32.totalorder %s54, %s56
    %p60 = scmp.eq.s32.totalorder %s20, 0
    %p61 = por %p59, %p60
    %p62 = scmp.ne.s32.totalorder %s54, %s56
    %p63 = scmp.eq.s32.totalorder %s25, 1
    %p64 = por %p62, %p63
    %p65 = scmp.ne.s32.totalorder %s56, %s57
    %p66 = scmp.eq.s32.totalorder %s25, 0
    %p67 = por %p65, %p66
    %p68 = scmp.ne.s32.totalorder %s56, %s57
    %p69 = scmp.eq.s32.totalorder %s26, 1
    %p70 = por %p68, %p69
    %p72 = scmp.ne.s32.totalorder %s57, %s71
    %p73 = scmp.eq.s32.totalorder %s26, 0
    %p74 = por %p72, %p73
    %s76 = sadd.s32 %s75, 1
    %p79 = scmp.eq.s32.totalorder %s20, 1
    %p80 = scmp.ne.s32.totalorder %s75, %s77
    %p81 = scmp.eq.s32.totalorder %s20, 0
    %p82 = por %p80, %p81
    %p83 = scmp.ne.s32.totalorder %s75, %s77
    %p84 = scmp.eq.s32.totalorder %s25, 1
    %p85 = por %p83, %p84
    %p86 = scmp.ne.s32.totalorder %s77, %s78
    %p87 = scmp.eq.s32.totalorder %s25, 0
    %p88 = por %p86, %p87
    %p89 = scmp.ne.s32.totalorder %s77, %s78
    %p90 = scmp.eq.s32.totalorder %s26, 1
    %p91 = por %p89, %p90
    %p93 = scmp.ne.s32.totalorder %s78, %s92
    %p94 = scmp.eq.s32.totalorder %s26, 0
    %p95 = por %p93, %p94
    %s97 = sadd.s32 %s96, 1
    %p100 = scmp.eq.s32.totalorder %s20, 1
    %p101 = scmp.ne.s32.totalorder %s96, %s98
    %p102 = scmp.eq.s32.totalorder %s20, 0
    %p103 = por %p101, %p102
    %p104 = scmp.ne.s32.totalorder %s96, %s98
    %p105 = scmp.eq.s32.totalorder %s25, 1
    %p106 = por %p104, %p105
    %p107 = scmp.ne.s32.totalorder %s98, %s99
    %p108 = scmp.eq.s32.totalorder %s25, 0
    %p109 = por %p107, %p108
    %p110 = scmp.ne.s32.totalorder %s98, %s99
    %p111 = scmp.eq.s32.totalorder %s26, 1
    %p112 = por %p110, %p111
    %p114 = scmp.ne.s32.totalorder %s99, %s113
    %p115 = scmp.eq.s32.totalorder %s26, 0
    %p116 = por %p114, %p115
    %s118 = sadd.s32 %s117, 1
    %p121 = scmp.eq.s32.totalorder %s20, 1
    %p122 = scmp.ne.s32.totalorder %s117, %s119
    %p123 = scmp.eq.s32.totalorder %s20, 0
    %p124 = por %p122, %p123
    %p125 = scmp.ne.s32.totalorder %s117, %s119
    %p126 = scmp.eq.s32.totalorder %s25, 1
    %p127 = por %p125, %p126
    %p128 = scmp.ne.s32.totalorder %s119, %s120
    %p129 = scmp.eq.s32.totalorder %s25, 0
    %p130 = por %p128, %p129
    %p131 = scmp.ne.s32.totalorder %s119, %s120
    %p132 = scmp.eq.s32.totalorder %s26, 1
    %p133 = por %p131, %p132
    %p135 = scmp.ne.s32.totalorder %s120, %s134
    %p136 = scmp.eq.s32.totalorder %s26, 0
    %p137 = por %p135, %p136
    %s139 = sadd.s32 %s138, 1
    %p142 = scmp.eq.s32.totalorder %s20, 1
    %p143 = scmp.ne.s32.totalorder %s138, %s140
    %p144 = scmp.eq.s32.totalorder %s20, 0
    %p145 = por %p143, %p144
    %p146 = scmp.ne.s32.totalorder %s138, %s140
    %p147 = scmp.eq.s32.totalorder %s25, 1
    %p148 = por %p146, %p147
    %p149 = scmp.ne.s32.totalorder %s140, %s141
    %p150 = scmp.eq.s32.totalorder %s25, 0
    %p151 = por %p149, %p150
    %p152 = scmp.ne.s32.totalorder %s140, %s141
    %p153 = scmp.eq.s32.totalorder %s26, 1
    %p154 = por %p152, %p153
    %p156 = scmp.ne.s32.totalorder %s141, %s155
    %p157 = scmp.eq.s32.totalorder %s26, 0
    %p158 = por %p156, %p157
    %s160 = sadd.s32 %s159, 1
    %p163 = scmp.eq.s32.totalorder %s20, 1
    %p164 = scmp.ne.s32.totalorder %s159, %s161
    %p165 = scmp.eq.s32.totalorder %s20, 0
    %p166 = por %p164, %p165
    %p167 = scmp.ne.s32.totalorder %s159, %s161
    %p168 = scmp.eq.s32.totalorder %s25, 1
    %p169 = por %p167, %p168
    %p170 = scmp.ne.s32.totalorder %s161, %s162
    %p171 = scmp.eq.s32.totalorder %s25, 0
    %p172 = por %p170, %p171
    %p173 = scmp.ne.s32.totalorder %s161, %s162
    %p174 = scmp.eq.s32.totalorder %s26, 1
    %p175 = por %p173, %p174
    %p177 = scmp.ne.s32.totalorder %s162, %s176
    %p178 = scmp.eq.s32.totalorder %s26, 0
    %p179 = por %p177, %p178
    %s181 = sadd.s32 %s180, 1
    %p184 = scmp.eq.s32.totalorder %s20, 1
    %p185 = scmp.ne.s32.totalorder %s180, %s182
    %p186 = scmp.eq.s32.totalorder %s20, 0
    %p187 = por %p185, %p186
    %p188 = scmp.ne.s32.totalorder %s180, %s182
    %p189 = scmp.eq.s32.totalorder %s25, 1
    %p190 = por %p188, %p189
    %p191 = scmp.ne.s32.totalorder %s182, %s183
    %p192 = scmp.eq.s32.totalorder %s25, 0
    %p193 = por %p191, %p192
    %p194 = scmp.ne.s32.totalorder %s182, %s183
    %p195 = scmp.eq.s32.totalorder %s26, 1
    %p196 = por %p194, %p195
    %p198 = scmp.ne.s32.totalorder %s183, %s197
    %p199 = scmp.eq.s32.totalorder %s26, 0
    %p200 = por %p198, %p199
    %s202 = sadd.s32 %s201, 1
    %p205 = scmp.eq.s32.totalorder %s20, 1
    %p206 = scmp.ne.s32.totalorder %s201, %s203
    %p207 = scmp.eq.s32.totalorder %s20, 0
    %p208 = por %p206, %p207
    %p209 = scmp.ne.s32.totalorder %s201, %s203
    %p210 = scmp.eq.s32.totalorder %s25, 1
    %p211 = por %p209, %p210
    %p212 = scmp.ne.s32.totalorder %s203, %s204
    %p213 = scmp.eq.s32.totalorder %s25, 0
    %p214 = por %p212, %p213
    %p215 = scmp.ne.s32.totalorder %s203, %s204
    %p216 = scmp.eq.s32.totalorder %s26, 1
    %p217 = por %p215, %p216
    %p219 = scmp.ne.s32.totalorder %s204, %s218
    %p220 = scmp.eq.s32.totalorder %s26, 0
    %p221 = por %p219, %p220
    %s223 = sadd.s32 %s222, 1
    %p226 = scmp.eq.s32.totalorder %s20, 1
    %p227 = scmp.ne.s32.totalorder %s222, %s224
    %p228 = scmp.eq.s32.totalorder %s20, 0
    %p229 = por %p227, %p228
    %p230 = scmp.ne.s32.totalorder %s222, %s224
    %p231 = scmp.eq.s32.totalorder %s25, 1
    %p232 = por %p230, %p231
    %p233 = scmp.ne.s32.totalorder %s224, %s225
    %p234 = scmp.eq.s32.totalorder %s25, 0
    %p235 = por %p233, %p234
    %p236 = scmp.ne.s32.totalorder %s224, %s225
    %p237 = scmp.eq.s32.totalorder %s26, 1
    %p238 = por %p236, %p237
    %p240 = scmp.ne.s32.totalorder %s225, %s239
    %p241 = scmp.eq.s32.totalorder %s26, 0
    %p242 = por %p240, %p241
    %s244 = sadd.s32 %s243, 1
    %p247 = scmp.eq.s32.totalorder %s20, 1
    %p248 = scmp.ne.s32.totalorder %s243, %s245
    %p249 = scmp.eq.s32.totalorder %s20, 0
    %p250 = por %p248, %p249
    %p251 = scmp.ne.s32.totalorder %s243, %s245
    %p252 = scmp.eq.s32.totalorder %s25, 1
    %p253 = por %p251, %p252
    %p254 = scmp.ne.s32.totalorder %s245, %s246
    %p255 = scmp.eq.s32.totalorder %s25, 0
    %p256 = por %p254, %p255
    %p257 = scmp.ne.s32.totalorder %s245, %s246
    %p258 = scmp.eq.s32.totalorder %s26, 1
    %p259 = por %p257, %p258
    %p261 = scmp.ne.s32.totalorder %s246, %s260
    %p262 = scmp.eq.s32.totalorder %s26, 0
    %p263 = por %p261, %p262
    %s265 = sadd.s32 %s264, 1
    %p268 = scmp.eq.s32.totalorder %s20, 1
    %p269 = scmp.ne.s32.totalorder %s264, %s266
    %p270 = scmp.eq.s32.totalorder %s20, 0
    %p271 = por %p269, %p270
    %p272 = scmp.ne.s32.totalorder %s264, %s266
    %p273 = scmp.eq.s32.totalorder %s25, 1
    %p274 = por %p272, %p273
    %p275 = scmp.ne.s32.totalorder %s266, %s267
    %p276 = scmp.eq.s32.totalorder %s25, 0
    %p277 = por %p275, %p276
    %p278 = scmp.ne.s32.totalorder %s266, %s267
    %p279 = scmp.eq.s32.totalorder %s26, 1
    %p280 = por %p278, %p279
    %p282 = scmp.ne.s32.totalorder %s267, %s281
    %p283 = scmp.eq.s32.totalorder %s26, 0
    %p284 = por %p282, %p283
    %s286 = sadd.s32 %s285, 1
    %p289 = scmp.eq.s32.totalorder %s20, 1
    %p290 = scmp.ne.s32.totalorder %s285, %s287
    %p291 = scmp.eq.s32.totalorder %s20, 0
    %p292 = por %p290, %p291
    %p293 = scmp.ne.s32.totalorder %s285, %s287
    %p294 = scmp.eq.s32.totalorder %s25, 1
    %p295 = por %p293, %p294
    %p296 = scmp.ne.s32.totalorder %s287, %s288
    %p297 = scmp.eq.s32.totalorder %s25, 0
    %p298 = por %p296, %p297
    %p299 = scmp.ne.s32.totalorder %s287, %s288
    %p300 = scmp.eq.s32.totalorder %s26, 1
    %p301 = por %p299, %p300
    %p303 = scmp.ne.s32.totalorder %s288, %s302
    %p304 = scmp.eq.s32.totalorder %s26, 0
    %p305 = por %p303, %p304
    %s307 = sadd.s32 %s306, 1
    %p310 = scmp.eq.s32.totalorder %s20, 1
    %p311 = scmp.ne.s32.totalorder %s306, %s308
    %p312 = scmp.eq.s32.totalorder %s20, 0
    %p313 = por %p311, %p312
    %p314 = scmp.ne.s32.totalorder %s306, %s308
    %p315 = scmp.eq.s32.totalorder %s25, 1
    %p316 = por %p314, %p315
    %p317 = scmp.ne.s32.totalorder %s308, %s309
    %p318 = scmp.eq.s32.totalorder %s25, 0
    %p319 = por %p317, %p318
    %p320 = scmp.ne.s32.totalorder %s308, %s309
    %p321 = scmp.eq.s32.totalorder %s26, 1
    %p322 = por %p320, %p321
    %p324 = scmp.ne.s32.totalorder %s309, %s323
    %p325 = scmp.eq.s32.totalorder %s26, 0
    %p326 = por %p324, %p325
    %s327 = ssub.s32 %s20, %s27
    %p328 = scmp.eq.s32.totalorder %s327, 0
    %s330 = sadd.s32 %s329, 1
    %s331 = scalar_select %p328, %s329, %s330
    %p334 = pneg %p328
    %p335 = scmp.eq.s32.totalorder %s20, 1
    %p336 = por %p334, %p335
    %p337 = scmp.ne.s32.totalorder %s329, %s332
    %p338 = scmp.eq.s32.totalorder %s20, 0
    %p339 = por %p337, %p338
    %p340 = scmp.ne.s32.totalorder %s329, %s332
    %p341 = scmp.eq.s32.totalorder %s25, 1
    %p342 = por %p340, %p341
    %p343 = scmp.ne.s32.totalorder %s332, %s333
    %p344 = scmp.eq.s32.totalorder %s25, 0
    %p345 = por %p343, %p344
    %p346 = scmp.ne.s32.totalorder %s332, %s333
    %p347 = scmp.eq.s32.totalorder %s26, 1
    %p348 = por %p346, %p347
    %p350 = scmp.ne.s32.totalorder %s333, %s349
    %p351 = scmp.eq.s32.totalorder %s26, 0
    %p352 = por %p350, %p351
    %p353 = scmp.le.s32.totalorder 1, %s20
    %p354 = scmp.lt.s32.totalorder %s20, 3
    %p355 = pnand %p353, %p354
    %p356 = pneg %p355
    // Predicated region
    $region9: #{bottleneck_forward.1} parent=5 // pred_check
      _
    $region10: #{bottleneck_forward.1} parent=5 // pred_check_branch
      %358 = sbr.rel (%p355) target = $region12
    $region11: #{bottleneck_forward.1} parent=5 // pred_region
      %s359 = ssub.s32 %s20, 1
      // Predicated region
      $region13: #{bottleneck_forward.1} parent=11 // pred_check
        %p360 = pneg %p67
      $region14: #{bottleneck_forward.1} parent=11 // pred_check_branch
        %362 = sbr.rel (%p360) target = $region16
      $region15: #{bottleneck_forward.1} parent=11 // pred_region
        _
      $region16: #{bottleneck_forward.1} parent=11 // pred_fallthru
        _
      // Predicated region
      $region17: #{bottleneck_forward.1} parent=11 // pred_check
        %p363 = pneg %p88
      $region18: #{bottleneck_forward.1} parent=11 // pred_check_branch
        %365 = sbr.rel (%p363) target = $region20
      $region19: #{bottleneck_forward.1} parent=11 // pred_region
        _
      $region20: #{bottleneck_forward.1} parent=11 // pred_fallthru
        _
      // Predicated region
      $region21: #{bottleneck_forward.1} parent=11 // pred_check
        %p366 = pneg %p109
      $region22: #{bottleneck_forward.1} parent=11 // pred_check_branch
        %368 = sbr.rel (%p366) target = $region24
      $region23: #{bottleneck_forward.1} parent=11 // pred_region
        _
      $region24: #{bottleneck_forward.1} parent=11 // pred_fallthru
        _
      // Predicated region
      $region25: #{bottleneck_forward.1} parent=11 // pred_check
        %p369 = pneg %p130
      $region26: #{bottleneck_forward.1} parent=11 // pred_check_branch
        %371 = sbr.rel (%p369) target = $region28
      $region27: #{bottleneck_forward.1} parent=11 // pred_region
        _
      $region28: #{bottleneck_forward.1} parent=11 // pred_fallthru
        _
      // Predicated region
      $region29: #{bottleneck_forward.1} parent=11 // pred_check
        %p372 = pneg %p151
      $region30: #{bottleneck_forward.1} parent=11 // pred_check_branch
        %374 = sbr.rel (%p372) target = $region32
      $region31: #{bottleneck_forward.1} parent=11 // pred_region
        _
      $region32: #{bottleneck_forward.1} parent=11 // pred_fallthru
        _
      // Predicated region
      $region33: #{bottleneck_forward.1} parent=11 // pred_check
        %p375 = pneg %p172
      $region34: #{bottleneck_forward.1} parent=11 // pred_check_branch
        %377 = sbr.rel (%p375) target = $region36
      $region35: #{bottleneck_forward.1} parent=11 // pred_region
        _
      $region36: #{bottleneck_forward.1} parent=11 // pred_fallthru
        _
      // Predicated region
      $region37: #{bottleneck_forward.1} parent=11 // pred_check
        %p378 = pneg %p193
      $region38: #{bottleneck_forward.1} parent=11 // pred_check_branch
        %380 = sbr.rel (%p378) target = $region40
      $region39: #{bottleneck_forward.1} parent=11 // pred_region
        _
      $region40: #{bottleneck_forward.1} parent=11 // pred_fallthru
        _
      // Predicated region
      $region41: #{bottleneck_forward.1} parent=11 // pred_check
        %p381 = pneg %p214
      $region42: #{bottleneck_forward.1} parent=11 // pred_check_branch
        %383 = sbr.rel (%p381) target = $region44
      $region43: #{bottleneck_forward.1} parent=11 // pred_region
        _
      $region44: #{bottleneck_forward.1} parent=11 // pred_fallthru
        _
      // Predicated region
      $region45: #{bottleneck_forward.1} parent=11 // pred_check
        %p384 = pneg %p235
      $region46: #{bottleneck_forward.1} parent=11 // pred_check_branch
        %386 = sbr.rel (%p384) target = $region48
      $region47: #{bottleneck_forward.1} parent=11 // pred_region
        _
      $region48: #{bottleneck_forward.1} parent=11 // pred_fallthru
        _
      // Predicated region
      $region49: #{bottleneck_forward.1} parent=11 // pred_check
        %p387 = pneg %p256
      $region50: #{bottleneck_forward.1} parent=11 // pred_check_branch
        %389 = sbr.rel (%p387) target = $region52
      $region51: #{bottleneck_forward.1} parent=11 // pred_region
        _
      $region52: #{bottleneck_forward.1} parent=11 // pred_fallthru
        _
      // Predicated region
      $region53: #{bottleneck_forward.1} parent=11 // pred_check
        %p390 = pneg %p277
      $region54: #{bottleneck_forward.1} parent=11 // pred_check_branch
        %392 = sbr.rel (%p390) target = $region56
      $region55: #{bottleneck_forward.1} parent=11 // pred_region
        _
      $region56: #{bottleneck_forward.1} parent=11 // pred_fallthru
        _
      // Predicated region
      $region57: #{bottleneck_forward.1} parent=11 // pred_check
        %p393 = pneg %p298
      $region58: #{bottleneck_forward.1} parent=11 // pred_check_branch
        %395 = sbr.rel (%p393) target = $region60
      $region59: #{bottleneck_forward.1} parent=11 // pred_region
        _
      $region60: #{bottleneck_forward.1} parent=11 // pred_fallthru
        _
      // Predicated region
      $region61: #{bottleneck_forward.1} parent=11 // pred_check
        %p396 = pneg %p319
      $region62: #{bottleneck_forward.1} parent=11 // pred_check_branch
        %398 = sbr.rel (%p396) target = $region64
      $region63: #{bottleneck_forward.1} parent=11 // pred_region
        _
      $region64: #{bottleneck_forward.1} parent=11 // pred_fallthru
        _
    $region12: #{bottleneck_forward.1} parent=5 // pred_fallthru
      _
    %p399 = scmp.lt.s32.totalorder %s20, 2
    // Predicated region
    $region65: #{bottleneck_forward.1} parent=5 // pred_check
      %p400 = pneg %p399
    $region66: #{bottleneck_forward.1} parent=5 // pred_check_branch
      %402 = sbr.rel (%p400) target = $region68
    $region67: #{bottleneck_forward.1} parent=5 // pred_region
      // Predicated region
      $region69: #{bottleneck_forward.1} parent=67 // pred_check
        %p403 = pneg %p40
      $region70: #{bottleneck_forward.1} parent=67 // pred_check_branch
        %405 = sbr.rel (%p403) target = $region72
      $region71: #{bottleneck_forward.1} parent=67 // pred_region
        %p406 = scmp.lt.s32.totalorder %s20, 1
        %s407 = scalar_select %p406, %s20, 1
        %s408 = smul.addr %s407, 41
        %s409 = smul.addr %s408, 8
        %s410 = scalar_lea.vmem %s0, %s409
      $region72: #{bottleneck_forward.1} parent=67 // pred_fallthru
        _
    $region68: #{bottleneck_forward.1} parent=5 // pred_fallthru
      _
    %p411 = scmp.le.s32.totalorder 1, %s20
    %p412 = scmp.lt.s32.totalorder %s20, 3
    %p413 = pnand %p411, %p412
    %p414 = pneg %p413
    // Predicated region
    $region73: #{bottleneck_forward.1} parent=5 // pred_check
      _
    $region74: #{bottleneck_forward.1} parent=5 // pred_check_branch
      %416 = sbr.rel (%p413) target = $region76
    $region75: #{bottleneck_forward.1} parent=5 // pred_region
      %s417 = ssub.s32 %s20, 1
      %p418 = scmp.lt.s32.totalorder %s25, 1
      %s419 = scalar_select %p418, %s25, 1
      %s420 = smul.addr %s419, 41
      %s421 = smul.addr %s420, 8
      %s422 = scalar_lea.vmem %s0, %s421
      %p423 = pneg %p46
      %p424 = pneg %p43
      %p425 = pneg %p67
      %p426 = pneg %p64
      %p427 = pneg %p88
      %p428 = pneg %p85
      %p429 = pneg %p109
      %p430 = pneg %p106
      %p431 = pneg %p130
      %p432 = pneg %p127
      %p433 = pneg %p151
      %p434 = pneg %p148
      %p435 = pneg %p172
      %p436 = pneg %p169
      %p437 = pneg %p193
      %p438 = pneg %p190
      %p439 = pneg %p214
      %p440 = pneg %p211
      %p441 = pneg %p235
      %p442 = pneg %p232
      %p443 = pneg %p256
      %p444 = pneg %p253
      %p445 = pneg %p277
      %p446 = pneg %p274
      %p447 = pneg %p298
      %p448 = pneg %p295
      %p449 = pneg %p319
      %p450 = pneg %p316
      %p451 = pneg %p345
      %p452 = pneg %p342
      %p453 = scmp.lt.s32.totalorder %s25, 1
      %s454 = scalar_select %p453, %s25, 1
      %s455 = smul.addr %s454, 36
      %s456 = smul.addr %s455, 8
      %s457 = scalar_lea.vmem %s14, %s456
      %p458 = scmp.lt.s32.totalorder %s25, 1
      %s459 = scalar_select %p458, %s25, 1
      %s460 = smul.addr %s459, 41
      %s461 = smul.addr %s460, 8
      %s462 = scalar_lea.vmem %s0, %s461
      %p463 = scmp.lt.s32.totalorder %s25, 1
      %s464 = scalar_select %p463, %s25, 1
      %s465 = smul.addr %s464, 36
      %s466 = smul.addr %s465, 8
      %s467 = scalar_lea.vmem %s14, %s466
      %v469 = vld [vmem:[%s462] sm:$0xff]
      %v470 = vld [vmem:[%s462 + $0x8] sm:$0xff]
      %v471 = vld [vmem:[%s462 + $0x10] sm:$0xff]
      %v472 = vld [vmem:[%s462 + $0x18] sm:$0xff]
      %v473 = vld [vmem:[%s462 + $0x20] sm:$0xff]
      %v474 = vld [vmem:[%s462 + $0x28] sm:$0xff]
      %v475 = vld [vmem:[%s462 + $0x30] sm:$0xff]
      %v476 = vld [vmem:[%s462 + $0x38] sm:$0xff]
      %v477 = vld [vmem:[%s462 + $0x40] sm:$0xff]
      %v478 = vld [vmem:[%s462 + $0x48] sm:$0xff]
      %v479 = vld [vmem:[%s462 + $0x50] sm:$0xff]
      %v480 = vld [vmem:[%s462 + $0x58] sm:$0xff]
      %v481 = vld [vmem:[%s462 + $0x60] sm:$0xff]
      %v482 = vld [vmem:[%s462 + $0x68] sm:$0xff]
      %v483 = vld [vmem:[%s462 + $0x70] sm:$0xff]
      %v484 = vld [vmem:[%s462 + $0x78] sm:$0xff]
      %v485 = vld [vmem:[%s462 + $0x80] sm:$0xff]
      %v486 = vld [vmem:[%s462 + $0x88] sm:$0xff]
      %v487 = vld [vmem:[%s462 + $0x90] sm:$0xff]
      %v488 = vld [vmem:[%s462 + $0x98] sm:$0xff]
      %v489 = vld [vmem:[%s462 + $0xa0] sm:$0xff]
      %v490 = vld [vmem:[%s462 + $0xa8] sm:$0xff]
      %v491 = vld [vmem:[%s462 + $0xb0] sm:$0xff]
      %v492 = vld [vmem:[%s462 + $0xb8] sm:$0xff]
      %v493 = vld [vmem:[%s462 + $0xc0] sm:$0xff]
      %v494 = vld [vmem:[%s462 + $0xc8] sm:$0xff]
      %v495 = vld [vmem:[%s462 + $0xd0] sm:$0xff]
      %v496 = vld [vmem:[%s462 + $0xd8] sm:$0xff]
      %v497 = vld [vmem:[%s462 + $0xe0] sm:$0xff]
      %v498 = vld [vmem:[%s462 + $0xe8] sm:$0xff]
      %v499 = vld [vmem:[%s462 + $0xf0] sm:$0xff]
      %v500 = vld [vmem:[%s462 + $0xf8] sm:$0xff]
      %v501 = vld [vmem:[%s462 + $0x100] sm:$0xff]
      %v502 = vld [vmem:[%s462 + $0x108] sm:$0xff]
      %v503 = vld [vmem:[%s462 + $0x110] sm:$0xff]
      %v504 = vld [vmem:[%s462 + $0x118] sm:$0xff]
      %v505 = vld [vmem:[%s462 + $0x120] sm:$0xff]
      %v506 = vld [vmem:[%s462 + $0x128] sm:$0xff]
      %v507 = vld [vmem:[%s462 + $0x130] sm:$0xff]
      %v508 = vld [vmem:[%s462 + $0x138] sm:$0xff]
      %v509 = vld [vmem:[%s462 + $0x140] sm:$0xff]
      %v510 = vpack.c.bf16 %v470, %v469
      %v511 = vpack.c.bf16 %v472, %v471
      %v512 = vpack.c.bf16 %v474, %v473
      %v513 = vpack.c.bf16 %v476, %v475
      %v514 = vpack.c.bf16 %v478, %v477
      %v515 = vpack.c.bf16 %v480, %v479
      %v516 = vpack.c.bf16 %v482, %v481
      %v517 = vpack.c.bf16 %v484, %v483
      %v518 = vpack.c.bf16 %v486, %v485
      %v519 = vpack.c.bf16 %v488, %v487
      %v520 = vpack.c.bf16 %v490, %v489
      %v521 = vpack.c.bf16 %v492, %v491
      %v522 = vpack.c.bf16 %v494, %v493
      %v523 = vpack.c.bf16 %v496, %v495
      %v524 = vpack.c.bf16 %v498, %v497
      %v525 = vpack.c.bf16 %v500, %v499
      %v526 = vpack.c.bf16 %v502, %v501
      %v527 = vpack.c.bf16 %v504, %v503
      %v528 = vpack.c.bf16 %v506, %v505
      %v529 = vpack.c.bf16 %v508, %v507
      %v530 = vpack.c.bf16 %v509, %v509
      %v531 = vld [vmem:[%s2] sm:$0x3]
      %vm532 = vcmask 31744
      %v534 = vsel %vm532, %v510, 0
      %v537 = vsel %vm532, %v511, 0
      %v540 = vsel %vm532, %v512, 0
      %v543 = vsel %vm532, %v513, 0
      %v546 = vsel %vm532, %v514, 0
      %v549 = vsel %vm532, %v515, 0
      %v552 = vsel %vm532, %v516, 0
      %v555 = vsel %vm532, %v517, 0
      %v558 = vsel %vm532, %v518, 0
      %v561 = vsel %vm532, %v519, 0
      %v564 = vsel %vm532, %v520, 0
      %v567 = vsel %vm532, %v521, 0
      %v570 = vsel %vm532, %v522, 0
      %v573 = vsel %vm532, %v523, 0
      %v576 = vsel %vm532, %v524, 0
      %v579 = vsel %vm532, %v525, 0
      %v582 = vsel %vm532, %v526, 0
      %v585 = vsel %vm532, %v527, 0
      %v588 = vsel %vm532, %v528, 0
      %v591 = vsel %vm532, %v529, 0
      %v594 = vsel %vm532, %v530, 0
      %vm596 = vcmask 1041408
      %v598 = vsel %vm596, %v531, 0
      %600 = vmatprep.subr.bf16.mxu0 0
      %601 = vmatpush1.bf16.msra.mxu0 0
      %602 = vmatprep.subr.bf16.mxu0 0
      %603 = vmatpush1.bf16.msra.mxu0 0
      %604 = vmatprep.subr.bf16.mxu0 0
      %605 = vmatpush1.bf16.msra.mxu0 0
      %606 = vmatprep.subr.bf16.mxu0 0
      %607 = vmatpush1.bf16.msra.mxu0 0
      %608 = vmatprep.subr.bf16.mxu0 0
      %609 = vmatpush1.bf16.msra.mxu0 0
      %610 = vmatprep.subr.bf16.mxu0 0
      %611 = vmatpush1.bf16.msra.mxu0 0
      %612 = vmatprep.subr.bf16.mxu0 0
      %613 = vmatpush1.bf16.msra.mxu0 0
      %614 = vmatprep.subr.bf16.mxu0 0
      %615 = vmatpush1.bf16.msra.mxu0 %v598
      %616 = vmatprep.subr.bf16.mxu0 0
      %617 = vmatpush2.bf16.msra.mxu0 0
      %618 = vmatprep.subr.bf16.mxu0 0
      %619 = vmatpush2.bf16.msra.mxu0 0
      %620 = vmatprep.subr.bf16.mxu0 0
      %621 = vmatpush2.bf16.msra.mxu0 0
      %622 = vmatprep.subr.bf16.mxu0 0
      %623 = vmatpush2.bf16.msra.mxu0 0
      %624 = vmatprep.subr.bf16.mxu0 0
      %625 = vmatpush2.bf16.msra.mxu0 0
      %626 = vmatprep.subr.bf16.mxu0 0
      %627 = vmatpush2.bf16.msra.mxu0 0
      %628 = vmatprep.subr.bf16.mxu0 0
      %629 = vmatpush2.bf16.msra.mxu0 0
      %630 = vmatprep.subr.bf16.mxu0 0
      %631 = vmatpush2.bf16.msra.mxu0 0
      %632 = vmatprep.mubr.bf16.mxu0 0
      %633 = vmatmul.mubr.bf16.gmra.mxu0 %v534
      %v634 = vpop.f32.mrf.mxu0
      %v635 = vadd.f32 0.0, %v634
      %v636 = vpop.f32.mrf.mxu0
      %v637 = vpop.f32.mrf.mxu0
      %v638 = vadd.f32 0.0, %v637
      %v639 = vpop.f32.mrf.mxu0
      %640 = vmatprep.mubr.bf16.mxu0 0
      %641 = vmatmul.mubr.bf16.gmra.mxu0 %v537
      %v642 = vpop.f32.mrf.mxu0
      %v643 = vadd.f32 0.0, %v642
      %v644 = vpop.f32.mrf.mxu0
      %v645 = vpop.f32.mrf.mxu0
      %v646 = vadd.f32 0.0, %v645
      %v647 = vpop.f32.mrf.mxu0
      %648 = vmatprep.mubr.bf16.mxu0 0
      %649 = vmatmul.mubr.bf16.gmra.mxu0 %v540
      %v650 = vpop.f32.mrf.mxu0
      %v651 = vadd.f32 0.0, %v650
      %v652 = vpop.f32.mrf.mxu0
      %v653 = vpop.f32.mrf.mxu0
      %v654 = vadd.f32 0.0, %v653
      %v655 = vpop.f32.mrf.mxu0
      %656 = vmatprep.mubr.bf16.mxu0 0
      %657 = vmatmul.mubr.bf16.gmra.mxu0 %v543
      %v658 = vpop.f32.mrf.mxu0
      %v659 = vadd.f32 0.0, %v658
      %v660 = vpop.f32.mrf.mxu0
      %v661 = vpop.f32.mrf.mxu0
      %v662 = vadd.f32 0.0, %v661
      %v663 = vpop.f32.mrf.mxu0
      %664 = vmatprep.mubr.bf16.mxu0 0
      %665 = vmatmul.mubr.bf16.gmra.mxu0 %v546
      %v666 = vpop.f32.mrf.mxu0
      %v667 = vadd.f32 0.0, %v666
      %v668 = vpop.f32.mrf.mxu0
      %v669 = vpop.f32.mrf.mxu0
      %v670 = vadd.f32 0.0, %v669
      %v671 = vpop.f32.mrf.mxu0
      %672 = vmatprep.mubr.bf16.mxu0 0
      %673 = vmatmul.mubr.bf16.gmra.mxu0 %v549
      %v674 = vpop.f32.mrf.mxu0
      %v675 = vadd.f32 0.0, %v674
      %v676 = vpop.f32.mrf.mxu0
      %v677 = vpop.f32.mrf.mxu0
      %v678 = vadd.f32 0.0, %v677
      %v679 = vpop.f32.mrf.mxu0
      %680 = vmatprep.mubr.bf16.mxu0 0
      %681 = vmatmul.mubr.bf16.gmra.mxu0 %v552
      %v682 = vpop.f32.mrf.mxu0
      %v683 = vadd.f32 0.0, %v682
      %v684 = vpop.f32.mrf.mxu0
      %v685 = vpop.f32.mrf.mxu0
      %v686 = vadd.f32 0.0, %v685
      %v687 = vpop.f32.mrf.mxu0
      %688 = vmatprep.mubr.bf16.mxu0 0
      %689 = vmatmul.mubr.bf16.gmra.mxu0 %v555
      %v690 = vpop.f32.mrf.mxu0
      %v691 = vadd.f32 0.0, %v690
      %v692 = vpop.f32.mrf.mxu0
      %v693 = vpop.f32.mrf.mxu0
      %v694 = vadd.f32 0.0, %v693
      %v695 = vpop.f32.mrf.mxu0
      %696 = vmatprep.mubr.bf16.mxu0 0
      %697 = vmatmul.mubr.bf16.gmra.mxu0 %v558
      %v698 = vpop.f32.mrf.mxu0
      %v699 = vadd.f32 0.0, %v698
      %v700 = vpop.f32.mrf.mxu0
      %v701 = vpop.f32.mrf.mxu0
      %v702 = vadd.f32 0.0, %v701
      %v703 = vpop.f32.mrf.mxu0
      %704 = vmatprep.mubr.bf16.mxu0 0
      %705 = vmatmul.mubr.bf16.gmra.mxu0 %v561
      %v706 = vpop.f32.mrf.mxu0
      %v707 = vadd.f32 0.0, %v706
      %v708 = vpop.f32.mrf.mxu0
      %v709 = vpop.f32.mrf.mxu0
      %v710 = vadd.f32 0.0, %v709
      %v711 = vpop.f32.mrf.mxu0
      %712 = vmatprep.mubr.bf16.mxu0 0
      %713 = vmatmul.mubr.bf16.gmra.mxu0 %v564
      %v714 = vpop.f32.mrf.mxu0
      %v715 = vadd.f32 0.0, %v714
      %v716 = vpop.f32.mrf.mxu0
      %v717 = vpop.f32.mrf.mxu0
      %v718 = vadd.f32 0.0, %v717
      %v719 = vpop.f32.mrf.mxu0
      %720 = vmatprep.mubr.bf16.mxu0 0
      %721 = vmatmul.mubr.bf16.gmra.mxu0 %v567
      %v722 = vpop.f32.mrf.mxu0
      %v723 = vadd.f32 0.0, %v722
      %v724 = vpop.f32.mrf.mxu0
      %v725 = vpop.f32.mrf.mxu0
      %v726 = vadd.f32 0.0, %v725
      %v727 = vpop.f32.mrf.mxu0
      %728 = vmatprep.mubr.bf16.mxu0 0
      %729 = vmatmul.mubr.bf16.gmra.mxu0 %v570
      %v730 = vpop.f32.mrf.mxu0
      %v731 = vadd.f32 0.0, %v730
      %v732 = vpop.f32.mrf.mxu0
      %v733 = vpop.f32.mrf.mxu0
      %v734 = vadd.f32 0.0, %v733
      %v735 = vpop.f32.mrf.mxu0
      %736 = vmatprep.mubr.bf16.mxu0 0
      %737 = vmatmul.mubr.bf16.gmra.mxu0 %v573
      %v738 = vpop.f32.mrf.mxu0
      %v739 = vadd.f32 0.0, %v738
      %v740 = vpop.f32.mrf.mxu0
      %v741 = vpop.f32.mrf.mxu0
      %v742 = vadd.f32 0.0, %v741
      %v743 = vpop.f32.mrf.mxu0
      %744 = vmatprep.mubr.bf16.mxu0 0
      %745 = vmatmul.mubr.bf16.gmra.mxu0 %v576
      %v746 = vpop.f32.mrf.mxu0
      %v747 = vadd.f32 0.0, %v746
      %v748 = vpop.f32.mrf.mxu0
      %v749 = vpop.f32.mrf.mxu0
      %v750 = vadd.f32 0.0, %v749
      %v751 = vpop.f32.mrf.mxu0
      %752 = vmatprep.mubr.bf16.mxu0 0
      %753 = vmatmul.mubr.bf16.gmra.mxu0 %v579
      %v754 = vpop.f32.mrf.mxu0
      %v755 = vadd.f32 0.0, %v754
      %v756 = vpop.f32.mrf.mxu0
      %v757 = vpop.f32.mrf.mxu0
      %v758 = vadd.f32 0.0, %v757
      %v759 = vpop.f32.mrf.mxu0
      %760 = vmatprep.mubr.bf16.mxu0 0
      %761 = vmatmul.mubr.bf16.gmra.mxu0 %v582
      %v762 = vpop.f32.mrf.mxu0
      %v763 = vadd.f32 0.0, %v762
      %v764 = vpop.f32.mrf.mxu0
      %v765 = vpop.f32.mrf.mxu0
      %v766 = vadd.f32 0.0, %v765
      %v767 = vpop.f32.mrf.mxu0
      %768 = vmatprep.mubr.bf16.mxu0 0
      %769 = vmatmul.mubr.bf16.gmra.mxu0 %v585
      %v770 = vpop.f32.mrf.mxu0
      %v771 = vadd.f32 0.0, %v770
      %v772 = vpop.f32.mrf.mxu0
      %v773 = vpop.f32.mrf.mxu0
      %v774 = vadd.f32 0.0, %v773
      %v775 = vpop.f32.mrf.mxu0
      %776 = vmatprep.mubr.bf16.mxu0 0
      %777 = vmatmul.mubr.bf16.gmra.mxu0 %v588
      %v778 = vpop.f32.mrf.mxu0
      %v779 = vadd.f32 0.0, %v778
      %v780 = vpop.f32.mrf.mxu0
      %v781 = vpop.f32.mrf.mxu0
      %v782 = vadd.f32 0.0, %v781
      %v783 = vpop.f32.mrf.mxu0
      %784 = vmatprep.mubr.bf16.mxu0 0
      %785 = vmatmul.mubr.bf16.gmra.mxu0 %v591
      %v786 = vpop.f32.mrf.mxu0
      %v787 = vadd.f32 0.0, %v786
      %v788 = vpop.f32.mrf.mxu0
      %v789 = vpop.f32.mrf.mxu0
      %v790 = vadd.f32 0.0, %v789
      %v791 = vpop.f32.mrf.mxu0
      %792 = vmatprep.mubr.bf16.mxu0 0
      %793 = vmatmul.mubr.bf16.gmra.mxu0 %v594
      %v794 = vpop.f32.mrf.mxu0
      %v795 = vadd.f32 0.0, %v794
      %v796 = vpop.f32.mrf.mxu0
      %v797 = vpop.f32.mrf.mxu0
      %v798 = vpop.f32.mrf.mxu0
      %799 = vdwg.mxu0
      %v800 = vld [vmem:[%s3] sm:$0x1]
      %v802 = vlaneseq
      %v803 = vshrl.u32 %v802, 7
      %v804 = vsub.s32 0, %v803
      %v805 = vrot.slane %v800, %v804
      %v807 = vmul.f32 %v635, %v805
      %v808 = vmul.f32 %v638, %v805
      %v809 = vmul.f32 %v643, %v805
      %v810 = vmul.f32 %v646, %v805
      %v811 = vmul.f32 %v651, %v805
      %v812 = vmul.f32 %v654, %v805
      %v813 = vmul.f32 %v659, %v805
      %v814 = vmul.f32 %v662, %v805
      %v815 = vmul.f32 %v667, %v805
      %v816 = vmul.f32 %v670, %v805
      %v817 = vmul.f32 %v675, %v805
      %v818 = vmul.f32 %v678, %v805
      %v819 = vmul.f32 %v683, %v805
      %v820 = vmul.f32 %v686, %v805
      %v821 = vmul.f32 %v691, %v805
      %v822 = vmul.f32 %v694, %v805
      %v823 = vmul.f32 %v699, %v805
      %v824 = vmul.f32 %v702, %v805
      %v825 = vmul.f32 %v707, %v805
      %v826 = vmul.f32 %v710, %v805
      %v827 = vmul.f32 %v715, %v805
      %v828 = vmul.f32 %v718, %v805
      %v829 = vmul.f32 %v723, %v805
      %v830 = vmul.f32 %v726, %v805
      %v831 = vmul.f32 %v731, %v805
      %v832 = vmul.f32 %v734, %v805
      %v833 = vmul.f32 %v739, %v805
      %v834 = vmul.f32 %v742, %v805
      %v835 = vmul.f32 %v747, %v805
      %v836 = vmul.f32 %v750, %v805
      %v837 = vmul.f32 %v755, %v805
      %v838 = vmul.f32 %v758, %v805
      %v839 = vmul.f32 %v763, %v805
      %v840 = vmul.f32 %v766, %v805
      %v841 = vmul.f32 %v771, %v805
      %v842 = vmul.f32 %v774, %v805
      %v843 = vmul.f32 %v779, %v805
      %v844 = vmul.f32 %v782, %v805
      %v845 = vmul.f32 %v787, %v805
      %v846 = vmul.f32 %v790, %v805
      %v847 = vmul.f32 %v795, %v805
      %v848 = vld [vmem:[%s4] sm:$0x1]
      %v850 = vlaneseq
      %v851 = vshrl.u32 %v850, 7
      %v852 = vsub.s32 0, %v851
      %v853 = vrot.slane %v848, %v852
      %v855 = vadd.f32 %v807, %v853
      %v856 = vadd.f32 %v808, %v853
      %v857 = vadd.f32 %v809, %v853
      %v858 = vadd.f32 %v810, %v853
      %v859 = vadd.f32 %v811, %v853
      %v860 = vadd.f32 %v812, %v853
      %v861 = vadd.f32 %v813, %v853
      %v862 = vadd.f32 %v814, %v853
      %v863 = vadd.f32 %v815, %v853
      %v864 = vadd.f32 %v816, %v853
      %v865 = vadd.f32 %v817, %v853
      %v866 = vadd.f32 %v818, %v853
      %v867 = vadd.f32 %v819, %v853
      %v868 = vadd.f32 %v820, %v853
      %v869 = vadd.f32 %v821, %v853
      %v870 = vadd.f32 %v822, %v853
      %v871 = vadd.f32 %v823, %v853
      %v872 = vadd.f32 %v824, %v853
      %v873 = vadd.f32 %v825, %v853
      %v874 = vadd.f32 %v826, %v853
      %v875 = vadd.f32 %v827, %v853
      %v876 = vadd.f32 %v828, %v853
      %v877 = vadd.f32 %v829, %v853
      %v878 = vadd.f32 %v830, %v853
      %v879 = vadd.f32 %v831, %v853
      %v880 = vadd.f32 %v832, %v853
      %v881 = vadd.f32 %v833, %v853
      %v882 = vadd.f32 %v834, %v853
      %v883 = vadd.f32 %v835, %v853
      %v884 = vadd.f32 %v836, %v853
      %v885 = vadd.f32 %v837, %v853
      %v886 = vadd.f32 %v838, %v853
      %v887 = vadd.f32 %v839, %v853
      %v888 = vadd.f32 %v840, %v853
      %v889 = vadd.f32 %v841, %v853
      %v890 = vadd.f32 %v842, %v853
      %v891 = vadd.f32 %v843, %v853
      %v892 = vadd.f32 %v844, %v853
      %v893 = vadd.f32 %v845, %v853
      %v894 = vadd.f32 %v846, %v853
      %v895 = vadd.f32 %v847, %v853
      %v896 = vmax.f32 %v855, 0.0
      %v897 = vmax.f32 %v856, 0.0
      %v898 = vmax.f32 %v857, 0.0
      %v899 = vmax.f32 %v858, 0.0
      %v900 = vmax.f32 %v859, 0.0
      %v901 = vmax.f32 %v860, 0.0
      %v902 = vmax.f32 %v861, 0.0
      %v903 = vmax.f32 %v862, 0.0
      %v904 = vmax.f32 %v863, 0.0
      %v905 = vmax.f32 %v864, 0.0
      %v906 = vmax.f32 %v865, 0.0
      %v907 = vmax.f32 %v866, 0.0
      %v908 = vmax.f32 %v867, 0.0
      %v909 = vmax.f32 %v868, 0.0
      %v910 = vmax.f32 %v869, 0.0
      %v911 = vmax.f32 %v870, 0.0
      %v912 = vmax.f32 %v871, 0.0
      %v913 = vmax.f32 %v872, 0.0
      %v914 = vmax.f32 %v873, 0.0
      %v915 = vmax.f32 %v874, 0.0
      %v916 = vmax.f32 %v875, 0.0
      %v917 = vmax.f32 %v876, 0.0
      %v918 = vmax.f32 %v877, 0.0
      %v919 = vmax.f32 %v878, 0.0
      %v920 = vmax.f32 %v879, 0.0
      %v921 = vmax.f32 %v880, 0.0
      %v922 = vmax.f32 %v881, 0.0
      %v923 = vmax.f32 %v882, 0.0
      %v924 = vmax.f32 %v883, 0.0
      %v925 = vmax.f32 %v884, 0.0
      %v926 = vmax.f32 %v885, 0.0
      %v927 = vmax.f32 %v886, 0.0
      %v928 = vmax.f32 %v887, 0.0
      %v929 = vmax.f32 %v888, 0.0
      %v930 = vmax.f32 %v889, 0.0
      %v931 = vmax.f32 %v890, 0.0
      %v932 = vmax.f32 %v891, 0.0
      %v933 = vmax.f32 %v892, 0.0
      %v934 = vmax.f32 %v893, 0.0
      %v935 = vmax.f32 %v894, 0.0
      %v936 = vmax.f32 %v895, 0.0
      %v937 = vld [vmem:[%s1] sm:$0xff]
      %v938 = vld [vmem:[%s1 + $0x8] sm:$0xff]
      %v939 = vld [vmem:[%s1 + $0x10] sm:$0xff]
      %v940 = vld [vmem:[%s1 + $0x18] sm:$0xff]
      %v941 = vld [vmem:[%s1 + $0x20] sm:$0xff]
      %v942 = vld [vmem:[%s1 + $0x28] sm:$0xff]
      %v943 = vld [vmem:[%s1 + $0x30] sm:$0xff]
      %v944 = vld [vmem:[%s1 + $0x38] sm:$0xff]
      %v945 = vld [vmem:[%s1 + $0x40] sm:$0xff]
      %v946 = vld [vmem:[%s1 + $0x48] sm:$0xff]
      %v947 = vld [vmem:[%s1 + $0x50] sm:$0xff]
      %v948 = vld [vmem:[%s1 + $0x58] sm:$0xff]
      %v949 = vld [vmem:[%s1 + $0x60] sm:$0xff]
      %v950 = vld [vmem:[%s1 + $0x68] sm:$0xff]
      %v951 = vld [vmem:[%s1 + $0x70] sm:$0xff]
      %v952 = vld [vmem:[%s1 + $0x78] sm:$0xff]
      %v953 = vld [vmem:[%s1 + $0x80] sm:$0xff]
      %v954 = vld [vmem:[%s1 + $0x88] sm:$0xff]
      %v955 = vld [vmem:[%s1 + $0x90] sm:$0xff]
      %v956 = vld [vmem:[%s1 + $0x98] sm:$0xff]
      %v957 = vld [vmem:[%s1 + $0xa0] sm:$0xff]
      %v958 = vld [vmem:[%s1 + $0xa8] sm:$0xff]
      %v959 = vld [vmem:[%s1 + $0xb0] sm:$0xff]
      %v960 = vld [vmem:[%s1 + $0xb8] sm:$0xff]
      %v961 = vld [vmem:[%s1 + $0xc0] sm:$0xff]
      %v962 = vld [vmem:[%s1 + $0xc8] sm:$0xff]
      %v963 = vld [vmem:[%s1 + $0xd0] sm:$0xff]
      %v964 = vld [vmem:[%s1 + $0xd8] sm:$0xff]
      %v965 = vld [vmem:[%s1 + $0xe0] sm:$0xff]
      %v966 = vld [vmem:[%s1 + $0xe8] sm:$0xff]
      %v967 = vld [vmem:[%s1 + $0xf0] sm:$0xff]
      %v968 = vld [vmem:[%s1 + $0xf8] sm:$0xff]
      %v969 = vld [vmem:[%s1 + $0x100] sm:$0xff]
      %v970 = vld [vmem:[%s1 + $0x108] sm:$0xff]
      %v971 = vld [vmem:[%s1 + $0x110] sm:$0xff]
      %v972 = vld [vmem:[%s1 + $0x118] sm:$0xff]
      %v973 = vld [vmem:[%s1 + $0x120] sm:$0xff]
      %v974 = vld [vmem:[%s1 + $0x128] sm:$0xff]
      %v975 = vld [vmem:[%s1 + $0x130] sm:$0xff]
      %v976 = vld [vmem:[%s1 + $0x138] sm:$0xff]
      %v977 = vld [vmem:[%s1 + $0x140] sm:$0xff]
      %979 = vset.pattern.permute.xlu0 0
      %980 = vperm.xlu0 %979, %v937
      %v981 = vpop.permute.xlu0 %980
      %984 = vset.pattern.permute.xlu0 0
      %985 = vperm.xlu0 %984, %v938
      %v986 = vpop.permute.xlu0 %985
      %989 = vset.pattern.permute.xlu0 0
      %990 = vperm.xlu0 %989, %v939
      %v991 = vpop.permute.xlu0 %990
      %994 = vset.pattern.permute.xlu0 0
      %995 = vperm.xlu0 %994, %v940
      %v996 = vpop.permute.xlu0 %995
      %999 = vset.pattern.permute.xlu0 0
      %1000 = vperm.xlu0 %999, %v941
      %v1001 = vpop.permute.xlu0 %1000
      %1004 = vset.pattern.permute.xlu0 0
      %1005 = vperm.xlu0 %1004, %v942
      %v1006 = vpop.permute.xlu0 %1005
      %1009 = vset.pattern.permute.xlu0 0
      %1010 = vperm.xlu0 %1009, %v943
      %v1011 = vpop.permute.xlu0 %1010
      %1014 = vset.pattern.permute.xlu0 0
      %1015 = vperm.xlu0 %1014, %v944
      %v1016 = vpop.permute.xlu0 %1015
      %1019 = vset.pattern.permute.xlu0 0
      %1020 = vperm.xlu0 %1019, %v945
      %v1021 = vpop.permute.xlu0 %1020
      %1024 = vset.pattern.permute.xlu0 0
      %1025 = vperm.xlu0 %1024, %v946
      %v1026 = vpop.permute.xlu0 %1025
      %1029 = vset.pattern.permute.xlu0 0
      %1030 = vperm.xlu0 %1029, %v947
      %v1031 = vpop.permute.xlu0 %1030
      %1034 = vset.pattern.permute.xlu0 0
      %1035 = vperm.xlu0 %1034, %v948
      %v1036 = vpop.permute.xlu0 %1035
      %1039 = vset.pattern.permute.xlu0 0
      %1040 = vperm.xlu0 %1039, %v949
      %v1041 = vpop.permute.xlu0 %1040
      %1044 = vset.pattern.permute.xlu0 0
      %1045 = vperm.xlu0 %1044, %v950
      %v1046 = vpop.permute.xlu0 %1045
      %1049 = vset.pattern.permute.xlu0 0
      %1050 = vperm.xlu0 %1049, %v951
      %v1051 = vpop.permute.xlu0 %1050
      %1054 = vset.pattern.permute.xlu0 0
      %1055 = vperm.xlu0 %1054, %v952
      %v1056 = vpop.permute.xlu0 %1055
      %1059 = vset.pattern.permute.xlu0 0
      %1060 = vperm.xlu0 %1059, %v953
      %v1061 = vpop.permute.xlu0 %1060
      %1064 = vset.pattern.permute.xlu0 0
      %1065 = vperm.xlu0 %1064, %v954
      %v1066 = vpop.permute.xlu0 %1065
      %1069 = vset.pattern.permute.xlu0 0
      %1070 = vperm.xlu0 %1069, %v955
      %v1071 = vpop.permute.xlu0 %1070
      %1074 = vset.pattern.permute.xlu0 0
      %1075 = vperm.xlu0 %1074, %v956
      %v1076 = vpop.permute.xlu0 %1075
      %1079 = vset.pattern.permute.xlu0 0
      %1080 = vperm.xlu0 %1079, %v957
      %v1081 = vpop.permute.xlu0 %1080
      %1084 = vset.pattern.permute.xlu0 0
      %1085 = vperm.xlu0 %1084, %v958
      %v1086 = vpop.permute.xlu0 %1085
      %1089 = vset.pattern.permute.xlu0 0
      %1090 = vperm.xlu0 %1089, %v959
      %v1091 = vpop.permute.xlu0 %1090
      %1094 = vset.pattern.permute.xlu0 0
      %1095 = vperm.xlu0 %1094, %v960
      %v1096 = vpop.permute.xlu0 %1095
      %1099 = vset.pattern.permute.xlu0 0
      %1100 = vperm.xlu0 %1099, %v961
      %v1101 = vpop.permute.xlu0 %1100
      %1104 = vset.pattern.permute.xlu0 0
      %1105 = vperm.xlu0 %1104, %v962
      %v1106 = vpop.permute.xlu0 %1105
      %1109 = vset.pattern.permute.xlu0 0
      %1110 = vperm.xlu0 %1109, %v963
      %v1111 = vpop.permute.xlu0 %1110
      %1114 = vset.pattern.permute.xlu0 0
      %1115 = vperm.xlu0 %1114, %v964
      %v1116 = vpop.permute.xlu0 %1115
      %1119 = vset.pattern.permute.xlu0 0
      %1120 = vperm.xlu0 %1119, %v965
      %v1121 = vpop.permute.xlu0 %1120
      %1124 = vset.pattern.permute.xlu0 0
      %1125 = vperm.xlu0 %1124, %v966
      %v1126 = vpop.permute.xlu0 %1125
      %1129 = vset.pattern.permute.xlu0 0
      %1130 = vperm.xlu0 %1129, %v967
      %v1131 = vpop.permute.xlu0 %1130
      %1134 = vset.pattern.permute.xlu0 0
      %1135 = vperm.xlu0 %1134, %v968
      %v1136 = vpop.permute.xlu0 %1135
      %1139 = vset.pattern.permute.xlu0 0
      %1140 = vperm.xlu0 %1139, %v969
      %v1141 = vpop.permute.xlu0 %1140
      %1144 = vset.pattern.permute.xlu0 0
      %1145 = vperm.xlu0 %1144, %v970
      %v1146 = vpop.permute.xlu0 %1145
      %1149 = vset.pattern.permute.xlu0 0
      %1150 = vperm.xlu0 %1149, %v971
      %v1151 = vpop.permute.xlu0 %1150
      %1154 = vset.pattern.permute.xlu0 0
      %1155 = vperm.xlu0 %1154, %v972
      %v1156 = vpop.permute.xlu0 %1155
      %1159 = vset.pattern.permute.xlu0 0
      %1160 = vperm.xlu0 %1159, %v973
      %v1161 = vpop.permute.xlu0 %1160
      %1164 = vset.pattern.permute.xlu0 0
      %1165 = vperm.xlu0 %1164, %v974
      %v1166 = vpop.permute.xlu0 %1165
      %1169 = vset.pattern.permute.xlu0 0
      %1170 = vperm.xlu0 %1169, %v975
      %v1171 = vpop.permute.xlu0 %1170
      %1174 = vset.pattern.permute.xlu0 0
      %1175 = vperm.xlu0 %1174, %v976
      %v1176 = vpop.permute.xlu0 %1175
      %1179 = vset.pattern.permute.xlu0 0
      %1180 = vperm.xlu0 %1179, %v977
      %v1181 = vpop.permute.xlu0 %1180
      %v1183 = vmul.f32 %v896, %v981
      %v1184 = vmul.f32 %v897, %v986
      %v1185 = vmul.f32 %v898, %v991
      %v1186 = vmul.f32 %v899, %v996
      %v1187 = vmul.f32 %v900, %v1001
      %v1188 = vmul.f32 %v901, %v1006
      %v1189 = vmul.f32 %v902, %v1011
      %v1190 = vmul.f32 %v903, %v1016
      %v1191 = vmul.f32 %v904, %v1021
      %v1192 = vmul.f32 %v905, %v1026
      %v1193 = vmul.f32 %v906, %v1031
      %v1194 = vmul.f32 %v907, %v1036
      %v1195 = vmul.f32 %v908, %v1041
      %v1196 = vmul.f32 %v909, %v1046
      %v1197 = vmul.f32 %v910, %v1051
      %v1198 = vmul.f32 %v911, %v1056
      %v1199 = vmul.f32 %v912, %v1061
      %v1200 = vmul.f32 %v913, %v1066
      %v1201 = vmul.f32 %v914, %v1071
      %v1202 = vmul.f32 %v915, %v1076
      %v1203 = vmul.f32 %v916, %v1081
      %v1204 = vmul.f32 %v917, %v1086
      %v1205 = vmul.f32 %v918, %v1091
      %v1206 = vmul.f32 %v919, %v1096
      %v1207 = vmul.f32 %v920, %v1101
      %v1208 = vmul.f32 %v921, %v1106
      %v1209 = vmul.f32 %v922, %v1111
      %v1210 = vmul.f32 %v923, %v1116
      %v1211 = vmul.f32 %v924, %v1121
      %v1212 = vmul.f32 %v925, %v1126
      %v1213 = vmul.f32 %v926, %v1131
      %v1214 = vmul.f32 %v927, %v1136
      %v1215 = vmul.f32 %v928, %v1141
      %v1216 = vmul.f32 %v929, %v1146
      %v1217 = vmul.f32 %v930, %v1151
      %v1218 = vmul.f32 %v931, %v1156
      %v1219 = vmul.f32 %v932, %v1161
      %v1220 = vmul.f32 %v933, %v1166
      %v1221 = vmul.f32 %v934, %v1171
      %v1222 = vmul.f32 %v935, %v1176
      %v1223 = vmul.f32 %v936, %v1181
      %1224 = vst.msk [vmem:[#allocation2] sm:$0xff] %vm532, %v1183
      %1225 = vst.msk [vmem:[#allocation2 + $0x8] sm:$0xff] %vm532, %v1184
      %1226 = vst.msk [vmem:[#allocation2 + $0x10] sm:$0xff] %vm532, %v1185
      %1227 = vst.msk [vmem:[#allocation2 + $0x18] sm:$0xff] %vm532, %v1186
      %1228 = vst.msk [vmem:[#allocation2 + $0x20] sm:$0xff] %vm532, %v1187
      %1229 = vst.msk [vmem:[#allocation2 + $0x28] sm:$0xff] %vm532, %v1188
      %1230 = vst.msk [vmem:[#allocation2 + $0x30] sm:$0xff] %vm532, %v1189
      %1231 = vst.msk [vmem:[#allocation2 + $0x38] sm:$0xff] %vm532, %v1190
      %1232 = vst.msk [vmem:[#allocation2 + $0x40] sm:$0xff] %vm532, %v1191
      %1233 = vst.msk [vmem:[#allocation2 + $0x48] sm:$0xff] %vm532, %v1192
      %1234 = vst.msk [vmem:[#allocation2 + $0x50] sm:$0xff] %vm532, %v1193
      %1235 = vst.msk [vmem:[#allocation2 + $0x58] sm:$0xff] %vm532, %v1194
      %1236 = vst.msk [vmem:[#allocation2 + $0x60] sm:$0xff] %vm532, %v1195
      %1237 = vst.msk [vmem:[#allocation2 + $0x68] sm:$0xff] %vm532, %v1196
      %1238 = vst.msk [vmem:[#allocation2 + $0x70] sm:$0xff] %vm532, %v1197
      %1239 = vst.msk [vmem:[#allocation2 + $0x78] sm:$0xff] %vm532, %v1198
      %1240 = vst.msk [vmem:[#allocation2 + $0x80] sm:$0xff] %vm532, %v1199
      %1241 = vst.msk [vmem:[#allocation2 + $0x88] sm:$0xff] %vm532, %v1200
      %1242 = vst.msk [vmem:[#allocation2 + $0x90] sm:$0xff] %vm532, %v1201
      %1243 = vst.msk [vmem:[#allocation2 + $0x98] sm:$0xff] %vm532, %v1202
      %1244 = vst.msk [vmem:[#allocation2 + $0xa0] sm:$0xff] %vm532, %v1203
      %1245 = vst.msk [vmem:[#allocation2 + $0xa8] sm:$0xff] %vm532, %v1204
      %1246 = vst.msk [vmem:[#allocation2 + $0xb0] sm:$0xff] %vm532, %v1205
      %1247 = vst.msk [vmem:[#allocation2 + $0xb8] sm:$0xff] %vm532, %v1206
      %1248 = vst.msk [vmem:[#allocation2 + $0xc0] sm:$0xff] %vm532, %v1207
      %1249 = vst.msk [vmem:[#allocation2 + $0xc8] sm:$0xff] %vm532, %v1208
      %1250 = vst.msk [vmem:[#allocation2 + $0xd0] sm:$0xff] %vm532, %v1209
      %1251 = vst.msk [vmem:[#allocation2 + $0xd8] sm:$0xff] %vm532, %v1210
      %1252 = vst.msk [vmem:[#allocation2 + $0xe0] sm:$0xff] %vm532, %v1211
      %1253 = vst.msk [vmem:[#allocation2 + $0xe8] sm:$0xff] %vm532, %v1212
      %1254 = vst.msk [vmem:[#allocation2 + $0xf0] sm:$0xff] %vm532, %v1213
      %1255 = vst.msk [vmem:[#allocation2 + $0xf8] sm:$0xff] %vm532, %v1214
      %1256 = vst.msk [vmem:[#allocation2 + $0x100] sm:$0xff] %vm532, %v1215
      %1257 = vst.msk [vmem:[#allocation2 + $0x108] sm:$0xff] %vm532, %v1216
      %1258 = vst.msk [vmem:[#allocation2 + $0x110] sm:$0xff] %vm532, %v1217
      %1259 = vst.msk [vmem:[#allocation2 + $0x118] sm:$0xff] %vm532, %v1218
      %1260 = vst.msk [vmem:[#allocation2 + $0x120] sm:$0xff] %vm532, %v1219
      %1261 = vst.msk [vmem:[#allocation2 + $0x128] sm:$0xff] %vm532, %v1220
      %1262 = vst.msk [vmem:[#allocation2 + $0x130] sm:$0xff] %vm532, %v1221
      %1263 = vst.msk [vmem:[#allocation2 + $0x138] sm:$0xff] %vm532, %v1222
      %1264 = vst.msk [vmem:[#allocation2 + $0x140] sm:$0xff] %vm532, %v1223
      %v1265 = vld [vmem:[#allocation2] sm:$0xff]
      %v1266 = vld [vmem:[#allocation2 + $0x8] sm:$0xff]
      %v1267 = vld [vmem:[#allocation2 + $0x10] sm:$0xff]
      %v1268 = vld [vmem:[#allocation2 + $0x18] sm:$0xff]
      %v1269 = vld [vmem:[#allocation2 + $0x20] sm:$0xff]
      %v1270 = vld [vmem:[#allocation2 + $0x28] sm:$0xff]
      %v1271 = vld [vmem:[#allocation2 + $0x30] sm:$0xff]
      %v1272 = vld [vmem:[#allocation2 + $0x38] sm:$0xff]
      %v1273 = vld [vmem:[#allocation2 + $0x40] sm:$0xff]
      %v1274 = vld [vmem:[#allocation2 + $0x48] sm:$0xff]
      %v1275 = vld [vmem:[#allocation2 + $0x50] sm:$0xff]
      %v1276 = vld [vmem:[#allocation2 + $0x58] sm:$0xff]
      %v1277 = vld [vmem:[#allocation2 + $0x60] sm:$0xff]
      %v1278 = vld [vmem:[#allocation2 + $0x68] sm:$0xff]
      %v1279 = vld [vmem:[#allocation2 + $0x70] sm:$0xff]
      %v1280 = vld [vmem:[#allocation2 + $0x78] sm:$0xff]
      %v1281 = vld [vmem:[#allocation2 + $0x80] sm:$0xff]
      %v1282 = vld [vmem:[#allocation2 + $0x88] sm:$0xff]
      %v1283 = vld [vmem:[#allocation2 + $0x90] sm:$0xff]
      %v1284 = vld [vmem:[#allocation2 + $0x98] sm:$0xff]
      %v1285 = vld [vmem:[#allocation2 + $0xa0] sm:$0xff]
      %v1286 = vld [vmem:[#allocation2 + $0xa8] sm:$0xff]
      %v1287 = vld [vmem:[#allocation2 + $0xb0] sm:$0xff]
      %v1288 = vld [vmem:[#allocation2 + $0xb8] sm:$0xff]
      %v1289 = vld [vmem:[#allocation2 + $0xc0] sm:$0xff]
      %v1290 = vld [vmem:[#allocation2 + $0xc8] sm:$0xff]
      %v1291 = vld [vmem:[#allocation2 + $0xd0] sm:$0xff]
      %v1292 = vld [vmem:[#allocation2 + $0xd8] sm:$0xff]
      %v1293 = vld [vmem:[#allocation2 + $0xe0] sm:$0xff]
      %v1294 = vld [vmem:[#allocation2 + $0xe8] sm:$0xff]
      %v1295 = vld [vmem:[#allocation2 + $0xf0] sm:$0xff]
      %v1296 = vld [vmem:[#allocation2 + $0xf8] sm:$0xff]
      %v1297 = vld [vmem:[#allocation2 + $0x100] sm:$0xff]
      %v1298 = vld [vmem:[#allocation2 + $0x108] sm:$0xff]
      %v1299 = vld [vmem:[#allocation2 + $0x110] sm:$0xff]
      %v1300 = vld [vmem:[#allocation2 + $0x118] sm:$0xff]
      %v1301 = vpack.c.bf16 %v1266, %v1265
      %v1302 = vpack.c.bf16 %v1268, %v1267
      %v1303 = vpack.c.bf16 %v1270, %v1269
      %v1304 = vpack.c.bf16 %v1272, %v1271
      %v1305 = vpack.c.bf16 %v1274, %v1273
      %v1306 = vpack.c.bf16 %v1276, %v1275
      %v1307 = vpack.c.bf16 %v1278, %v1277
      %v1308 = vpack.c.bf16 %v1280, %v1279
      %v1309 = vpack.c.bf16 %v1282, %v1281
      %v1310 = vpack.c.bf16 %v1284, %v1283
      %v1311 = vpack.c.bf16 %v1286, %v1285
      %v1312 = vpack.c.bf16 %v1288, %v1287
      %v1313 = vpack.c.bf16 %v1290, %v1289
      %v1314 = vpack.c.bf16 %v1292, %v1291
      %v1315 = vpack.c.bf16 %v1294, %v1293
      %v1316 = vpack.c.bf16 %v1296, %v1295
      %v1317 = vpack.c.bf16 %v1298, %v1297
      %v1318 = vpack.c.bf16 %v1300, %v1299
      %v1319 = vld [vmem:[%s5] sm:$0x3]
      %v1320 = vld [vmem:[#allocation2 + $0x1] sm:$0xff]
      %v1321 = vld [vmem:[#allocation2 + $0x9] sm:$0xff]
      %v1322 = vld [vmem:[#allocation2 + $0x11] sm:$0xff]
      %v1323 = vld [vmem:[#allocation2 + $0x19] sm:$0xff]
      %v1324 = vld [vmem:[#allocation2 + $0x21] sm:$0xff]
      %v1325 = vld [vmem:[#allocation2 + $0x29] sm:$0xff]
      %v1326 = vld [vmem:[#allocation2 + $0x31] sm:$0xff]
      %v1327 = vld [vmem:[#allocation2 + $0x39] sm:$0xff]
      %v1328 = vld [vmem:[#allocation2 + $0x41] sm:$0xff]
      %v1329 = vld [vmem:[#allocation2 + $0x49] sm:$0xff]
      %v1330 = vld [vmem:[#allocation2 + $0x51] sm:$0xff]
      %v1331 = vld [vmem:[#allocation2 + $0x59] sm:$0xff]
      %v1332 = vld [vmem:[#allocation2 + $0x61] sm:$0xff]
      %v1333 = vld [vmem:[#allocation2 + $0x69] sm:$0xff]
      %v1334 = vld [vmem:[#allocation2 + $0x71] sm:$0xff]
      %v1335 = vld [vmem:[#allocation2 + $0x79] sm:$0xff]
      %v1336 = vld [vmem:[#allocation2 + $0x81] sm:$0xff]
      %v1337 = vld [vmem:[#allocation2 + $0x89] sm:$0xff]
      %v1338 = vld [vmem:[#allocation2 + $0x91] sm:$0xff]
      %v1339 = vld [vmem:[#allocation2 + $0x99] sm:$0xff]
      %v1340 = vld [vmem:[#allocation2 + $0xa1] sm:$0xff]
      %v1341 = vld [vmem:[#allocation2 + $0xa9] sm:$0xff]
      %v1342 = vld [vmem:[#allocation2 + $0xb1] sm:$0xff]
      %v1343 = vld [vmem:[#allocation2 + $0xb9] sm:$0xff]
      %v1344 = vld [vmem:[#allocation2 + $0xc1] sm:$0xff]
      %v1345 = vld [vmem:[#allocation2 + $0xc9] sm:$0xff]
      %v1346 = vld [vmem:[#allocation2 + $0xd1] sm:$0xff]
      %v1347 = vld [vmem:[#allocation2 + $0xd9] sm:$0xff]
      %v1348 = vld [vmem:[#allocation2 + $0xe1] sm:$0xff]
      %v1349 = vld [vmem:[#allocation2 + $0xe9] sm:$0xff]
      %v1350 = vld [vmem:[#allocation2 + $0xf1] sm:$0xff]
      %v1351 = vld [vmem:[#allocation2 + $0xf9] sm:$0xff]
      %v1352 = vld [vmem:[#allocation2 + $0x101] sm:$0xff]
      %v1353 = vld [vmem:[#allocation2 + $0x109] sm:$0xff]
      %v1354 = vld [vmem:[#allocation2 + $0x111] sm:$0xff]
      %v1355 = vld [vmem:[#allocation2 + $0x119] sm:$0xff]
      %v1356 = vpack.c.bf16 %v1321, %v1320
      %v1357 = vpack.c.bf16 %v1323, %v1322
      %v1358 = vpack.c.bf16 %v1325, %v1324
      %v1359 = vpack.c.bf16 %v1327, %v1326
      %v1360 = vpack.c.bf16 %v1329, %v1328
      %v1361 = vpack.c.bf16 %v1331, %v1330
      %v1362 = vpack.c.bf16 %v1333, %v1332
      %v1363 = vpack.c.bf16 %v1335, %v1334
      %v1364 = vpack.c.bf16 %v1337, %v1336
      %v1365 = vpack.c.bf16 %v1339, %v1338
      %v1366 = vpack.c.bf16 %v1341, %v1340
      %v1367 = vpack.c.bf16 %v1343, %v1342
      %v1368 = vpack.c.bf16 %v1345, %v1344
      %v1369 = vpack.c.bf16 %v1347, %v1346
      %v1370 = vpack.c.bf16 %v1349, %v1348
      %v1371 = vpack.c.bf16 %v1351, %v1350
      %v1372 = vpack.c.bf16 %v1353, %v1352
      %v1373 = vpack.c.bf16 %v1355, %v1354
      %s1374 = scalar_lea.vmem %s5, 2
      %v1375 = vld [vmem:[%s1374] sm:$0x3]
      %v1377 = vsel %vm532, %v1356, 0
      %v1380 = vsel %vm532, %v1357, 0
      %v1383 = vsel %vm532, %v1358, 0
      %v1386 = vsel %vm532, %v1359, 0
      %v1389 = vsel %vm532, %v1360, 0
      %v1392 = vsel %vm532, %v1361, 0
      %v1395 = vsel %vm532, %v1362, 0
      %v1398 = vsel %vm532, %v1363, 0
      %v1401 = vsel %vm532, %v1364, 0
      %v1404 = vsel %vm532, %v1365, 0
      %v1407 = vsel %vm532, %v1366, 0
      %v1410 = vsel %vm532, %v1367, 0
      %v1413 = vsel %vm532, %v1368, 0
      %v1416 = vsel %vm532, %v1369, 0
      %v1419 = vsel %vm532, %v1370, 0
      %v1422 = vsel %vm532, %v1371, 0
      %v1425 = vsel %vm532, %v1372, 0
      %v1428 = vsel %vm532, %v1373, 0
      %v1431 = vsel %vm596, %v1375, 0
      %1433 = vmatprep.subr.bf16.mxu0 0
      %1434 = vmatpush1.bf16.msra.mxu0 0
      %1435 = vmatprep.subr.bf16.mxu0 0
      %1436 = vmatpush1.bf16.msra.mxu0 0
      %1437 = vmatprep.subr.bf16.mxu0 0
      %1438 = vmatpush1.bf16.msra.mxu0 0
      %1439 = vmatprep.subr.bf16.mxu0 0
      %1440 = vmatpush1.bf16.msra.mxu0 0
      %1441 = vmatprep.subr.bf16.mxu0 0
      %1442 = vmatpush1.bf16.msra.mxu0 0
      %1443 = vmatprep.subr.bf16.mxu0 0
      %1444 = vmatpush1.bf16.msra.mxu0 0
      %1445 = vmatprep.subr.bf16.mxu0 0
      %1446 = vmatpush1.bf16.msra.mxu0 0
      %1447 = vmatprep.subr.bf16.mxu0 0
      %1448 = vmatpush1.bf16.msra.mxu0 %v1431
      %1449 = vmatprep.subr.bf16.mxu0 0
      %1450 = vmatpush2.bf16.msra.mxu0 0
      %1451 = vmatprep.subr.bf16.mxu0 0
      %1452 = vmatpush2.bf16.msra.mxu0 0
      %1453 = vmatprep.subr.bf16.mxu0 0
      %1454 = vmatpush2.bf16.msra.mxu0 0
      %1455 = vmatprep.subr.bf16.mxu0 0
      %1456 = vmatpush2.bf16.msra.mxu0 0
      %1457 = vmatprep.subr.bf16.mxu0 0
      %1458 = vmatpush2.bf16.msra.mxu0 0
      %1459 = vmatprep.subr.bf16.mxu0 0
      %1460 = vmatpush2.bf16.msra.mxu0 0
      %1461 = vmatprep.subr.bf16.mxu0 0
      %1462 = vmatpush2.bf16.msra.mxu0 0
      %1463 = vmatprep.subr.bf16.mxu0 0
      %1464 = vmatpush2.bf16.msra.mxu0 0
      %1465 = vmatprep.mubr.bf16.mxu0 0
      %1466 = vmatmul.mubr.bf16.gmra.mxu0 %v1377
      %v1467 = vpop.f32.mrf.mxu0
      %v1468 = vadd.f32 0.0, %v1467
      %v1469 = vpop.f32.mrf.mxu0
      %v1470 = vpop.f32.mrf.mxu0
      %v1471 = vadd.f32 0.0, %v1470
      %v1472 = vpop.f32.mrf.mxu0
      %1473 = vmatprep.mubr.bf16.mxu0 0
      %1474 = vmatmul.mubr.bf16.gmra.mxu0 %v1380
      %v1475 = vpop.f32.mrf.mxu0
      %v1476 = vadd.f32 0.0, %v1475
      %v1477 = vpop.f32.mrf.mxu0
      %v1478 = vpop.f32.mrf.mxu0
      %v1479 = vadd.f32 0.0, %v1478
      %v1480 = vpop.f32.mrf.mxu0
      %1481 = vmatprep.mubr.bf16.mxu0 0
      %1482 = vmatmul.mubr.bf16.gmra.mxu0 %v1383
      %v1483 = vpop.f32.mrf.mxu0
      %v1484 = vadd.f32 0.0, %v1483
      %v1485 = vpop.f32.mrf.mxu0
      %v1486 = vpop.f32.mrf.mxu0
      %v1487 = vadd.f32 0.0, %v1486
      %v1488 = vpop.f32.mrf.mxu0
      %1489 = vmatprep.mubr.bf16.mxu0 0
      %1490 = vmatmul.mubr.bf16.gmra.mxu0 %v1386
      %v1491 = vpop.f32.mrf.mxu0
      %v1492 = vadd.f32 0.0, %v1491
      %v1493 = vpop.f32.mrf.mxu0
      %v1494 = vpop.f32.mrf.mxu0
      %v1495 = vadd.f32 0.0, %v1494
      %v1496 = vpop.f32.mrf.mxu0
      %1497 = vmatprep.mubr.bf16.mxu0 0
      %1498 = vmatmul.mubr.bf16.gmra.mxu0 %v1389
      %v1499 = vpop.f32.mrf.mxu0
      %v1500 = vadd.f32 0.0, %v1499
      %v1501 = vpop.f32.mrf.mxu0
      %v1502 = vpop.f32.mrf.mxu0
      %v1503 = vadd.f32 0.0, %v1502
      %v1504 = vpop.f32.mrf.mxu0
      %1505 = vmatprep.mubr.bf16.mxu0 0
      %1506 = vmatmul.mubr.bf16.gmra.mxu0 %v1392
      %v1507 = vpop.f32.mrf.mxu0
      %v1508 = vadd.f32 0.0, %v1507
      %v1509 = vpop.f32.mrf.mxu0
      %v1510 = vpop.f32.mrf.mxu0
      %v1511 = vadd.f32 0.0, %v1510
      %v1512 = vpop.f32.mrf.mxu0
      %1513 = vmatprep.mubr.bf16.mxu0 0
      %1514 = vmatmul.mubr.bf16.gmra.mxu0 %v1395
      %v1515 = vpop.f32.mrf.mxu0
      %v1516 = vadd.f32 0.0, %v1515
      %v1517 = vpop.f32.mrf.mxu0
      %v1518 = vpop.f32.mrf.mxu0
      %v1519 = vadd.f32 0.0, %v1518
      %v1520 = vpop.f32.mrf.mxu0
      %1521 = vmatprep.mubr.bf16.mxu0 0
      %1522 = vmatmul.mubr.bf16.gmra.mxu0 %v1398
      %v1523 = vpop.f32.mrf.mxu0
      %v1524 = vadd.f32 0.0, %v1523
      %v1525 = vpop.f32.mrf.mxu0
      %v1526 = vpop.f32.mrf.mxu0
      %v1527 = vadd.f32 0.0, %v1526
      %v1528 = vpop.f32.mrf.mxu0
      %1529 = vmatprep.mubr.bf16.mxu0 0
      %1530 = vmatmul.mubr.bf16.gmra.mxu0 %v1401
      %v1531 = vpop.f32.mrf.mxu0
      %v1532 = vadd.f32 0.0, %v1531
      %v1533 = vpop.f32.mrf.mxu0
      %v1534 = vpop.f32.mrf.mxu0
      %v1535 = vadd.f32 0.0, %v1534
      %v1536 = vpop.f32.mrf.mxu0
      %1537 = vmatprep.mubr.bf16.mxu0 0
      %1538 = vmatmul.mubr.bf16.gmra.mxu0 %v1404
      %v1539 = vpop.f32.mrf.mxu0
      %v1540 = vadd.f32 0.0, %v1539
      %v1541 = vpop.f32.mrf.mxu0
      %v1542 = vpop.f32.mrf.mxu0
      %v1543 = vadd.f32 0.0, %v1542
      %v1544 = vpop.f32.mrf.mxu0
      %1545 = vmatprep.mubr.bf16.mxu0 0
      %1546 = vmatmul.mubr.bf16.gmra.mxu0 %v1407
      %v1547 = vpop.f32.mrf.mxu0
      %v1548 = vadd.f32 0.0, %v1547
      %v1549 = vpop.f32.mrf.mxu0
      %v1550 = vpop.f32.mrf.mxu0
      %v1551 = vadd.f32 0.0, %v1550
      %v1552 = vpop.f32.mrf.mxu0
      %1553 = vmatprep.mubr.bf16.mxu0 0
      %1554 = vmatmul.mubr.bf16.gmra.mxu0 %v1410
      %v1555 = vpop.f32.mrf.mxu0
      %v1556 = vadd.f32 0.0, %v1555
      %v1557 = vpop.f32.mrf.mxu0
      %v1558 = vpop.f32.mrf.mxu0
      %v1559 = vadd.f32 0.0, %v1558
      %v1560 = vpop.f32.mrf.mxu0
      %1561 = vmatprep.mubr.bf16.mxu0 0
      %1562 = vmatmul.mubr.bf16.gmra.mxu0 %v1413
      %v1563 = vpop.f32.mrf.mxu0
      %v1564 = vadd.f32 0.0, %v1563
      %v1565 = vpop.f32.mrf.mxu0
      %v1566 = vpop.f32.mrf.mxu0
      %v1567 = vadd.f32 0.0, %v1566
      %v1568 = vpop.f32.mrf.mxu0
      %1569 = vmatprep.mubr.bf16.mxu0 0
      %1570 = vmatmul.mubr.bf16.gmra.mxu0 %v1416
      %v1571 = vpop.f32.mrf.mxu0
      %v1572 = vadd.f32 0.0, %v1571
      %v1573 = vpop.f32.mrf.mxu0
      %v1574 = vpop.f32.mrf.mxu0
      %v1575 = vadd.f32 0.0, %v1574
      %v1576 = vpop.f32.mrf.mxu0
      %1577 = vmatprep.mubr.bf16.mxu0 0
      %1578 = vmatmul.mubr.bf16.gmra.mxu0 %v1419
      %v1579 = vpop.f32.mrf.mxu0
      %v1580 = vadd.f32 0.0, %v1579
      %v1581 = vpop.f32.mrf.mxu0
      %v1582 = vpop.f32.mrf.mxu0
      %v1583 = vadd.f32 0.0, %v1582
      %v1584 = vpop.f32.mrf.mxu0
      %1585 = vmatprep.mubr.bf16.mxu0 0
      %1586 = vmatmul.mubr.bf16.gmra.mxu0 %v1422
      %v1587 = vpop.f32.mrf.mxu0
      %v1588 = vadd.f32 0.0, %v1587
      %v1589 = vpop.f32.mrf.mxu0
      %v1590 = vpop.f32.mrf.mxu0
      %v1591 = vadd.f32 0.0, %v1590
      %v1592 = vpop.f32.mrf.mxu0
      %1593 = vmatprep.mubr.bf16.mxu0 0
      %1594 = vmatmul.mubr.bf16.gmra.mxu0 %v1425
      %v1595 = vpop.f32.mrf.mxu0
      %v1596 = vadd.f32 0.0, %v1595
      %v1597 = vpop.f32.mrf.mxu0
      %v1598 = vpop.f32.mrf.mxu0
      %v1599 = vadd.f32 0.0, %v1598
      %v1600 = vpop.f32.mrf.mxu0
      %1601 = vmatprep.mubr.bf16.mxu0 0
      %1602 = vmatmul.mubr.bf16.gmra.mxu0 %v1428
      %v1603 = vpop.f32.mrf.mxu0
      %v1604 = vadd.f32 0.0, %v1603
      %v1605 = vpop.f32.mrf.mxu0
      %v1606 = vpop.f32.mrf.mxu0
      %v1607 = vadd.f32 0.0, %v1606
      %v1608 = vpop.f32.mrf.mxu0
      %1609 = vdwg.mxu0
      %v1611 = vsel %vm532, %v1301, 0
      %v1614 = vsel %vm532, %v1302, 0
      %v1617 = vsel %vm532, %v1303, 0
      %v1620 = vsel %vm532, %v1304, 0
      %v1623 = vsel %vm532, %v1305, 0
      %v1626 = vsel %vm532, %v1306, 0
      %v1629 = vsel %vm532, %v1307, 0
      %v1632 = vsel %vm532, %v1308, 0
      %v1635 = vsel %vm532, %v1309, 0
      %v1638 = vsel %vm532, %v1310, 0
      %v1641 = vsel %vm532, %v1311, 0
      %v1644 = vsel %vm532, %v1312, 0
      %v1647 = vsel %vm532, %v1313, 0
      %v1650 = vsel %vm532, %v1314, 0
      %v1653 = vsel %vm532, %v1315, 0
      %v1656 = vsel %vm532, %v1316, 0
      %v1659 = vsel %vm532, %v1317, 0
      %v1662 = vsel %vm532, %v1318, 0
      %v1665 = vsel %vm596, %v1319, 0
      %1667 = vmatprep.subr.bf16.mxu0 0
      %1668 = vmatpush1.bf16.msra.mxu0 0
      %1669 = vmatprep.subr.bf16.mxu0 0
      %1670 = vmatpush1.bf16.msra.mxu0 0
      %1671 = vmatprep.subr.bf16.mxu0 0
      %1672 = vmatpush1.bf16.msra.mxu0 0
      %1673 = vmatprep.subr.bf16.mxu0 0
      %1674 = vmatpush1.bf16.msra.mxu0 0
      %1675 = vmatprep.subr.bf16.mxu0 0
      %1676 = vmatpush1.bf16.msra.mxu0 0
      %1677 = vmatprep.subr.bf16.mxu0 0
      %1678 = vmatpush1.bf16.msra.mxu0 0
      %1679 = vmatprep.subr.bf16.mxu0 0
      %1680 = vmatpush1.bf16.msra.mxu0 0
      %1681 = vmatprep.subr.bf16.mxu0 0
      %1682 = vmatpush1.bf16.msra.mxu0 %v1665
      %1683 = vmatprep.subr.bf16.mxu0 0
      %1684 = vmatpush2.bf16.msra.mxu0 0
      %1685 = vmatprep.subr.bf16.mxu0 0
      %1686 = vmatpush2.bf16.msra.mxu0 0
      %1687 = vmatprep.subr.bf16.mxu0 0
      %1688 = vmatpush2.bf16.msra.mxu0 0
      %1689 = vmatprep.subr.bf16.mxu0 0
      %1690 = vmatpush2.bf16.msra.mxu0 0
      %1691 = vmatprep.subr.bf16.mxu0 0
      %1692 = vmatpush2.bf16.msra.mxu0 0
      %1693 = vmatprep.subr.bf16.mxu0 0
      %1694 = vmatpush2.bf16.msra.mxu0 0
      %1695 = vmatprep.subr.bf16.mxu0 0
      %1696 = vmatpush2.bf16.msra.mxu0 0
      %1697 = vmatprep.subr.bf16.mxu0 0
      %1698 = vmatpush2.bf16.msra.mxu0 0
      %1699 = vmatprep.mubr.bf16.mxu0 0
      %1700 = vmatmul.mubr.bf16.gmra.mxu0 %v1611
      %v1701 = vpop.f32.mrf.mxu0
      %v1702 = vadd.f32 %v1468, %v1701
      %v1703 = vpop.f32.mrf.mxu0
      %v1704 = vpop.f32.mrf.mxu0
      %v1705 = vadd.f32 %v1471, %v1704
      %v1706 = vpop.f32.mrf.mxu0
      %1707 = vmatprep.mubr.bf16.mxu0 0
      %1708 = vmatmul.mubr.bf16.gmra.mxu0 %v1614
      %v1709 = vpop.f32.mrf.mxu0
      %v1710 = vadd.f32 %v1476, %v1709
      %v1711 = vpop.f32.mrf.mxu0
      %v1712 = vpop.f32.mrf.mxu0
      %v1713 = vadd.f32 %v1479, %v1712
      %v1714 = vpop.f32.mrf.mxu0
      %1715 = vmatprep.mubr.bf16.mxu0 0
      %1716 = vmatmul.mubr.bf16.gmra.mxu0 %v1617
      %v1717 = vpop.f32.mrf.mxu0
      %v1718 = vadd.f32 %v1484, %v1717
      %v1719 = vpop.f32.mrf.mxu0
      %v1720 = vpop.f32.mrf.mxu0
      %v1721 = vadd.f32 %v1487, %v1720
      %v1722 = vpop.f32.mrf.mxu0
      %1723 = vmatprep.mubr.bf16.mxu0 0
      %1724 = vmatmul.mubr.bf16.gmra.mxu0 %v1620
      %v1725 = vpop.f32.mrf.mxu0
      %v1726 = vadd.f32 %v1492, %v1725
      %v1727 = vpop.f32.mrf.mxu0
      %v1728 = vpop.f32.mrf.mxu0
      %v1729 = vadd.f32 %v1495, %v1728
      %v1730 = vpop.f32.mrf.mxu0
      %1731 = vmatprep.mubr.bf16.mxu0 0
      %1732 = vmatmul.mubr.bf16.gmra.mxu0 %v1623
      %v1733 = vpop.f32.mrf.mxu0
      %v1734 = vadd.f32 %v1500, %v1733
      %v1735 = vpop.f32.mrf.mxu0
      %v1736 = vpop.f32.mrf.mxu0
      %v1737 = vadd.f32 %v1503, %v1736
      %v1738 = vpop.f32.mrf.mxu0
      %1739 = vmatprep.mubr.bf16.mxu0 0
      %1740 = vmatmul.mubr.bf16.gmra.mxu0 %v1626
      %v1741 = vpop.f32.mrf.mxu0
      %v1742 = vadd.f32 %v1508, %v1741
      %v1743 = vpop.f32.mrf.mxu0
      %v1744 = vpop.f32.mrf.mxu0
      %v1745 = vadd.f32 %v1511, %v1744
      %v1746 = vpop.f32.mrf.mxu0
      %1747 = vmatprep.mubr.bf16.mxu0 0
      %1748 = vmatmul.mubr.bf16.gmra.mxu0 %v1629
      %v1749 = vpop.f32.mrf.mxu0
      %v1750 = vadd.f32 %v1516, %v1749
      %v1751 = vpop.f32.mrf.mxu0
      %v1752 = vpop.f32.mrf.mxu0
      %v1753 = vadd.f32 %v1519, %v1752
      %v1754 = vpop.f32.mrf.mxu0
      %1755 = vmatprep.mubr.bf16.mxu0 0
      %1756 = vmatmul.mubr.bf16.gmra.mxu0 %v1632
      %v1757 = vpop.f32.mrf.mxu0
      %v1758 = vadd.f32 %v1524, %v1757
      %v1759 = vpop.f32.mrf.mxu0
      %v1760 = vpop.f32.mrf.mxu0
      %v1761 = vadd.f32 %v1527, %v1760
      %v1762 = vpop.f32.mrf.mxu0
      %1763 = vmatprep.mubr.bf16.mxu0 0
      %1764 = vmatmul.mubr.bf16.gmra.mxu0 %v1635
      %v1765 = vpop.f32.mrf.mxu0
      %v1766 = vadd.f32 %v1532, %v1765
      %v1767 = vpop.f32.mrf.mxu0
      %v1768 = vpop.f32.mrf.mxu0
      %v1769 = vadd.f32 %v1535, %v1768
      %v1770 = vpop.f32.mrf.mxu0
      %1771 = vmatprep.mubr.bf16.mxu0 0
      %1772 = vmatmul.mubr.bf16.gmra.mxu0 %v1638
      %v1773 = vpop.f32.mrf.mxu0
      %v1774 = vadd.f32 %v1540, %v1773
      %v1775 = vpop.f32.mrf.mxu0
      %v1776 = vpop.f32.mrf.mxu0
      %v1777 = vadd.f32 %v1543, %v1776
      %v1778 = vpop.f32.mrf.mxu0
      %1779 = vmatprep.mubr.bf16.mxu0 0
      %1780 = vmatmul.mubr.bf16.gmra.mxu0 %v1641
      %v1781 = vpop.f32.mrf.mxu0
      %v1782 = vadd.f32 %v1548, %v1781
      %v1783 = vpop.f32.mrf.mxu0
      %v1784 = vpop.f32.mrf.mxu0
      %v1785 = vadd.f32 %v1551, %v1784
      %v1786 = vpop.f32.mrf.mxu0
      %1787 = vmatprep.mubr.bf16.mxu0 0
      %1788 = vmatmul.mubr.bf16.gmra.mxu0 %v1644
      %v1789 = vpop.f32.mrf.mxu0
      %v1790 = vadd.f32 %v1556, %v1789
      %v1791 = vpop.f32.mrf.mxu0
      %v1792 = vpop.f32.mrf.mxu0
      %v1793 = vadd.f32 %v1559, %v1792
      %v1794 = vpop.f32.mrf.mxu0
      %1795 = vmatprep.mubr.bf16.mxu0 0
      %1796 = vmatmul.mubr.bf16.gmra.mxu0 %v1647
      %v1797 = vpop.f32.mrf.mxu0
      %v1798 = vadd.f32 %v1564, %v1797
      %v1799 = vpop.f32.mrf.mxu0
      %v1800 = vpop.f32.mrf.mxu0
      %v1801 = vadd.f32 %v1567, %v1800
      %v1802 = vpop.f32.mrf.mxu0
      %1803 = vmatprep.mubr.bf16.mxu0 0
      %1804 = vmatmul.mubr.bf16.gmra.mxu0 %v1650
      %v1805 = vpop.f32.mrf.mxu0
      %v1806 = vadd.f32 %v1572, %v1805
      %v1807 = vpop.f32.mrf.mxu0
      %v1808 = vpop.f32.mrf.mxu0
      %v1809 = vadd.f32 %v1575, %v1808
      %v1810 = vpop.f32.mrf.mxu0
      %1811 = vmatprep.mubr.bf16.mxu0 0
      %1812 = vmatmul.mubr.bf16.gmra.mxu0 %v1653
      %v1813 = vpop.f32.mrf.mxu0
      %v1814 = vadd.f32 %v1580, %v1813
      %v1815 = vpop.f32.mrf.mxu0
      %v1816 = vpop.f32.mrf.mxu0
      %v1817 = vadd.f32 %v1583, %v1816
      %v1818 = vpop.f32.mrf.mxu0
      %1819 = vmatprep.mubr.bf16.mxu0 0
      %1820 = vmatmul.mubr.bf16.gmra.mxu0 %v1656
      %v1821 = vpop.f32.mrf.mxu0
      %v1822 = vadd.f32 %v1588, %v1821
      %v1823 = vpop.f32.mrf.mxu0
      %v1824 = vpop.f32.mrf.mxu0
      %v1825 = vadd.f32 %v1591, %v1824
      %v1826 = vpop.f32.mrf.mxu0
      %1827 = vmatprep.mubr.bf16.mxu0 0
      %1828 = vmatmul.mubr.bf16.gmra.mxu0 %v1659
      %v1829 = vpop.f32.mrf.mxu0
      %v1830 = vadd.f32 %v1596, %v1829
      %v1831 = vpop.f32.mrf.mxu0
      %v1832 = vpop.f32.mrf.mxu0
      %v1833 = vadd.f32 %v1599, %v1832
      %v1834 = vpop.f32.mrf.mxu0
      %1835 = vmatprep.mubr.bf16.mxu0 0
      %1836 = vmatmul.mubr.bf16.gmra.mxu0 %v1662
      %v1837 = vpop.f32.mrf.mxu0
      %v1838 = vadd.f32 %v1604, %v1837
      %v1839 = vpop.f32.mrf.mxu0
      %v1840 = vpop.f32.mrf.mxu0
      %v1841 = vadd.f32 %v1607, %v1840
      %v1842 = vpop.f32.mrf.mxu0
      %1843 = vdwg.mxu0
      %v1844 = vld [vmem:[#allocation2 + $0x2] sm:$0xff]
      %v1845 = vld [vmem:[#allocation2 + $0xa] sm:$0xff]
      %v1846 = vld [vmem:[#allocation2 + $0x12] sm:$0xff]
      %v1847 = vld [vmem:[#allocation2 + $0x1a] sm:$0xff]
      %v1848 = vld [vmem:[#allocation2 + $0x22] sm:$0xff]
      %v1849 = vld [vmem:[#allocation2 + $0x2a] sm:$0xff]
      %v1850 = vld [vmem:[#allocation2 + $0x32] sm:$0xff]
      %v1851 = vld [vmem:[#allocation2 + $0x3a] sm:$0xff]
      %v1852 = vld [vmem:[#allocation2 + $0x42] sm:$0xff]
      %v1853 = vld [vmem:[#allocation2 + $0x4a] sm:$0xff]
      %v1854 = vld [vmem:[#allocation2 + $0x52] sm:$0xff]
      %v1855 = vld [vmem:[#allocation2 + $0x5a] sm:$0xff]
      %v1856 = vld [vmem:[#allocation2 + $0x62] sm:$0xff]
      %v1857 = vld [vmem:[#allocation2 + $0x6a] sm:$0xff]
      %v1858 = vld [vmem:[#allocation2 + $0x72] sm:$0xff]
      %v1859 = vld [vmem:[#allocation2 + $0x7a] sm:$0xff]
      %v1860 = vld [vmem:[#allocation2 + $0x82] sm:$0xff]
      %v1861 = vld [vmem:[#allocation2 + $0x8a] sm:$0xff]
      %v1862 = vld [vmem:[#allocation2 + $0x92] sm:$0xff]
      %v1863 = vld [vmem:[#allocation2 + $0x9a] sm:$0xff]
      %v1864 = vld [vmem:[#allocation2 + $0xa2] sm:$0xff]
      %v1865 = vld [vmem:[#allocation2 + $0xaa] sm:$0xff]
      %v1866 = vld [vmem:[#allocation2 + $0xb2] sm:$0xff]
      %v1867 = vld [vmem:[#allocation2 + $0xba] sm:$0xff]
      %v1868 = vld [vmem:[#allocation2 + $0xc2] sm:$0xff]
      %v1869 = vld [vmem:[#allocation2 + $0xca] sm:$0xff]
      %v1870 = vld [vmem:[#allocation2 + $0xd2] sm:$0xff]
      %v1871 = vld [vmem:[#allocation2 + $0xda] sm:$0xff]
      %v1872 = vld [vmem:[#allocation2 + $0xe2] sm:$0xff]
      %v1873 = vld [vmem:[#allocation2 + $0xea] sm:$0xff]
      %v1874 = vld [vmem:[#allocation2 + $0xf2] sm:$0xff]
      %v1875 = vld [vmem:[#allocation2 + $0xfa] sm:$0xff]
      %v1876 = vld [vmem:[#allocation2 + $0x102] sm:$0xff]
      %v1877 = vld [vmem:[#allocation2 + $0x10a] sm:$0xff]
      %v1878 = vld [vmem:[#allocation2 + $0x112] sm:$0xff]
      %v1879 = vld [vmem:[#allocation2 + $0x11a] sm:$0xff]
      %v1880 = vpack.c.bf16 %v1845, %v1844
      %v1881 = vpack.c.bf16 %v1847, %v1846
      %v1882 = vpack.c.bf16 %v1849, %v1848
      %v1883 = vpack.c.bf16 %v1851, %v1850
      %v1884 = vpack.c.bf16 %v1853, %v1852
      %v1885 = vpack.c.bf16 %v1855, %v1854
      %v1886 = vpack.c.bf16 %v1857, %v1856
      %v1887 = vpack.c.bf16 %v1859, %v1858
      %v1888 = vpack.c.bf16 %v1861, %v1860
      %v1889 = vpack.c.bf16 %v1863, %v1862
      %v1890 = vpack.c.bf16 %v1865, %v1864
      %v1891 = vpack.c.bf16 %v1867, %v1866
      %v1892 = vpack.c.bf16 %v1869, %v1868
      %v1893 = vpack.c.bf16 %v1871, %v1870
      %v1894 = vpack.c.bf16 %v1873, %v1872
      %v1895 = vpack.c.bf16 %v1875, %v1874
      %v1896 = vpack.c.bf16 %v1877, %v1876
      %v1897 = vpack.c.bf16 %v1879, %v1878
      %s1898 = scalar_lea.vmem %s5, 4
      %v1899 = vld [vmem:[%s1898] sm:$0x3]
      %v1901 = vsel %vm532, %v1880, 0
      %v1904 = vsel %vm532, %v1881, 0
      %v1907 = vsel %vm532, %v1882, 0
      %v1910 = vsel %vm532, %v1883, 0
      %v1913 = vsel %vm532, %v1884, 0
      %v1916 = vsel %vm532, %v1885, 0
      %v1919 = vsel %vm532, %v1886, 0
      %v1922 = vsel %vm532, %v1887, 0
      %v1925 = vsel %vm532, %v1888, 0
      %v1928 = vsel %vm532, %v1889, 0
      %v1931 = vsel %vm532, %v1890, 0
      %v1934 = vsel %vm532, %v1891, 0
      %v1937 = vsel %vm532, %v1892, 0
      %v1940 = vsel %vm532, %v1893, 0
      %v1943 = vsel %vm532, %v1894, 0
      %v1946 = vsel %vm532, %v1895, 0
      %v1949 = vsel %vm532, %v1896, 0
      %v1952 = vsel %vm532, %v1897, 0
      %v1955 = vsel %vm596, %v1899, 0
      %1957 = vmatprep.subr.bf16.mxu0 0
      %1958 = vmatpush1.bf16.msra.mxu0 0
      %1959 = vmatprep.subr.bf16.mxu0 0
      %1960 = vmatpush1.bf16.msra.mxu0 0
      %1961 = vmatprep.subr.bf16.mxu0 0
      %1962 = vmatpush1.bf16.msra.mxu0 0
      %1963 = vmatprep.subr.bf16.mxu0 0
      %1964 = vmatpush1.bf16.msra.mxu0 0
      %1965 = vmatprep.subr.bf16.mxu0 0
      %1966 = vmatpush1.bf16.msra.mxu0 0
      %1967 = vmatprep.subr.bf16.mxu0 0
      %1968 = vmatpush1.bf16.msra.mxu0 0
      %1969 = vmatprep.subr.bf16.mxu0 0
      %1970 = vmatpush1.bf16.msra.mxu0 0
      %1971 = vmatprep.subr.bf16.mxu0 0
      %1972 = vmatpush1.bf16.msra.mxu0 %v1955
      %1973 = vmatprep.subr.bf16.mxu0 0
      %1974 = vmatpush2.bf16.msra.mxu0 0
      %1975 = vmatprep.subr.bf16.mxu0 0
      %1976 = vmatpush2.bf16.msra.mxu0 0
      %1977 = vmatprep.subr.bf16.mxu0 0
      %1978 = vmatpush2.bf16.msra.mxu0 0
      %1979 = vmatprep.subr.bf16.mxu0 0
      %1980 = vmatpush2.bf16.msra.mxu0 0
      %1981 = vmatprep.subr.bf16.mxu0 0
      %1982 = vmatpush2.bf16.msra.mxu0 0
      %1983 = vmatprep.subr.bf16.mxu0 0
      %1984 = vmatpush2.bf16.msra.mxu0 0
      %1985 = vmatprep.subr.bf16.mxu0 0
      %1986 = vmatpush2.bf16.msra.mxu0 0
      %1987 = vmatprep.subr.bf16.mxu0 0
      %1988 = vmatpush2.bf16.msra.mxu0 0
      %1989 = vmatprep.mubr.bf16.mxu0 0
      %1990 = vmatmul.mubr.bf16.gmra.mxu0 %v1901
      %v1991 = vpop.f32.mrf.mxu0
      %v1992 = vadd.f32 0.0, %v1991
      %v1993 = vpop.f32.mrf.mxu0
      %v1994 = vpop.f32.mrf.mxu0
      %v1995 = vadd.f32 0.0, %v1994
      %v1996 = vpop.f32.mrf.mxu0
      %1997 = vmatprep.mubr.bf16.mxu0 0
      %1998 = vmatmul.mubr.bf16.gmra.mxu0 %v1904
      %v1999 = vpop.f32.mrf.mxu0
      %v2000 = vadd.f32 0.0, %v1999
      %v2001 = vpop.f32.mrf.mxu0
      %v2002 = vpop.f32.mrf.mxu0
      %v2003 = vadd.f32 0.0, %v2002
      %v2004 = vpop.f32.mrf.mxu0
      %2005 = vmatprep.mubr.bf16.mxu0 0
      %2006 = vmatmul.mubr.bf16.gmra.mxu0 %v1907
      %v2007 = vpop.f32.mrf.mxu0
      %v2008 = vadd.f32 0.0, %v2007
      %v2009 = vpop.f32.mrf.mxu0
      %v2010 = vpop.f32.mrf.mxu0
      %v2011 = vadd.f32 0.0, %v2010
      %v2012 = vpop.f32.mrf.mxu0
      %2013 = vmatprep.mubr.bf16.mxu0 0
      %2014 = vmatmul.mubr.bf16.gmra.mxu0 %v1910
      %v2015 = vpop.f32.mrf.mxu0
      %v2016 = vadd.f32 0.0, %v2015
      %v2017 = vpop.f32.mrf.mxu0
      %v2018 = vpop.f32.mrf.mxu0
      %v2019 = vadd.f32 0.0, %v2018
      %v2020 = vpop.f32.mrf.mxu0
      %2021 = vmatprep.mubr.bf16.mxu0 0
      %2022 = vmatmul.mubr.bf16.gmra.mxu0 %v1913
      %v2023 = vpop.f32.mrf.mxu0
      %v2024 = vadd.f32 0.0, %v2023
      %v2025 = vpop.f32.mrf.mxu0
      %v2026 = vpop.f32.mrf.mxu0
      %v2027 = vadd.f32 0.0, %v2026
      %v2028 = vpop.f32.mrf.mxu0
      %2029 = vmatprep.mubr.bf16.mxu0 0
      %2030 = vmatmul.mubr.bf16.gmra.mxu0 %v1916
      %v2031 = vpop.f32.mrf.mxu0
      %v2032 = vadd.f32 0.0, %v2031
      %v2033 = vpop.f32.mrf.mxu0
      %v2034 = vpop.f32.mrf.mxu0
      %v2035 = vadd.f32 0.0, %v2034
      %v2036 = vpop.f32.mrf.mxu0
      %2037 = vmatprep.mubr.bf16.mxu0 0
      %2038 = vmatmul.mubr.bf16.gmra.mxu0 %v1919
      %v2039 = vpop.f32.mrf.mxu0
      %v2040 = vadd.f32 0.0, %v2039
      %v2041 = vpop.f32.mrf.mxu0
      %v2042 = vpop.f32.mrf.mxu0
      %v2043 = vadd.f32 0.0, %v2042
      %v2044 = vpop.f32.mrf.mxu0
      %2045 = vmatprep.mubr.bf16.mxu0 0
      %2046 = vmatmul.mubr.bf16.gmra.mxu0 %v1922
      %v2047 = vpop.f32.mrf.mxu0
      %v2048 = vadd.f32 0.0, %v2047
      %v2049 = vpop.f32.mrf.mxu0
      %v2050 = vpop.f32.mrf.mxu0
      %v2051 = vadd.f32 0.0, %v2050
      %v2052 = vpop.f32.mrf.mxu0
      %2053 = vmatprep.mubr.bf16.mxu0 0
      %2054 = vmatmul.mubr.bf16.gmra.mxu0 %v1925
      %v2055 = vpop.f32.mrf.mxu0
      %v2056 = vadd.f32 0.0, %v2055
      %v2057 = vpop.f32.mrf.mxu0
      %v2058 = vpop.f32.mrf.mxu0
      %v2059 = vadd.f32 0.0, %v2058
      %v2060 = vpop.f32.mrf.mxu0
      %2061 = vmatprep.mubr.bf16.mxu0 0
      %2062 = vmatmul.mubr.bf16.gmra.mxu0 %v1928
      %v2063 = vpop.f32.mrf.mxu0
      %v2064 = vadd.f32 0.0, %v2063
      %v2065 = vpop.f32.mrf.mxu0
      %v2066 = vpop.f32.mrf.mxu0
      %v2067 = vadd.f32 0.0, %v2066
      %v2068 = vpop.f32.mrf.mxu0
      %2069 = vmatprep.mubr.bf16.mxu0 0
      %2070 = vmatmul.mubr.bf16.gmra.mxu0 %v1931
      %v2071 = vpop.f32.mrf.mxu0
      %v2072 = vadd.f32 0.0, %v2071
      %v2073 = vpop.f32.mrf.mxu0
      %v2074 = vpop.f32.mrf.mxu0
      %v2075 = vadd.f32 0.0, %v2074
      %v2076 = vpop.f32.mrf.mxu0
      %2077 = vmatprep.mubr.bf16.mxu0 0
      %2078 = vmatmul.mubr.bf16.gmra.mxu0 %v1934
      %v2079 = vpop.f32.mrf.mxu0
      %v2080 = vadd.f32 0.0, %v2079
      %v2081 = vpop.f32.mrf.mxu0
      %v2082 = vpop.f32.mrf.mxu0
      %v2083 = vadd.f32 0.0, %v2082
      %v2084 = vpop.f32.mrf.mxu0
      %2085 = vmatprep.mubr.bf16.mxu0 0
      %2086 = vmatmul.mubr.bf16.gmra.mxu0 %v1937
      %v2087 = vpop.f32.mrf.mxu0
      %v2088 = vadd.f32 0.0, %v2087
      %v2089 = vpop.f32.mrf.mxu0
      %v2090 = vpop.f32.mrf.mxu0
      %v2091 = vadd.f32 0.0, %v2090
      %v2092 = vpop.f32.mrf.mxu0
      %2093 = vmatprep.mubr.bf16.mxu0 0
      %2094 = vmatmul.mubr.bf16.gmra.mxu0 %v1940
      %v2095 = vpop.f32.mrf.mxu0
      %v2096 = vadd.f32 0.0, %v2095
      %v2097 = vpop.f32.mrf.mxu0
      %v2098 = vpop.f32.mrf.mxu0
      %v2099 = vadd.f32 0.0, %v2098
      %v2100 = vpop.f32.mrf.mxu0
      %2101 = vmatprep.mubr.bf16.mxu0 0
      %2102 = vmatmul.mubr.bf16.gmra.mxu0 %v1943
      %v2103 = vpop.f32.mrf.mxu0
      %v2104 = vadd.f32 0.0, %v2103
      %v2105 = vpop.f32.mrf.mxu0
      %v2106 = vpop.f32.mrf.mxu0
      %v2107 = vadd.f32 0.0, %v2106
      %v2108 = vpop.f32.mrf.mxu0
      %2109 = vmatprep.mubr.bf16.mxu0 0
      %2110 = vmatmul.mubr.bf16.gmra.mxu0 %v1946
      %v2111 = vpop.f32.mrf.mxu0
      %v2112 = vadd.f32 0.0, %v2111
      %v2113 = vpop.f32.mrf.mxu0
      %v2114 = vpop.f32.mrf.mxu0
      %v2115 = vadd.f32 0.0, %v2114
      %v2116 = vpop.f32.mrf.mxu0
      %2117 = vmatprep.mubr.bf16.mxu0 0
      %2118 = vmatmul.mubr.bf16.gmra.mxu0 %v1949
      %v2119 = vpop.f32.mrf.mxu0
      %v2120 = vadd.f32 0.0, %v2119
      %v2121 = vpop.f32.mrf.mxu0
      %v2122 = vpop.f32.mrf.mxu0
      %v2123 = vadd.f32 0.0, %v2122
      %v2124 = vpop.f32.mrf.mxu0
      %2125 = vmatprep.mubr.bf16.mxu0 0
      %2126 = vmatmul.mubr.bf16.gmra.mxu0 %v1952
      %v2127 = vpop.f32.mrf.mxu0
      %v2128 = vadd.f32 0.0, %v2127
      %v2129 = vpop.f32.mrf.mxu0
      %v2130 = vpop.f32.mrf.mxu0
      %v2131 = vadd.f32 0.0, %v2130
      %v2132 = vpop.f32.mrf.mxu0
      %2133 = vdwg.mxu0
      %v2134 = vadd.f32 %v1702, %v1992
      %v2135 = vadd.f32 %v1705, %v1995
      %v2136 = vadd.f32 %v1710, %v2000
      %v2137 = vadd.f32 %v1713, %v2003
      %v2138 = vadd.f32 %v1718, %v2008
      %v2139 = vadd.f32 %v1721, %v2011
      %v2140 = vadd.f32 %v1726, %v2016
      %v2141 = vadd.f32 %v1729, %v2019
      %v2142 = vadd.f32 %v1734, %v2024
      %v2143 = vadd.f32 %v1737, %v2027
      %v2144 = vadd.f32 %v1742, %v2032
      %v2145 = vadd.f32 %v1745, %v2035
      %v2146 = vadd.f32 %v1750, %v2040
      %v2147 = vadd.f32 %v1753, %v2043
      %v2148 = vadd.f32 %v1758, %v2048
      %v2149 = vadd.f32 %v1761, %v2051
      %v2150 = vadd.f32 %v1766, %v2056
      %v2151 = vadd.f32 %v1769, %v2059
      %v2152 = vadd.f32 %v1774, %v2064
      %v2153 = vadd.f32 %v1777, %v2067
      %v2154 = vadd.f32 %v1782, %v2072
      %v2155 = vadd.f32 %v1785, %v2075
      %v2156 = vadd.f32 %v1790, %v2080
      %v2157 = vadd.f32 %v1793, %v2083
      %v2158 = vadd.f32 %v1798, %v2088
      %v2159 = vadd.f32 %v1801, %v2091
      %v2160 = vadd.f32 %v1806, %v2096
      %v2161 = vadd.f32 %v1809, %v2099
      %v2162 = vadd.f32 %v1814, %v2104
      %v2163 = vadd.f32 %v1817, %v2107
      %v2164 = vadd.f32 %v1822, %v2112
      %v2165 = vadd.f32 %v1825, %v2115
      %v2166 = vadd.f32 %v1830, %v2120
      %v2167 = vadd.f32 %v1833, %v2123
      %v2168 = vadd.f32 %v1838, %v2128
      %v2169 = vadd.f32 %v1841, %v2131
      %v2170 = vld [vmem:[#allocation2 + $0x12] sm:$0xff]
      %v2171 = vld [vmem:[#allocation2 + $0x1a] sm:$0xff]
      %v2172 = vld [vmem:[#allocation2 + $0x22] sm:$0xff]
      %v2173 = vld [vmem:[#allocation2 + $0x2a] sm:$0xff]
      %v2174 = vld [vmem:[#allocation2 + $0x32] sm:$0xff]
      %v2175 = vld [vmem:[#allocation2 + $0x3a] sm:$0xff]
      %v2176 = vld [vmem:[#allocation2 + $0x42] sm:$0xff]
      %v2177 = vld [vmem:[#allocation2 + $0x4a] sm:$0xff]
      %v2178 = vld [vmem:[#allocation2 + $0x52] sm:$0xff]
      %v2179 = vld [vmem:[#allocation2 + $0x5a] sm:$0xff]
      %v2180 = vld [vmem:[#allocation2 + $0x62] sm:$0xff]
      %v2181 = vld [vmem:[#allocation2 + $0x6a] sm:$0xff]
      %v2182 = vld [vmem:[#allocation2 + $0x72] sm:$0xff]
      %v2183 = vld [vmem:[#allocation2 + $0x7a] sm:$0xff]
      %v2184 = vld [vmem:[#allocation2 + $0x82] sm:$0xff]
      %v2185 = vld [vmem:[#allocation2 + $0x8a] sm:$0xff]
      %v2186 = vld [vmem:[#allocation2 + $0x92] sm:$0xff]
      %v2187 = vld [vmem:[#allocation2 + $0x9a] sm:$0xff]
      %v2188 = vld [vmem:[#allocation2 + $0xa2] sm:$0xff]
      %v2189 = vld [vmem:[#allocation2 + $0xaa] sm:$0xff]
      %v2190 = vld [vmem:[#allocation2 + $0xb2] sm:$0xff]
      %v2191 = vld [vmem:[#allocation2 + $0xba] sm:$0xff]
      %v2192 = vld [vmem:[#allocation2 + $0xc2] sm:$0xff]
      %v2193 = vld [vmem:[#allocation2 + $0xca] sm:$0xff]
      %v2194 = vld [vmem:[#allocation2 + $0xd2] sm:$0xff]
      %v2195 = vld [vmem:[#allocation2 + $0xda] sm:$0xff]
      %v2196 = vld [vmem:[#allocation2 + $0xe2] sm:$0xff]
      %v2197 = vld [vmem:[#allocation2 + $0xea] sm:$0xff]
      %v2198 = vld [vmem:[#allocation2 + $0xf2] sm:$0xff]
      %v2199 = vld [vmem:[#allocation2 + $0xfa] sm:$0xff]
      %v2200 = vld [vmem:[#allocation2 + $0x102] sm:$0xff]
      %v2201 = vld [vmem:[#allocation2 + $0x10a] sm:$0xff]
      %v2202 = vld [vmem:[#allocation2 + $0x112] sm:$0xff]
      %v2203 = vld [vmem:[#allocation2 + $0x11a] sm:$0xff]
      %v2204 = vld [vmem:[#allocation2 + $0x122] sm:$0xff]
      %v2205 = vld [vmem:[#allocation2 + $0x12a] sm:$0xff]
      %v2206 = vpack.c.bf16 %v2171, %v2170
      %v2207 = vpack.c.bf16 %v2173, %v2172
      %v2208 = vpack.c.bf16 %v2175, %v2174
      %v2209 = vpack.c.bf16 %v2177, %v2176
      %v2210 = vpack.c.bf16 %v2179, %v2178
      %v2211 = vpack.c.bf16 %v2181, %v2180
      %v2212 = vpack.c.bf16 %v2183, %v2182
      %v2213 = vpack.c.bf16 %v2185, %v2184
      %v2214 = vpack.c.bf16 %v2187, %v2186
      %v2215 = vpack.c.bf16 %v2189, %v2188
      %v2216 = vpack.c.bf16 %v2191, %v2190
      %v2217 = vpack.c.bf16 %v2193, %v2192
      %v2218 = vpack.c.bf16 %v2195, %v2194
      %v2219 = vpack.c.bf16 %v2197, %v2196
      %v2220 = vpack.c.bf16 %v2199, %v2198
      %v2221 = vpack.c.bf16 %v2201, %v2200
      %v2222 = vpack.c.bf16 %v2203, %v2202
      %v2223 = vpack.c.bf16 %v2205, %v2204
      %s2224 = scalar_lea.vmem %s5, 6
      %v2225 = vld [vmem:[%s2224] sm:$0x3]
      %v2227 = vsel %vm532, %v2206, 0
      %v2230 = vsel %vm532, %v2207, 0
      %v2233 = vsel %vm532, %v2208, 0
      %v2236 = vsel %vm532, %v2209, 0
      %v2239 = vsel %vm532, %v2210, 0
      %v2242 = vsel %vm532, %v2211, 0
      %v2245 = vsel %vm532, %v2212, 0
      %v2248 = vsel %vm532, %v2213, 0
      %v2251 = vsel %vm532, %v2214, 0
      %v2254 = vsel %vm532, %v2215, 0
      %v2257 = vsel %vm532, %v2216, 0
      %v2260 = vsel %vm532, %v2217, 0
      %v2263 = vsel %vm532, %v2218, 0
      %v2266 = vsel %vm532, %v2219, 0
      %v2269 = vsel %vm532, %v2220, 0
      %v2272 = vsel %vm532, %v2221, 0
      %v2275 = vsel %vm532, %v2222, 0
      %v2278 = vsel %vm532, %v2223, 0
      %v2281 = vsel %vm596, %v2225, 0
      %2283 = vmatprep.subr.bf16.mxu0 0
      %2284 = vmatpush1.bf16.msra.mxu0 0
      %2285 = vmatprep.subr.bf16.mxu0 0
      %2286 = vmatpush1.bf16.msra.mxu0 0
      %2287 = vmatprep.subr.bf16.mxu0 0
      %2288 = vmatpush1.bf16.msra.mxu0 0
      %2289 = vmatprep.subr.bf16.mxu0 0
      %2290 = vmatpush1.bf16.msra.mxu0 0
      %2291 = vmatprep.subr.bf16.mxu0 0
      %2292 = vmatpush1.bf16.msra.mxu0 0
      %2293 = vmatprep.subr.bf16.mxu0 0
      %2294 = vmatpush1.bf16.msra.mxu0 0
      %2295 = vmatprep.subr.bf16.mxu0 0
      %2296 = vmatpush1.bf16.msra.mxu0 0
      %2297 = vmatprep.subr.bf16.mxu0 0
      %2298 = vmatpush1.bf16.msra.mxu0 %v2281
      %2299 = vmatprep.subr.bf16.mxu0 0
      %2300 = vmatpush2.bf16.msra.mxu0 0
      %2301 = vmatprep.subr.bf16.mxu0 0
      %2302 = vmatpush2.bf16.msra.mxu0 0
      %2303 = vmatprep.subr.bf16.mxu0 0
      %2304 = vmatpush2.bf16.msra.mxu0 0
      %2305 = vmatprep.subr.bf16.mxu0 0
      %2306 = vmatpush2.bf16.msra.mxu0 0
      %2307 = vmatprep.subr.bf16.mxu0 0
      %2308 = vmatpush2.bf16.msra.mxu0 0
      %2309 = vmatprep.subr.bf16.mxu0 0
      %2310 = vmatpush2.bf16.msra.mxu0 0
      %2311 = vmatprep.subr.bf16.mxu0 0
      %2312 = vmatpush2.bf16.msra.mxu0 0
      %2313 = vmatprep.subr.bf16.mxu0 0
      %2314 = vmatpush2.bf16.msra.mxu0 0
      %2315 = vmatprep.mubr.bf16.mxu0 0
      %2316 = vmatmul.mubr.bf16.gmra.mxu0 %v2227
      %v2317 = vpop.f32.mrf.mxu0
      %v2318 = vadd.f32 0.0, %v2317
      %v2319 = vpop.f32.mrf.mxu0
      %v2320 = vpop.f32.mrf.mxu0
      %v2321 = vadd.f32 0.0, %v2320
      %v2322 = vpop.f32.mrf.mxu0
      %2323 = vmatprep.mubr.bf16.mxu0 0
      %2324 = vmatmul.mubr.bf16.gmra.mxu0 %v2230
      %v2325 = vpop.f32.mrf.mxu0
      %v2326 = vadd.f32 0.0, %v2325
      %v2327 = vpop.f32.mrf.mxu0
      %v2328 = vpop.f32.mrf.mxu0
      %v2329 = vadd.f32 0.0, %v2328
      %v2330 = vpop.f32.mrf.mxu0
      %2331 = vmatprep.mubr.bf16.mxu0 0
      %2332 = vmatmul.mubr.bf16.gmra.mxu0 %v2233
      %v2333 = vpop.f32.mrf.mxu0
      %v2334 = vadd.f32 0.0, %v2333
      %v2335 = vpop.f32.mrf.mxu0
      %v2336 = vpop.f32.mrf.mxu0
      %v2337 = vadd.f32 0.0, %v2336
      %v2338 = vpop.f32.mrf.mxu0
      %2339 = vmatprep.mubr.bf16.mxu0 0
      %2340 = vmatmul.mubr.bf16.gmra.mxu0 %v2236
      %v2341 = vpop.f32.mrf.mxu0
      %v2342 = vadd.f32 0.0, %v2341
      %v2343 = vpop.f32.mrf.mxu0
      %v2344 = vpop.f32.mrf.mxu0
      %v2345 = vadd.f32 0.0, %v2344
      %v2346 = vpop.f32.mrf.mxu0
      %2347 = vmatprep.mubr.bf16.mxu0 0
      %2348 = vmatmul.mubr.bf16.gmra.mxu0 %v2239
      %v2349 = vpop.f32.mrf.mxu0
      %v2350 = vadd.f32 0.0, %v2349
      %v2351 = vpop.f32.mrf.mxu0
      %v2352 = vpop.f32.mrf.mxu0
      %v2353 = vadd.f32 0.0, %v2352
      %v2354 = vpop.f32.mrf.mxu0
      %2355 = vmatprep.mubr.bf16.mxu0 0
      %2356 = vmatmul.mubr.bf16.gmra.mxu0 %v2242
      %v2357 = vpop.f32.mrf.mxu0
      %v2358 = vadd.f32 0.0, %v2357
      %v2359 = vpop.f32.mrf.mxu0
      %v2360 = vpop.f32.mrf.mxu0
      %v2361 = vadd.f32 0.0, %v2360
      %v2362 = vpop.f32.mrf.mxu0
      %2363 = vmatprep.mubr.bf16.mxu0 0
      %2364 = vmatmul.mubr.bf16.gmra.mxu0 %v2245
      %v2365 = vpop.f32.mrf.mxu0
      %v2366 = vadd.f32 0.0, %v2365
      %v2367 = vpop.f32.mrf.mxu0
      %v2368 = vpop.f32.mrf.mxu0
      %v2369 = vadd.f32 0.0, %v2368
      %v2370 = vpop.f32.mrf.mxu0
      %2371 = vmatprep.mubr.bf16.mxu0 0
      %2372 = vmatmul.mubr.bf16.gmra.mxu0 %v2248
      %v2373 = vpop.f32.mrf.mxu0
      %v2374 = vadd.f32 0.0, %v2373
      %v2375 = vpop.f32.mrf.mxu0
      %v2376 = vpop.f32.mrf.mxu0
      %v2377 = vadd.f32 0.0, %v2376
      %v2378 = vpop.f32.mrf.mxu0
      %2379 = vmatprep.mubr.bf16.mxu0 0
      %2380 = vmatmul.mubr.bf16.gmra.mxu0 %v2251
      %v2381 = vpop.f32.mrf.mxu0
      %v2382 = vadd.f32 0.0, %v2381
      %v2383 = vpop.f32.mrf.mxu0
      %v2384 = vpop.f32.mrf.mxu0
      %v2385 = vadd.f32 0.0, %v2384
      %v2386 = vpop.f32.mrf.mxu0
      %2387 = vmatprep.mubr.bf16.mxu0 0
      %2388 = vmatmul.mubr.bf16.gmra.mxu0 %v2254
      %v2389 = vpop.f32.mrf.mxu0
      %v2390 = vadd.f32 0.0, %v2389
      %v2391 = vpop.f32.mrf.mxu0
      %v2392 = vpop.f32.mrf.mxu0
      %v2393 = vadd.f32 0.0, %v2392
      %v2394 = vpop.f32.mrf.mxu0
      %2395 = vmatprep.mubr.bf16.mxu0 0
      %2396 = vmatmul.mubr.bf16.gmra.mxu0 %v2257
      %v2397 = vpop.f32.mrf.mxu0
      %v2398 = vadd.f32 0.0, %v2397
      %v2399 = vpop.f32.mrf.mxu0
      %v2400 = vpop.f32.mrf.mxu0
      %v2401 = vadd.f32 0.0, %v2400
      %v2402 = vpop.f32.mrf.mxu0
      %2403 = vmatprep.mubr.bf16.mxu0 0
      %2404 = vmatmul.mubr.bf16.gmra.mxu0 %v2260
      %v2405 = vpop.f32.mrf.mxu0
      %v2406 = vadd.f32 0.0, %v2405
      %v2407 = vpop.f32.mrf.mxu0
      %v2408 = vpop.f32.mrf.mxu0
      %v2409 = vadd.f32 0.0, %v2408
      %v2410 = vpop.f32.mrf.mxu0
      %2411 = vmatprep.mubr.bf16.mxu0 0
      %2412 = vmatmul.mubr.bf16.gmra.mxu0 %v2263
      %v2413 = vpop.f32.mrf.mxu0
      %v2414 = vadd.f32 0.0, %v2413
      %v2415 = vpop.f32.mrf.mxu0
      %v2416 = vpop.f32.mrf.mxu0
      %v2417 = vadd.f32 0.0, %v2416
      %v2418 = vpop.f32.mrf.mxu0
      %2419 = vmatprep.mubr.bf16.mxu0 0
      %2420 = vmatmul.mubr.bf16.gmra.mxu0 %v2266
      %v2421 = vpop.f32.mrf.mxu0
      %v2422 = vadd.f32 0.0, %v2421
      %v2423 = vpop.f32.mrf.mxu0
      %v2424 = vpop.f32.mrf.mxu0
      %v2425 = vadd.f32 0.0, %v2424
      %v2426 = vpop.f32.mrf.mxu0
      %2427 = vmatprep.mubr.bf16.mxu0 0
      %2428 = vmatmul.mubr.bf16.gmra.mxu0 %v2269
      %v2429 = vpop.f32.mrf.mxu0
      %v2430 = vadd.f32 0.0, %v2429
      %v2431 = vpop.f32.mrf.mxu0
      %v2432 = vpop.f32.mrf.mxu0
      %v2433 = vadd.f32 0.0, %v2432
      %v2434 = vpop.f32.mrf.mxu0
      %2435 = vmatprep.mubr.bf16.mxu0 0
      %2436 = vmatmul.mubr.bf16.gmra.mxu0 %v2272
      %v2437 = vpop.f32.mrf.mxu0
      %v2438 = vadd.f32 0.0, %v2437
      %v2439 = vpop.f32.mrf.mxu0
      %v2440 = vpop.f32.mrf.mxu0
      %v2441 = vadd.f32 0.0, %v2440
      %v2442 = vpop.f32.mrf.mxu0
      %2443 = vmatprep.mubr.bf16.mxu0 0
      %2444 = vmatmul.mubr.bf16.gmra.mxu0 %v2275
      %v2445 = vpop.f32.mrf.mxu0
      %v2446 = vadd.f32 0.0, %v2445
      %v2447 = vpop.f32.mrf.mxu0
      %v2448 = vpop.f32.mrf.mxu0
      %v2449 = vadd.f32 0.0, %v2448
      %v2450 = vpop.f32.mrf.mxu0
      %2451 = vmatprep.mubr.bf16.mxu0 0
      %2452 = vmatmul.mubr.bf16.gmra.mxu0 %v2278
      %v2453 = vpop.f32.mrf.mxu0
      %v2454 = vadd.f32 0.0, %v2453
      %v2455 = vpop.f32.mrf.mxu0
      %v2456 = vpop.f32.mrf.mxu0
      %v2457 = vadd.f32 0.0, %v2456
      %v2458 = vpop.f32.mrf.mxu0
      %2459 = vdwg.mxu0
      %v2460 = vadd.f32 %v2134, %v2318
      %v2461 = vadd.f32 %v2135, %v2321
      %v2462 = vadd.f32 %v2136, %v2326
      %v2463 = vadd.f32 %v2137, %v2329
      %v2464 = vadd.f32 %v2138, %v2334
      %v2465 = vadd.f32 %v2139, %v2337
      %v2466 = vadd.f32 %v2140, %v2342
      %v2467 = vadd.f32 %v2141, %v2345
      %v2468 = vadd.f32 %v2142, %v2350
      %v2469 = vadd.f32 %v2143, %v2353
      %v2470 = vadd.f32 %v2144, %v2358
      %v2471 = vadd.f32 %v2145, %v2361
      %v2472 = vadd.f32 %v2146, %v2366
      %v2473 = vadd.f32 %v2147, %v2369
      %v2474 = vadd.f32 %v2148, %v2374
      %v2475 = vadd.f32 %v2149, %v2377
      %v2476 = vadd.f32 %v2150, %v2382
      %v2477 = vadd.f32 %v2151, %v2385
      %v2478 = vadd.f32 %v2152, %v2390
      %v2479 = vadd.f32 %v2153, %v2393
      %v2480 = vadd.f32 %v2154, %v2398
      %v2481 = vadd.f32 %v2155, %v2401
      %v2482 = vadd.f32 %v2156, %v2406
      %v2483 = vadd.f32 %v2157, %v2409
      %v2484 = vadd.f32 %v2158, %v2414
      %v2485 = vadd.f32 %v2159, %v2417
      %v2486 = vadd.f32 %v2160, %v2422
      %v2487 = vadd.f32 %v2161, %v2425
      %v2488 = vadd.f32 %v2162, %v2430
      %v2489 = vadd.f32 %v2163, %v2433
      %v2490 = vadd.f32 %v2164, %v2438
      %v2491 = vadd.f32 %v2165, %v2441
      %v2492 = vadd.f32 %v2166, %v2446
      %v2493 = vadd.f32 %v2167, %v2449
      %v2494 = vadd.f32 %v2168, %v2454
      %v2495 = vadd.f32 %v2169, %v2457
      %v2496 = vld [vmem:[#allocation2 + $0x13] sm:$0xff]
      %v2497 = vld [vmem:[#allocation2 + $0x1b] sm:$0xff]
      %v2498 = vld [vmem:[#allocation2 + $0x23] sm:$0xff]
      %v2499 = vld [vmem:[#allocation2 + $0x2b] sm:$0xff]
      %v2500 = vld [vmem:[#allocation2 + $0x33] sm:$0xff]
      %v2501 = vld [vmem:[#allocation2 + $0x3b] sm:$0xff]
      %v2502 = vld [vmem:[#allocation2 + $0x43] sm:$0xff]
      %v2503 = vld [vmem:[#allocation2 + $0x4b] sm:$0xff]
      %v2504 = vld [vmem:[#allocation2 + $0x53] sm:$0xff]
      %v2505 = vld [vmem:[#allocation2 + $0x5b] sm:$0xff]
      %v2506 = vld [vmem:[#allocation2 + $0x63] sm:$0xff]
      %v2507 = vld [vmem:[#allocation2 + $0x6b] sm:$0xff]
      %v2508 = vld [vmem:[#allocation2 + $0x73] sm:$0xff]
      %v2509 = vld [vmem:[#allocation2 + $0x7b] sm:$0xff]
      %v2510 = vld [vmem:[#allocation2 + $0x83] sm:$0xff]
      %v2511 = vld [vmem:[#allocation2 + $0x8b] sm:$0xff]
      %v2512 = vld [vmem:[#allocation2 + $0x93] sm:$0xff]
      %v2513 = vld [vmem:[#allocation2 + $0x9b] sm:$0xff]
      %v2514 = vld [vmem:[#allocation2 + $0xa3] sm:$0xff]
      %v2515 = vld [vmem:[#allocation2 + $0xab] sm:$0xff]
      %v2516 = vld [vmem:[#allocation2 + $0xb3] sm:$0xff]
      %v2517 = vld [vmem:[#allocation2 + $0xbb] sm:$0xff]
      %v2518 = vld [vmem:[#allocation2 + $0xc3] sm:$0xff]
      %v2519 = vld [vmem:[#allocation2 + $0xcb] sm:$0xff]
      %v2520 = vld [vmem:[#allocation2 + $0xd3] sm:$0xff]
      %v2521 = vld [vmem:[#allocation2 + $0xdb] sm:$0xff]
      %v2522 = vld [vmem:[#allocation2 + $0xe3] sm:$0xff]
      %v2523 = vld [vmem:[#allocation2 + $0xeb] sm:$0xff]
      %v2524 = vld [vmem:[#allocation2 + $0xf3] sm:$0xff]
      %v2525 = vld [vmem:[#allocation2 + $0xfb] sm:$0xff]
      %v2526 = vld [vmem:[#allocation2 + $0x103] sm:$0xff]
      %v2527 = vld [vmem:[#allocation2 + $0x10b] sm:$0xff]
      %v2528 = vld [vmem:[#allocation2 + $0x113] sm:$0xff]
      %v2529 = vld [vmem:[#allocation2 + $0x11b] sm:$0xff]
      %v2530 = vld [vmem:[#allocation2 + $0x123] sm:$0xff]
      %v2531 = vld [vmem:[#allocation2 + $0x12b] sm:$0xff]
      %v2532 = vpack.c.bf16 %v2497, %v2496
      %v2533 = vpack.c.bf16 %v2499, %v2498
      %v2534 = vpack.c.bf16 %v2501, %v2500
      %v2535 = vpack.c.bf16 %v2503, %v2502
      %v2536 = vpack.c.bf16 %v2505, %v2504
      %v2537 = vpack.c.bf16 %v2507, %v2506
      %v2538 = vpack.c.bf16 %v2509, %v2508
      %v2539 = vpack.c.bf16 %v2511, %v2510
      %v2540 = vpack.c.bf16 %v2513, %v2512
      %v2541 = vpack.c.bf16 %v2515, %v2514
      %v2542 = vpack.c.bf16 %v2517, %v2516
      %v2543 = vpack.c.bf16 %v2519, %v2518
      %v2544 = vpack.c.bf16 %v2521, %v2520
      %v2545 = vpack.c.bf16 %v2523, %v2522
      %v2546 = vpack.c.bf16 %v2525, %v2524
      %v2547 = vpack.c.bf16 %v2527, %v2526
      %v2548 = vpack.c.bf16 %v2529, %v2528
      %v2549 = vpack.c.bf16 %v2531, %v2530
      %s2550 = scalar_lea.vmem %s5, 8
      %v2551 = vld [vmem:[%s2550] sm:$0x3]
      %v2553 = vsel %vm532, %v2532, 0
      %v2556 = vsel %vm532, %v2533, 0
      %v2559 = vsel %vm532, %v2534, 0
      %v2562 = vsel %vm532, %v2535, 0
      %v2565 = vsel %vm532, %v2536, 0
      %v2568 = vsel %vm532, %v2537, 0
      %v2571 = vsel %vm532, %v2538, 0
      %v2574 = vsel %vm532, %v2539, 0
      %v2577 = vsel %vm532, %v2540, 0
      %v2580 = vsel %vm532, %v2541, 0
      %v2583 = vsel %vm532, %v2542, 0
      %v2586 = vsel %vm532, %v2543, 0
      %v2589 = vsel %vm532, %v2544, 0
      %v2592 = vsel %vm532, %v2545, 0
      %v2595 = vsel %vm532, %v2546, 0
      %v2598 = vsel %vm532, %v2547, 0
      %v2601 = vsel %vm532, %v2548, 0
      %v2604 = vsel %vm532, %v2549, 0
      %v2607 = vsel %vm596, %v2551, 0
      %2609 = vmatprep.subr.bf16.mxu0 0
      %2610 = vmatpush1.bf16.msra.mxu0 0
      %2611 = vmatprep.subr.bf16.mxu0 0
      %2612 = vmatpush1.bf16.msra.mxu0 0
      %2613 = vmatprep.subr.bf16.mxu0 0
      %2614 = vmatpush1.bf16.msra.mxu0 0
      %2615 = vmatprep.subr.bf16.mxu0 0
      %2616 = vmatpush1.bf16.msra.mxu0 0
      %2617 = vmatprep.subr.bf16.mxu0 0
      %2618 = vmatpush1.bf16.msra.mxu0 0
      %2619 = vmatprep.subr.bf16.mxu0 0
      %2620 = vmatpush1.bf16.msra.mxu0 0
      %2621 = vmatprep.subr.bf16.mxu0 0
      %2622 = vmatpush1.bf16.msra.mxu0 0
      %2623 = vmatprep.subr.bf16.mxu0 0
      %2624 = vmatpush1.bf16.msra.mxu0 %v2607
      %2625 = vmatprep.subr.bf16.mxu0 0
      %2626 = vmatpush2.bf16.msra.mxu0 0
      %2627 = vmatprep.subr.bf16.mxu0 0
      %2628 = vmatpush2.bf16.msra.mxu0 0
      %2629 = vmatprep.subr.bf16.mxu0 0
      %2630 = vmatpush2.bf16.msra.mxu0 0
      %2631 = vmatprep.subr.bf16.mxu0 0
      %2632 = vmatpush2.bf16.msra.mxu0 0
      %2633 = vmatprep.subr.bf16.mxu0 0
      %2634 = vmatpush2.bf16.msra.mxu0 0
      %2635 = vmatprep.subr.bf16.mxu0 0
      %2636 = vmatpush2.bf16.msra.mxu0 0
      %2637 = vmatprep.subr.bf16.mxu0 0
      %2638 = vmatpush2.bf16.msra.mxu0 0
      %2639 = vmatprep.subr.bf16.mxu0 0
      %2640 = vmatpush2.bf16.msra.mxu0 0
      %2641 = vmatprep.mubr.bf16.mxu0 0
      %2642 = vmatmul.mubr.bf16.gmra.mxu0 %v2553
      %v2643 = vpop.f32.mrf.mxu0
      %v2644 = vadd.f32 0.0, %v2643
      %v2645 = vpop.f32.mrf.mxu0
      %v2646 = vpop.f32.mrf.mxu0
      %v2647 = vadd.f32 0.0, %v2646
      %v2648 = vpop.f32.mrf.mxu0
      %2649 = vmatprep.mubr.bf16.mxu0 0
      %2650 = vmatmul.mubr.bf16.gmra.mxu0 %v2556
      %v2651 = vpop.f32.mrf.mxu0
      %v2652 = vadd.f32 0.0, %v2651
      %v2653 = vpop.f32.mrf.mxu0
      %v2654 = vpop.f32.mrf.mxu0
      %v2655 = vadd.f32 0.0, %v2654
      %v2656 = vpop.f32.mrf.mxu0
      %2657 = vmatprep.mubr.bf16.mxu0 0
      %2658 = vmatmul.mubr.bf16.gmra.mxu0 %v2559
      %v2659 = vpop.f32.mrf.mxu0
      %v2660 = vadd.f32 0.0, %v2659
      %v2661 = vpop.f32.mrf.mxu0
      %v2662 = vpop.f32.mrf.mxu0
      %v2663 = vadd.f32 0.0, %v2662
      %v2664 = vpop.f32.mrf.mxu0
      %2665 = vmatprep.mubr.bf16.mxu0 0
      %2666 = vmatmul.mubr.bf16.gmra.mxu0 %v2562
      %v2667 = vpop.f32.mrf.mxu0
      %v2668 = vadd.f32 0.0, %v2667
      %v2669 = vpop.f32.mrf.mxu0
      %v2670 = vpop.f32.mrf.mxu0
      %v2671 = vadd.f32 0.0, %v2670
      %v2672 = vpop.f32.mrf.mxu0
      %2673 = vmatprep.mubr.bf16.mxu0 0
      %2674 = vmatmul.mubr.bf16.gmra.mxu0 %v2565
      %v2675 = vpop.f32.mrf.mxu0
      %v2676 = vadd.f32 0.0, %v2675
      %v2677 = vpop.f32.mrf.mxu0
      %v2678 = vpop.f32.mrf.mxu0
      %v2679 = vadd.f32 0.0, %v2678
      %v2680 = vpop.f32.mrf.mxu0
      %2681 = vmatprep.mubr.bf16.mxu0 0
      %2682 = vmatmul.mubr.bf16.gmra.mxu0 %v2568
      %v2683 = vpop.f32.mrf.mxu0
      %v2684 = vadd.f32 0.0, %v2683
      %v2685 = vpop.f32.mrf.mxu0
      %v2686 = vpop.f32.mrf.mxu0
      %v2687 = vadd.f32 0.0, %v2686
      %v2688 = vpop.f32.mrf.mxu0
      %2689 = vmatprep.mubr.bf16.mxu0 0
      %2690 = vmatmul.mubr.bf16.gmra.mxu0 %v2571
      %v2691 = vpop.f32.mrf.mxu0
      %v2692 = vadd.f32 0.0, %v2691
      %v2693 = vpop.f32.mrf.mxu0
      %v2694 = vpop.f32.mrf.mxu0
      %v2695 = vadd.f32 0.0, %v2694
      %v2696 = vpop.f32.mrf.mxu0
      %2697 = vmatprep.mubr.bf16.mxu0 0
      %2698 = vmatmul.mubr.bf16.gmra.mxu0 %v2574
      %v2699 = vpop.f32.mrf.mxu0
      %v2700 = vadd.f32 0.0, %v2699
      %v2701 = vpop.f32.mrf.mxu0
      %v2702 = vpop.f32.mrf.mxu0
      %v2703 = vadd.f32 0.0, %v2702
      %v2704 = vpop.f32.mrf.mxu0
      %2705 = vmatprep.mubr.bf16.mxu0 0
      %2706 = vmatmul.mubr.bf16.gmra.mxu0 %v2577
      %v2707 = vpop.f32.mrf.mxu0
      %v2708 = vadd.f32 0.0, %v2707
      %v2709 = vpop.f32.mrf.mxu0
      %v2710 = vpop.f32.mrf.mxu0
      %v2711 = vadd.f32 0.0, %v2710
      %v2712 = vpop.f32.mrf.mxu0
      %2713 = vmatprep.mubr.bf16.mxu0 0
      %2714 = vmatmul.mubr.bf16.gmra.mxu0 %v2580
      %v2715 = vpop.f32.mrf.mxu0
      %v2716 = vadd.f32 0.0, %v2715
      %v2717 = vpop.f32.mrf.mxu0
      %v2718 = vpop.f32.mrf.mxu0
      %v2719 = vadd.f32 0.0, %v2718
      %v2720 = vpop.f32.mrf.mxu0
      %2721 = vmatprep.mubr.bf16.mxu0 0
      %2722 = vmatmul.mubr.bf16.gmra.mxu0 %v2583
      %v2723 = vpop.f32.mrf.mxu0
      %v2724 = vadd.f32 0.0, %v2723
      %v2725 = vpop.f32.mrf.mxu0
      %v2726 = vpop.f32.mrf.mxu0
      %v2727 = vadd.f32 0.0, %v2726
      %v2728 = vpop.f32.mrf.mxu0
      %2729 = vmatprep.mubr.bf16.mxu0 0
      %2730 = vmatmul.mubr.bf16.gmra.mxu0 %v2586
      %v2731 = vpop.f32.mrf.mxu0
      %v2732 = vadd.f32 0.0, %v2731
      %v2733 = vpop.f32.mrf.mxu0
      %v2734 = vpop.f32.mrf.mxu0
      %v2735 = vadd.f32 0.0, %v2734
      %v2736 = vpop.f32.mrf.mxu0
      %2737 = vmatprep.mubr.bf16.mxu0 0
      %2738 = vmatmul.mubr.bf16.gmra.mxu0 %v2589
      %v2739 = vpop.f32.mrf.mxu0
      %v2740 = vadd.f32 0.0, %v2739
      %v2741 = vpop.f32.mrf.mxu0
      %v2742 = vpop.f32.mrf.mxu0
      %v2743 = vadd.f32 0.0, %v2742
      %v2744 = vpop.f32.mrf.mxu0
      %2745 = vmatprep.mubr.bf16.mxu0 0
      %2746 = vmatmul.mubr.bf16.gmra.mxu0 %v2592
      %v2747 = vpop.f32.mrf.mxu0
      %v2748 = vadd.f32 0.0, %v2747
      %v2749 = vpop.f32.mrf.mxu0
      %v2750 = vpop.f32.mrf.mxu0
      %v2751 = vadd.f32 0.0, %v2750
      %v2752 = vpop.f32.mrf.mxu0
      %2753 = vmatprep.mubr.bf16.mxu0 0
      %2754 = vmatmul.mubr.bf16.gmra.mxu0 %v2595
      %v2755 = vpop.f32.mrf.mxu0
      %v2756 = vadd.f32 0.0, %v2755
      %v2757 = vpop.f32.mrf.mxu0
      %v2758 = vpop.f32.mrf.mxu0
      %v2759 = vadd.f32 0.0, %v2758
      %v2760 = vpop.f32.mrf.mxu0
      %2761 = vmatprep.mubr.bf16.mxu0 0
      %2762 = vmatmul.mubr.bf16.gmra.mxu0 %v2598
      %v2763 = vpop.f32.mrf.mxu0
      %v2764 = vadd.f32 0.0, %v2763
      %v2765 = vpop.f32.mrf.mxu0
      %v2766 = vpop.f32.mrf.mxu0
      %v2767 = vadd.f32 0.0, %v2766
      %v2768 = vpop.f32.mrf.mxu0
      %2769 = vmatprep.mubr.bf16.mxu0 0
      %2770 = vmatmul.mubr.bf16.gmra.mxu0 %v2601
      %v2771 = vpop.f32.mrf.mxu0
      %v2772 = vadd.f32 0.0, %v2771
      %v2773 = vpop.f32.mrf.mxu0
      %v2774 = vpop.f32.mrf.mxu0
      %v2775 = vadd.f32 0.0, %v2774
      %v2776 = vpop.f32.mrf.mxu0
      %2777 = vmatprep.mubr.bf16.mxu0 0
      %2778 = vmatmul.mubr.bf16.gmra.mxu0 %v2604
      %v2779 = vpop.f32.mrf.mxu0
      %v2780 = vadd.f32 0.0, %v2779
      %v2781 = vpop.f32.mrf.mxu0
      %v2782 = vpop.f32.mrf.mxu0
      %v2783 = vadd.f32 0.0, %v2782
      %v2784 = vpop.f32.mrf.mxu0
      %2785 = vdwg.mxu0
      %v2786 = vadd.f32 %v2460, %v2644
      %v2787 = vadd.f32 %v2461, %v2647
      %v2788 = vadd.f32 %v2462, %v2652
      %v2789 = vadd.f32 %v2463, %v2655
      %v2790 = vadd.f32 %v2464, %v2660
      %v2791 = vadd.f32 %v2465, %v2663
      %v2792 = vadd.f32 %v2466, %v2668
      %v2793 = vadd.f32 %v2467, %v2671
      %v2794 = vadd.f32 %v2468, %v2676
      %v2795 = vadd.f32 %v2469, %v2679
      %v2796 = vadd.f32 %v2470, %v2684
      %v2797 = vadd.f32 %v2471, %v2687
      %v2798 = vadd.f32 %v2472, %v2692
      %v2799 = vadd.f32 %v2473, %v2695
      %v2800 = vadd.f32 %v2474, %v2700
      %v2801 = vadd.f32 %v2475, %v2703
      %v2802 = vadd.f32 %v2476, %v2708
      %v2803 = vadd.f32 %v2477, %v2711
      %v2804 = vadd.f32 %v2478, %v2716
      %v2805 = vadd.f32 %v2479, %v2719
      %v2806 = vadd.f32 %v2480, %v2724
      %v2807 = vadd.f32 %v2481, %v2727
      %v2808 = vadd.f32 %v2482, %v2732
      %v2809 = vadd.f32 %v2483, %v2735
      %v2810 = vadd.f32 %v2484, %v2740
      %v2811 = vadd.f32 %v2485, %v2743
      %v2812 = vadd.f32 %v2486, %v2748
      %v2813 = vadd.f32 %v2487, %v2751
      %v2814 = vadd.f32 %v2488, %v2756
      %v2815 = vadd.f32 %v2489, %v2759
      %v2816 = vadd.f32 %v2490, %v2764
      %v2817 = vadd.f32 %v2491, %v2767
      %v2818 = vadd.f32 %v2492, %v2772
      %v2819 = vadd.f32 %v2493, %v2775
      %v2820 = vadd.f32 %v2494, %v2780
      %v2821 = vadd.f32 %v2495, %v2783
      %v2822 = vld [vmem:[#allocation2 + $0x14] sm:$0xff]
      %v2823 = vld [vmem:[#allocation2 + $0x1c] sm:$0xff]
      %v2824 = vld [vmem:[#allocation2 + $0x24] sm:$0xff]
      %v2825 = vld [vmem:[#allocation2 + $0x2c] sm:$0xff]
      %v2826 = vld [vmem:[#allocation2 + $0x34] sm:$0xff]
      %v2827 = vld [vmem:[#allocation2 + $0x3c] sm:$0xff]
      %v2828 = vld [vmem:[#allocation2 + $0x44] sm:$0xff]
      %v2829 = vld [vmem:[#allocation2 + $0x4c] sm:$0xff]
      %v2830 = vld [vmem:[#allocation2 + $0x54] sm:$0xff]
      %v2831 = vld [vmem:[#allocation2 + $0x5c] sm:$0xff]
      %v2832 = vld [vmem:[#allocation2 + $0x64] sm:$0xff]
      %v2833 = vld [vmem:[#allocation2 + $0x6c] sm:$0xff]
      %v2834 = vld [vmem:[#allocation2 + $0x74] sm:$0xff]
      %v2835 = vld [vmem:[#allocation2 + $0x7c] sm:$0xff]
      %v2836 = vld [vmem:[#allocation2 + $0x84] sm:$0xff]
      %v2837 = vld [vmem:[#allocation2 + $0x8c] sm:$0xff]
      %v2838 = vld [vmem:[#allocation2 + $0x94] sm:$0xff]
      %v2839 = vld [vmem:[#allocation2 + $0x9c] sm:$0xff]
      %v2840 = vld [vmem:[#allocation2 + $0xa4] sm:$0xff]
      %v2841 = vld [vmem:[#allocation2 + $0xac] sm:$0xff]
      %v2842 = vld [vmem:[#allocation2 + $0xb4] sm:$0xff]
      %v2843 = vld [vmem:[#allocation2 + $0xbc] sm:$0xff]
      %v2844 = vld [vmem:[#allocation2 + $0xc4] sm:$0xff]
      %v2845 = vld [vmem:[#allocation2 + $0xcc] sm:$0xff]
      %v2846 = vld [vmem:[#allocation2 + $0xd4] sm:$0xff]
      %v2847 = vld [vmem:[#allocation2 + $0xdc] sm:$0xff]
      %v2848 = vld [vmem:[#allocation2 + $0xe4] sm:$0xff]
      %v2849 = vld [vmem:[#allocation2 + $0xec] sm:$0xff]
      %v2850 = vld [vmem:[#allocation2 + $0xf4] sm:$0xff]
      %v2851 = vld [vmem:[#allocation2 + $0xfc] sm:$0xff]
      %v2852 = vld [vmem:[#allocation2 + $0x104] sm:$0xff]
      %v2853 = vld [vmem:[#allocation2 + $0x10c] sm:$0xff]
      %v2854 = vld [vmem:[#allocation2 + $0x114] sm:$0xff]
      %v2855 = vld [vmem:[#allocation2 + $0x11c] sm:$0xff]
      %v2856 = vld [vmem:[#allocation2 + $0x124] sm:$0xff]
      %v2857 = vld [vmem:[#allocation2 + $0x12c] sm:$0xff]
      %v2858 = vpack.c.bf16 %v2823, %v2822
      %v2859 = vpack.c.bf16 %v2825, %v2824
      %v2860 = vpack.c.bf16 %v2827, %v2826
      %v2861 = vpack.c.bf16 %v2829, %v2828
      %v2862 = vpack.c.bf16 %v2831, %v2830
      %v2863 = vpack.c.bf16 %v2833, %v2832
      %v2864 = vpack.c.bf16 %v2835, %v2834
      %v2865 = vpack.c.bf16 %v2837, %v2836
      %v2866 = vpack.c.bf16 %v2839, %v2838
      %v2867 = vpack.c.bf16 %v2841, %v2840
      %v2868 = vpack.c.bf16 %v2843, %v2842
      %v2869 = vpack.c.bf16 %v2845, %v2844
      %v2870 = vpack.c.bf16 %v2847, %v2846
      %v2871 = vpack.c.bf16 %v2849, %v2848
      %v2872 = vpack.c.bf16 %v2851, %v2850
      %v2873 = vpack.c.bf16 %v2853, %v2852
      %v2874 = vpack.c.bf16 %v2855, %v2854
      %v2875 = vpack.c.bf16 %v2857, %v2856
      %s2876 = scalar_lea.vmem %s5, 10
      %v2877 = vld [vmem:[%s2876] sm:$0x3]
      %v2879 = vsel %vm532, %v2858, 0
      %v2882 = vsel %vm532, %v2859, 0
      %v2885 = vsel %vm532, %v2860, 0
      %v2888 = vsel %vm532, %v2861, 0
      %v2891 = vsel %vm532, %v2862, 0
      %v2894 = vsel %vm532, %v2863, 0
      %v2897 = vsel %vm532, %v2864, 0
      %v2900 = vsel %vm532, %v2865, 0
      %v2903 = vsel %vm532, %v2866, 0
      %v2906 = vsel %vm532, %v2867, 0
      %v2909 = vsel %vm532, %v2868, 0
      %v2912 = vsel %vm532, %v2869, 0
      %v2915 = vsel %vm532, %v2870, 0
      %v2918 = vsel %vm532, %v2871, 0
      %v2921 = vsel %vm532, %v2872, 0
      %v2924 = vsel %vm532, %v2873, 0
      %v2927 = vsel %vm532, %v2874, 0
      %v2930 = vsel %vm532, %v2875, 0
      %v2933 = vsel %vm596, %v2877, 0
      %2935 = vmatprep.subr.bf16.mxu0 0
      %2936 = vmatpush1.bf16.msra.mxu0 0
      %2937 = vmatprep.subr.bf16.mxu0 0
      %2938 = vmatpush1.bf16.msra.mxu0 0
      %2939 = vmatprep.subr.bf16.mxu0 0
      %2940 = vmatpush1.bf16.msra.mxu0 0
      %2941 = vmatprep.subr.bf16.mxu0 0
      %2942 = vmatpush1.bf16.msra.mxu0 0
      %2943 = vmatprep.subr.bf16.mxu0 0
      %2944 = vmatpush1.bf16.msra.mxu0 0
      %2945 = vmatprep.subr.bf16.mxu0 0
      %2946 = vmatpush1.bf16.msra.mxu0 0
      %2947 = vmatprep.subr.bf16.mxu0 0
      %2948 = vmatpush1.bf16.msra.mxu0 0
      %2949 = vmatprep.subr.bf16.mxu0 0
      %2950 = vmatpush1.bf16.msra.mxu0 %v2933
      %2951 = vmatprep.subr.bf16.mxu0 0
      %2952 = vmatpush2.bf16.msra.mxu0 0
      %2953 = vmatprep.subr.bf16.mxu0 0
      %2954 = vmatpush2.bf16.msra.mxu0 0
      %2955 = vmatprep.subr.bf16.mxu0 0
      %2956 = vmatpush2.bf16.msra.mxu0 0
      %2957 = vmatprep.subr.bf16.mxu0 0
      %2958 = vmatpush2.bf16.msra.mxu0 0
      %2959 = vmatprep.subr.bf16.mxu0 0
      %2960 = vmatpush2.bf16.msra.mxu0 0
      %2961 = vmatprep.subr.bf16.mxu0 0
      %2962 = vmatpush2.bf16.msra.mxu0 0
      %2963 = vmatprep.subr.bf16.mxu0 0
      %2964 = vmatpush2.bf16.msra.mxu0 0
      %2965 = vmatprep.subr.bf16.mxu0 0
      %2966 = vmatpush2.bf16.msra.mxu0 0
      %2967 = vmatprep.mubr.bf16.mxu0 0
      %2968 = vmatmul.mubr.bf16.gmra.mxu0 %v2879
      %v2969 = vpop.f32.mrf.mxu0
      %v2970 = vadd.f32 0.0, %v2969
      %v2971 = vpop.f32.mrf.mxu0
      %v2972 = vpop.f32.mrf.mxu0
      %v2973 = vadd.f32 0.0, %v2972
      %v2974 = vpop.f32.mrf.mxu0
      %2975 = vmatprep.mubr.bf16.mxu0 0
      %2976 = vmatmul.mubr.bf16.gmra.mxu0 %v2882
      %v2977 = vpop.f32.mrf.mxu0
      %v2978 = vadd.f32 0.0, %v2977
      %v2979 = vpop.f32.mrf.mxu0
      %v2980 = vpop.f32.mrf.mxu0
      %v2981 = vadd.f32 0.0, %v2980
      %v2982 = vpop.f32.mrf.mxu0
      %2983 = vmatprep.mubr.bf16.mxu0 0
      %2984 = vmatmul.mubr.bf16.gmra.mxu0 %v2885
      %v2985 = vpop.f32.mrf.mxu0
      %v2986 = vadd.f32 0.0, %v2985
      %v2987 = vpop.f32.mrf.mxu0
      %v2988 = vpop.f32.mrf.mxu0
      %v2989 = vadd.f32 0.0, %v2988
      %v2990 = vpop.f32.mrf.mxu0
      %2991 = vmatprep.mubr.bf16.mxu0 0
      %2992 = vmatmul.mubr.bf16.gmra.mxu0 %v2888
      %v2993 = vpop.f32.mrf.mxu0
      %v2994 = vadd.f32 0.0, %v2993
      %v2995 = vpop.f32.mrf.mxu0
      %v2996 = vpop.f32.mrf.mxu0
      %v2997 = vadd.f32 0.0, %v2996
      %v2998 = vpop.f32.mrf.mxu0
      %2999 = vmatprep.mubr.bf16.mxu0 0
      %3000 = vmatmul.mubr.bf16.gmra.mxu0 %v2891
      %v3001 = vpop.f32.mrf.mxu0
      %v3002 = vadd.f32 0.0, %v3001
      %v3003 = vpop.f32.mrf.mxu0
      %v3004 = vpop.f32.mrf.mxu0
      %v3005 = vadd.f32 0.0, %v3004
      %v3006 = vpop.f32.mrf.mxu0
      %3007 = vmatprep.mubr.bf16.mxu0 0
      %3008 = vmatmul.mubr.bf16.gmra.mxu0 %v2894
      %v3009 = vpop.f32.mrf.mxu0
      %v3010 = vadd.f32 0.0, %v3009
      %v3011 = vpop.f32.mrf.mxu0
      %v3012 = vpop.f32.mrf.mxu0
      %v3013 = vadd.f32 0.0, %v3012
      %v3014 = vpop.f32.mrf.mxu0
      %3015 = vmatprep.mubr.bf16.mxu0 0
      %3016 = vmatmul.mubr.bf16.gmra.mxu0 %v2897
      %v3017 = vpop.f32.mrf.mxu0
      %v3018 = vadd.f32 0.0, %v3017
      %v3019 = vpop.f32.mrf.mxu0
      %v3020 = vpop.f32.mrf.mxu0
      %v3021 = vadd.f32 0.0, %v3020
      %v3022 = vpop.f32.mrf.mxu0
      %3023 = vmatprep.mubr.bf16.mxu0 0
      %3024 = vmatmul.mubr.bf16.gmra.mxu0 %v2900
      %v3025 = vpop.f32.mrf.mxu0
      %v3026 = vadd.f32 0.0, %v3025
      %v3027 = vpop.f32.mrf.mxu0
      %v3028 = vpop.f32.mrf.mxu0
      %v3029 = vadd.f32 0.0, %v3028
      %v3030 = vpop.f32.mrf.mxu0
      %3031 = vmatprep.mubr.bf16.mxu0 0
      %3032 = vmatmul.mubr.bf16.gmra.mxu0 %v2903
      %v3033 = vpop.f32.mrf.mxu0
      %v3034 = vadd.f32 0.0, %v3033
      %v3035 = vpop.f32.mrf.mxu0
      %v3036 = vpop.f32.mrf.mxu0
      %v3037 = vadd.f32 0.0, %v3036
      %v3038 = vpop.f32.mrf.mxu0
      %3039 = vmatprep.mubr.bf16.mxu0 0
      %3040 = vmatmul.mubr.bf16.gmra.mxu0 %v2906
      %v3041 = vpop.f32.mrf.mxu0
      %v3042 = vadd.f32 0.0, %v3041
      %v3043 = vpop.f32.mrf.mxu0
      %v3044 = vpop.f32.mrf.mxu0
      %v3045 = vadd.f32 0.0, %v3044
      %v3046 = vpop.f32.mrf.mxu0
      %3047 = vmatprep.mubr.bf16.mxu0 0
      %3048 = vmatmul.mubr.bf16.gmra.mxu0 %v2909
      %v3049 = vpop.f32.mrf.mxu0
      %v3050 = vadd.f32 0.0, %v3049
      %v3051 = vpop.f32.mrf.mxu0
      %v3052 = vpop.f32.mrf.mxu0
      %v3053 = vadd.f32 0.0, %v3052
      %v3054 = vpop.f32.mrf.mxu0
      %3055 = vmatprep.mubr.bf16.mxu0 0
      %3056 = vmatmul.mubr.bf16.gmra.mxu0 %v2912
      %v3057 = vpop.f32.mrf.mxu0
      %v3058 = vadd.f32 0.0, %v3057
      %v3059 = vpop.f32.mrf.mxu0
      %v3060 = vpop.f32.mrf.mxu0
      %v3061 = vadd.f32 0.0, %v3060
      %v3062 = vpop.f32.mrf.mxu0
      %3063 = vmatprep.mubr.bf16.mxu0 0
      %3064 = vmatmul.mubr.bf16.gmra.mxu0 %v2915
      %v3065 = vpop.f32.mrf.mxu0
      %v3066 = vadd.f32 0.0, %v3065
      %v3067 = vpop.f32.mrf.mxu0
      %v3068 = vpop.f32.mrf.mxu0
      %v3069 = vadd.f32 0.0, %v3068
      %v3070 = vpop.f32.mrf.mxu0
      %3071 = vmatprep.mubr.bf16.mxu0 0
      %3072 = vmatmul.mubr.bf16.gmra.mxu0 %v2918
      %v3073 = vpop.f32.mrf.mxu0
      %v3074 = vadd.f32 0.0, %v3073
      %v3075 = vpop.f32.mrf.mxu0
      %v3076 = vpop.f32.mrf.mxu0
      %v3077 = vadd.f32 0.0, %v3076
      %v3078 = vpop.f32.mrf.mxu0
      %3079 = vmatprep.mubr.bf16.mxu0 0
      %3080 = vmatmul.mubr.bf16.gmra.mxu0 %v2921
      %v3081 = vpop.f32.mrf.mxu0
      %v3082 = vadd.f32 0.0, %v3081
      %v3083 = vpop.f32.mrf.mxu0
      %v3084 = vpop.f32.mrf.mxu0
      %v3085 = vadd.f32 0.0, %v3084
      %v3086 = vpop.f32.mrf.mxu0
      %3087 = vmatprep.mubr.bf16.mxu0 0
      %3088 = vmatmul.mubr.bf16.gmra.mxu0 %v2924
      %v3089 = vpop.f32.mrf.mxu0
      %v3090 = vadd.f32 0.0, %v3089
      %v3091 = vpop.f32.mrf.mxu0
      %v3092 = vpop.f32.mrf.mxu0
      %v3093 = vadd.f32 0.0, %v3092
      %v3094 = vpop.f32.mrf.mxu0
      %3095 = vmatprep.mubr.bf16.mxu0 0
      %3096 = vmatmul.mubr.bf16.gmra.mxu0 %v2927
      %v3097 = vpop.f32.mrf.mxu0
      %v3098 = vadd.f32 0.0, %v3097
      %v3099 = vpop.f32.mrf.mxu0
      %v3100 = vpop.f32.mrf.mxu0
      %v3101 = vadd.f32 0.0, %v3100
      %v3102 = vpop.f32.mrf.mxu0
      %3103 = vmatprep.mubr.bf16.mxu0 0
      %3104 = vmatmul.mubr.bf16.gmra.mxu0 %v2930
      %v3105 = vpop.f32.mrf.mxu0
      %v3106 = vadd.f32 0.0, %v3105
      %v3107 = vpop.f32.mrf.mxu0
      %v3108 = vpop.f32.mrf.mxu0
      %v3109 = vadd.f32 0.0, %v3108
      %v3110 = vpop.f32.mrf.mxu0
      %3111 = vdwg.mxu0
      %v3112 = vadd.f32 %v2786, %v2970
      %v3113 = vadd.f32 %v2787, %v2973
      %v3114 = vadd.f32 %v2788, %v2978
      %v3115 = vadd.f32 %v2789, %v2981
      %v3116 = vadd.f32 %v2790, %v2986
      %v3117 = vadd.f32 %v2791, %v2989
      %v3118 = vadd.f32 %v2792, %v2994
      %v3119 = vadd.f32 %v2793, %v2997
      %v3120 = vadd.f32 %v2794, %v3002
      %v3121 = vadd.f32 %v2795, %v3005
      %v3122 = vadd.f32 %v2796, %v3010
      %v3123 = vadd.f32 %v2797, %v3013
      %v3124 = vadd.f32 %v2798, %v3018
      %v3125 = vadd.f32 %v2799, %v3021
      %v3126 = vadd.f32 %v2800, %v3026
      %v3127 = vadd.f32 %v2801, %v3029
      %v3128 = vadd.f32 %v2802, %v3034
      %v3129 = vadd.f32 %v2803, %v3037
      %v3130 = vadd.f32 %v2804, %v3042
      %v3131 = vadd.f32 %v2805, %v3045
      %v3132 = vadd.f32 %v2806, %v3050
      %v3133 = vadd.f32 %v2807, %v3053
      %v3134 = vadd.f32 %v2808, %v3058
      %v3135 = vadd.f32 %v2809, %v3061
      %v3136 = vadd.f32 %v2810, %v3066
      %v3137 = vadd.f32 %v2811, %v3069
      %v3138 = vadd.f32 %v2812, %v3074
      %v3139 = vadd.f32 %v2813, %v3077
      %v3140 = vadd.f32 %v2814, %v3082
      %v3141 = vadd.f32 %v2815, %v3085
      %v3142 = vadd.f32 %v2816, %v3090
      %v3143 = vadd.f32 %v2817, %v3093
      %v3144 = vadd.f32 %v2818, %v3098
      %v3145 = vadd.f32 %v2819, %v3101
      %v3146 = vadd.f32 %v2820, %v3106
      %v3147 = vadd.f32 %v2821, %v3109
      %v3148 = vld [vmem:[#allocation2 + $0x24] sm:$0xff]
      %v3149 = vld [vmem:[#allocation2 + $0x2c] sm:$0xff]
      %v3150 = vld [vmem:[#allocation2 + $0x34] sm:$0xff]
      %v3151 = vld [vmem:[#allocation2 + $0x3c] sm:$0xff]
      %v3152 = vld [vmem:[#allocation2 + $0x44] sm:$0xff]
      %v3153 = vld [vmem:[#allocation2 + $0x4c] sm:$0xff]
      %v3154 = vld [vmem:[#allocation2 + $0x54] sm:$0xff]
      %v3155 = vld [vmem:[#allocation2 + $0x5c] sm:$0xff]
      %v3156 = vld [vmem:[#allocation2 + $0x64] sm:$0xff]
      %v3157 = vld [vmem:[#allocation2 + $0x6c] sm:$0xff]
      %v3158 = vld [vmem:[#allocation2 + $0x74] sm:$0xff]
      %v3159 = vld [vmem:[#allocation2 + $0x7c] sm:$0xff]
      %v3160 = vld [vmem:[#allocation2 + $0x84] sm:$0xff]
      %v3161 = vld [vmem:[#allocation2 + $0x8c] sm:$0xff]
      %v3162 = vld [vmem:[#allocation2 + $0x94] sm:$0xff]
      %v3163 = vld [vmem:[#allocation2 + $0x9c] sm:$0xff]
      %v3164 = vld [vmem:[#allocation2 + $0xa4] sm:$0xff]
      %v3165 = vld [vmem:[#allocation2 + $0xac] sm:$0xff]
      %v3166 = vld [vmem:[#allocation2 + $0xb4] sm:$0xff]
      %v3167 = vld [vmem:[#allocation2 + $0xbc] sm:$0xff]
      %v3168 = vld [vmem:[#allocation2 + $0xc4] sm:$0xff]
      %v3169 = vld [vmem:[#allocation2 + $0xcc] sm:$0xff]
      %v3170 = vld [vmem:[#allocation2 + $0xd4] sm:$0xff]
      %v3171 = vld [vmem:[#allocation2 + $0xdc] sm:$0xff]
      %v3172 = vld [vmem:[#allocation2 + $0xe4] sm:$0xff]
      %v3173 = vld [vmem:[#allocation2 + $0xec] sm:$0xff]
      %v3174 = vld [vmem:[#allocation2 + $0xf4] sm:$0xff]
      %v3175 = vld [vmem:[#allocation2 + $0xfc] sm:$0xff]
      %v3176 = vld [vmem:[#allocation2 + $0x104] sm:$0xff]
      %v3177 = vld [vmem:[#allocation2 + $0x10c] sm:$0xff]
      %v3178 = vld [vmem:[#allocation2 + $0x114] sm:$0xff]
      %v3179 = vld [vmem:[#allocation2 + $0x11c] sm:$0xff]
      %v3180 = vld [vmem:[#allocation2 + $0x124] sm:$0xff]
      %v3181 = vld [vmem:[#allocation2 + $0x12c] sm:$0xff]
      %v3182 = vld [vmem:[#allocation2 + $0x134] sm:$0xff]
      %v3183 = vld [vmem:[#allocation2 + $0x13c] sm:$0xff]
      %v3184 = vpack.c.bf16 %v3149, %v3148
      %v3185 = vpack.c.bf16 %v3151, %v3150
      %v3186 = vpack.c.bf16 %v3153, %v3152
      %v3187 = vpack.c.bf16 %v3155, %v3154
      %v3188 = vpack.c.bf16 %v3157, %v3156
      %v3189 = vpack.c.bf16 %v3159, %v3158
      %v3190 = vpack.c.bf16 %v3161, %v3160
      %v3191 = vpack.c.bf16 %v3163, %v3162
      %v3192 = vpack.c.bf16 %v3165, %v3164
      %v3193 = vpack.c.bf16 %v3167, %v3166
      %v3194 = vpack.c.bf16 %v3169, %v3168
      %v3195 = vpack.c.bf16 %v3171, %v3170
      %v3196 = vpack.c.bf16 %v3173, %v3172
      %v3197 = vpack.c.bf16 %v3175, %v3174
      %v3198 = vpack.c.bf16 %v3177, %v3176
      %v3199 = vpack.c.bf16 %v3179, %v3178
      %v3200 = vpack.c.bf16 %v3181, %v3180
      %v3201 = vpack.c.bf16 %v3183, %v3182
      %s3202 = scalar_lea.vmem %s5, 12
      %v3203 = vld [vmem:[%s3202] sm:$0x3]
      %v3205 = vsel %vm532, %v3184, 0
      %v3208 = vsel %vm532, %v3185, 0
      %v3211 = vsel %vm532, %v3186, 0
      %v3214 = vsel %vm532, %v3187, 0
      %v3217 = vsel %vm532, %v3188, 0
      %v3220 = vsel %vm532, %v3189, 0
      %v3223 = vsel %vm532, %v3190, 0
      %v3226 = vsel %vm532, %v3191, 0
      %v3229 = vsel %vm532, %v3192, 0
      %v3232 = vsel %vm532, %v3193, 0
      %v3235 = vsel %vm532, %v3194, 0
      %v3238 = vsel %vm532, %v3195, 0
      %v3241 = vsel %vm532, %v3196, 0
      %v3244 = vsel %vm532, %v3197, 0
      %v3247 = vsel %vm532, %v3198, 0
      %v3250 = vsel %vm532, %v3199, 0
      %v3253 = vsel %vm532, %v3200, 0
      %v3256 = vsel %vm532, %v3201, 0
      %v3259 = vsel %vm596, %v3203, 0
      %3261 = vmatprep.subr.bf16.mxu0 0
      %3262 = vmatpush1.bf16.msra.mxu0 0
      %3263 = vmatprep.subr.bf16.mxu0 0
      %3264 = vmatpush1.bf16.msra.mxu0 0
      %3265 = vmatprep.subr.bf16.mxu0 0
      %3266 = vmatpush1.bf16.msra.mxu0 0
      %3267 = vmatprep.subr.bf16.mxu0 0
      %3268 = vmatpush1.bf16.msra.mxu0 0
      %3269 = vmatprep.subr.bf16.mxu0 0
      %3270 = vmatpush1.bf16.msra.mxu0 0
      %3271 = vmatprep.subr.bf16.mxu0 0
      %3272 = vmatpush1.bf16.msra.mxu0 0
      %3273 = vmatprep.subr.bf16.mxu0 0
      %3274 = vmatpush1.bf16.msra.mxu0 0
      %3275 = vmatprep.subr.bf16.mxu0 0
      %3276 = vmatpush1.bf16.msra.mxu0 %v3259
      %3277 = vmatprep.subr.bf16.mxu0 0
      %3278 = vmatpush2.bf16.msra.mxu0 0
      %3279 = vmatprep.subr.bf16.mxu0 0
      %3280 = vmatpush2.bf16.msra.mxu0 0
      %3281 = vmatprep.subr.bf16.mxu0 0
      %3282 = vmatpush2.bf16.msra.mxu0 0
      %3283 = vmatprep.subr.bf16.mxu0 0
      %3284 = vmatpush2.bf16.msra.mxu0 0
      %3285 = vmatprep.subr.bf16.mxu0 0
      %3286 = vmatpush2.bf16.msra.mxu0 0
      %3287 = vmatprep.subr.bf16.mxu0 0
      %3288 = vmatpush2.bf16.msra.mxu0 0
      %3289 = vmatprep.subr.bf16.mxu0 0
      %3290 = vmatpush2.bf16.msra.mxu0 0
      %3291 = vmatprep.subr.bf16.mxu0 0
      %3292 = vmatpush2.bf16.msra.mxu0 0
      %3293 = vmatprep.mubr.bf16.mxu0 0
      %3294 = vmatmul.mubr.bf16.gmra.mxu0 %v3205
      %v3295 = vpop.f32.mrf.mxu0
      %v3296 = vadd.f32 0.0, %v3295
      %v3297 = vpop.f32.mrf.mxu0
      %v3298 = vpop.f32.mrf.mxu0
      %v3299 = vadd.f32 0.0, %v3298
      %v3300 = vpop.f32.mrf.mxu0
      %3301 = vmatprep.mubr.bf16.mxu0 0
      %3302 = vmatmul.mubr.bf16.gmra.mxu0 %v3208
      %v3303 = vpop.f32.mrf.mxu0
      %v3304 = vadd.f32 0.0, %v3303
      %v3305 = vpop.f32.mrf.mxu0
      %v3306 = vpop.f32.mrf.mxu0
      %v3307 = vadd.f32 0.0, %v3306
      %v3308 = vpop.f32.mrf.mxu0
      %3309 = vmatprep.mubr.bf16.mxu0 0
      %3310 = vmatmul.mubr.bf16.gmra.mxu0 %v3211
      %v3311 = vpop.f32.mrf.mxu0
      %v3312 = vadd.f32 0.0, %v3311
      %v3313 = vpop.f32.mrf.mxu0
      %v3314 = vpop.f32.mrf.mxu0
      %v3315 = vadd.f32 0.0, %v3314
      %v3316 = vpop.f32.mrf.mxu0
      %3317 = vmatprep.mubr.bf16.mxu0 0
      %3318 = vmatmul.mubr.bf16.gmra.mxu0 %v3214
      %v3319 = vpop.f32.mrf.mxu0
      %v3320 = vadd.f32 0.0, %v3319
      %v3321 = vpop.f32.mrf.mxu0
      %v3322 = vpop.f32.mrf.mxu0
      %v3323 = vadd.f32 0.0, %v3322
      %v3324 = vpop.f32.mrf.mxu0
      %3325 = vmatprep.mubr.bf16.mxu0 0
      %3326 = vmatmul.mubr.bf16.gmra.mxu0 %v3217
      %v3327 = vpop.f32.mrf.mxu0
      %v3328 = vadd.f32 0.0, %v3327
      %v3329 = vpop.f32.mrf.mxu0
      %v3330 = vpop.f32.mrf.mxu0
      %v3331 = vadd.f32 0.0, %v3330
      %v3332 = vpop.f32.mrf.mxu0
      %3333 = vmatprep.mubr.bf16.mxu0 0
      %3334 = vmatmul.mubr.bf16.gmra.mxu0 %v3220
      %v3335 = vpop.f32.mrf.mxu0
      %v3336 = vadd.f32 0.0, %v3335
      %v3337 = vpop.f32.mrf.mxu0
      %v3338 = vpop.f32.mrf.mxu0
      %v3339 = vadd.f32 0.0, %v3338
      %v3340 = vpop.f32.mrf.mxu0
      %3341 = vmatprep.mubr.bf16.mxu0 0
      %3342 = vmatmul.mubr.bf16.gmra.mxu0 %v3223
      %v3343 = vpop.f32.mrf.mxu0
      %v3344 = vadd.f32 0.0, %v3343
      %v3345 = vpop.f32.mrf.mxu0
      %v3346 = vpop.f32.mrf.mxu0
      %v3347 = vadd.f32 0.0, %v3346
      %v3348 = vpop.f32.mrf.mxu0
      %3349 = vmatprep.mubr.bf16.mxu0 0
      %3350 = vmatmul.mubr.bf16.gmra.mxu0 %v3226
      %v3351 = vpop.f32.mrf.mxu0
      %v3352 = vadd.f32 0.0, %v3351
      %v3353 = vpop.f32.mrf.mxu0
      %v3354 = vpop.f32.mrf.mxu0
      %v3355 = vadd.f32 0.0, %v3354
      %v3356 = vpop.f32.mrf.mxu0
      %3357 = vmatprep.mubr.bf16.mxu0 0
      %3358 = vmatmul.mubr.bf16.gmra.mxu0 %v3229
      %v3359 = vpop.f32.mrf.mxu0
      %v3360 = vadd.f32 0.0, %v3359
      %v3361 = vpop.f32.mrf.mxu0
      %v3362 = vpop.f32.mrf.mxu0
      %v3363 = vadd.f32 0.0, %v3362
      %v3364 = vpop.f32.mrf.mxu0
      %3365 = vmatprep.mubr.bf16.mxu0 0
      %3366 = vmatmul.mubr.bf16.gmra.mxu0 %v3232
      %v3367 = vpop.f32.mrf.mxu0
      %v3368 = vadd.f32 0.0, %v3367
      %v3369 = vpop.f32.mrf.mxu0
      %v3370 = vpop.f32.mrf.mxu0
      %v3371 = vadd.f32 0.0, %v3370
      %v3372 = vpop.f32.mrf.mxu0
      %3373 = vmatprep.mubr.bf16.mxu0 0
      %3374 = vmatmul.mubr.bf16.gmra.mxu0 %v3235
      %v3375 = vpop.f32.mrf.mxu0
      %v3376 = vadd.f32 0.0, %v3375
      %v3377 = vpop.f32.mrf.mxu0
      %v3378 = vpop.f32.mrf.mxu0
      %v3379 = vadd.f32 0.0, %v3378
      %v3380 = vpop.f32.mrf.mxu0
      %3381 = vmatprep.mubr.bf16.mxu0 0
      %3382 = vmatmul.mubr.bf16.gmra.mxu0 %v3238
      %v3383 = vpop.f32.mrf.mxu0
      %v3384 = vadd.f32 0.0, %v3383
      %v3385 = vpop.f32.mrf.mxu0
      %v3386 = vpop.f32.mrf.mxu0
      %v3387 = vadd.f32 0.0, %v3386
      %v3388 = vpop.f32.mrf.mxu0
      %3389 = vmatprep.mubr.bf16.mxu0 0
      %3390 = vmatmul.mubr.bf16.gmra.mxu0 %v3241
      %v3391 = vpop.f32.mrf.mxu0
      %v3392 = vadd.f32 0.0, %v3391
      %v3393 = vpop.f32.mrf.mxu0
      %v3394 = vpop.f32.mrf.mxu0
      %v3395 = vadd.f32 0.0, %v3394
      %v3396 = vpop.f32.mrf.mxu0
      %3397 = vmatprep.mubr.bf16.mxu0 0
      %3398 = vmatmul.mubr.bf16.gmra.mxu0 %v3244
      %v3399 = vpop.f32.mrf.mxu0
      %v3400 = vadd.f32 0.0, %v3399
      %v3401 = vpop.f32.mrf.mxu0
      %v3402 = vpop.f32.mrf.mxu0
      %v3403 = vadd.f32 0.0, %v3402
      %v3404 = vpop.f32.mrf.mxu0
      %3405 = vmatprep.mubr.bf16.mxu0 0
      %3406 = vmatmul.mubr.bf16.gmra.mxu0 %v3247
      %v3407 = vpop.f32.mrf.mxu0
      %v3408 = vadd.f32 0.0, %v3407
      %v3409 = vpop.f32.mrf.mxu0
      %v3410 = vpop.f32.mrf.mxu0
      %v3411 = vadd.f32 0.0, %v3410
      %v3412 = vpop.f32.mrf.mxu0
      %3413 = vmatprep.mubr.bf16.mxu0 0
      %3414 = vmatmul.mubr.bf16.gmra.mxu0 %v3250
      %v3415 = vpop.f32.mrf.mxu0
      %v3416 = vadd.f32 0.0, %v3415
      %v3417 = vpop.f32.mrf.mxu0
      %v3418 = vpop.f32.mrf.mxu0
      %v3419 = vadd.f32 0.0, %v3418
      %v3420 = vpop.f32.mrf.mxu0
      %3421 = vmatprep.mubr.bf16.mxu0 0
      %3422 = vmatmul.mubr.bf16.gmra.mxu0 %v3253
      %v3423 = vpop.f32.mrf.mxu0
      %v3424 = vadd.f32 0.0, %v3423
      %v3425 = vpop.f32.mrf.mxu0
      %v3426 = vpop.f32.mrf.mxu0
      %v3427 = vadd.f32 0.0, %v3426
      %v3428 = vpop.f32.mrf.mxu0
      %3429 = vmatprep.mubr.bf16.mxu0 0
      %3430 = vmatmul.mubr.bf16.gmra.mxu0 %v3256
      %v3431 = vpop.f32.mrf.mxu0
      %v3432 = vadd.f32 0.0, %v3431
      %v3433 = vpop.f32.mrf.mxu0
      %v3434 = vpop.f32.mrf.mxu0
      %v3435 = vadd.f32 0.0, %v3434
      %v3436 = vpop.f32.mrf.mxu0
      %3437 = vdwg.mxu0
      %v3438 = vadd.f32 %v3112, %v3296
      %v3439 = vadd.f32 %v3113, %v3299
      %v3440 = vadd.f32 %v3114, %v3304
      %v3441 = vadd.f32 %v3115, %v3307
      %v3442 = vadd.f32 %v3116, %v3312
      %v3443 = vadd.f32 %v3117, %v3315
      %v3444 = vadd.f32 %v3118, %v3320
      %v3445 = vadd.f32 %v3119, %v3323
      %v3446 = vadd.f32 %v3120, %v3328
      %v3447 = vadd.f32 %v3121, %v3331
      %v3448 = vadd.f32 %v3122, %v3336
      %v3449 = vadd.f32 %v3123, %v3339
      %v3450 = vadd.f32 %v3124, %v3344
      %v3451 = vadd.f32 %v3125, %v3347
      %v3452 = vadd.f32 %v3126, %v3352
      %v3453 = vadd.f32 %v3127, %v3355
      %v3454 = vadd.f32 %v3128, %v3360
      %v3455 = vadd.f32 %v3129, %v3363
      %v3456 = vadd.f32 %v3130, %v3368
      %v3457 = vadd.f32 %v3131, %v3371
      %v3458 = vadd.f32 %v3132, %v3376
      %v3459 = vadd.f32 %v3133, %v3379
      %v3460 = vadd.f32 %v3134, %v3384
      %v3461 = vadd.f32 %v3135, %v3387
      %v3462 = vadd.f32 %v3136, %v3392
      %v3463 = vadd.f32 %v3137, %v3395
      %v3464 = vadd.f32 %v3138, %v3400
      %v3465 = vadd.f32 %v3139, %v3403
      %v3466 = vadd.f32 %v3140, %v3408
      %v3467 = vadd.f32 %v3141, %v3411
      %v3468 = vadd.f32 %v3142, %v3416
      %v3469 = vadd.f32 %v3143, %v3419
      %v3470 = vadd.f32 %v3144, %v3424
      %v3471 = vadd.f32 %v3145, %v3427
      %v3472 = vadd.f32 %v3146, %v3432
      %v3473 = vadd.f32 %v3147, %v3435
      %v3474 = vld [vmem:[#allocation2 + $0x25] sm:$0xff]
      %v3475 = vld [vmem:[#allocation2 + $0x2d] sm:$0xff]
      %v3476 = vld [vmem:[#allocation2 + $0x35] sm:$0xff]
      %v3477 = vld [vmem:[#allocation2 + $0x3d] sm:$0xff]
      %v3478 = vld [vmem:[#allocation2 + $0x45] sm:$0xff]
      %v3479 = vld [vmem:[#allocation2 + $0x4d] sm:$0xff]
      %v3480 = vld [vmem:[#allocation2 + $0x55] sm:$0xff]
      %v3481 = vld [vmem:[#allocation2 + $0x5d] sm:$0xff]
      %v3482 = vld [vmem:[#allocation2 + $0x65] sm:$0xff]
      %v3483 = vld [vmem:[#allocation2 + $0x6d] sm:$0xff]
      %v3484 = vld [vmem:[#allocation2 + $0x75] sm:$0xff]
      %v3485 = vld [vmem:[#allocation2 + $0x7d] sm:$0xff]
      %v3486 = vld [vmem:[#allocation2 + $0x85] sm:$0xff]
      %v3487 = vld [vmem:[#allocation2 + $0x8d] sm:$0xff]
      %v3488 = vld [vmem:[#allocation2 + $0x95] sm:$0xff]
      %v3489 = vld [vmem:[#allocation2 + $0x9d] sm:$0xff]
      %v3490 = vld [vmem:[#allocation2 + $0xa5] sm:$0xff]
      %v3491 = vld [vmem:[#allocation2 + $0xad] sm:$0xff]
      %v3492 = vld [vmem:[#allocation2 + $0xb5] sm:$0xff]
      %v3493 = vld [vmem:[#allocation2 + $0xbd] sm:$0xff]
      %v3494 = vld [vmem:[#allocation2 + $0xc5] sm:$0xff]
      %v3495 = vld [vmem:[#allocation2 + $0xcd] sm:$0xff]
      %v3496 = vld [vmem:[#allocation2 + $0xd5] sm:$0xff]
      %v3497 = vld [vmem:[#allocation2 + $0xdd] sm:$0xff]
      %v3498 = vld [vmem:[#allocation2 + $0xe5] sm:$0xff]
      %v3499 = vld [vmem:[#allocation2 + $0xed] sm:$0xff]
      %v3500 = vld [vmem:[#allocation2 + $0xf5] sm:$0xff]
      %v3501 = vld [vmem:[#allocation2 + $0xfd] sm:$0xff]
      %v3502 = vld [vmem:[#allocation2 + $0x105] sm:$0xff]
      %v3503 = vld [vmem:[#allocation2 + $0x10d] sm:$0xff]
      %v3504 = vld [vmem:[#allocation2 + $0x115] sm:$0xff]
      %v3505 = vld [vmem:[#allocation2 + $0x11d] sm:$0xff]
      %v3506 = vld [vmem:[#allocation2 + $0x125] sm:$0xff]
      %v3507 = vld [vmem:[#allocation2 + $0x12d] sm:$0xff]
      %v3508 = vld [vmem:[#allocation2 + $0x135] sm:$0xff]
      %v3509 = vld [vmem:[#allocation2 + $0x13d] sm:$0xff]
      %v3510 = vpack.c.bf16 %v3475, %v3474
      %v3511 = vpack.c.bf16 %v3477, %v3476
      %v3512 = vpack.c.bf16 %v3479, %v3478
      %v3513 = vpack.c.bf16 %v3481, %v3480
      %v3514 = vpack.c.bf16 %v3483, %v3482
      %v3515 = vpack.c.bf16 %v3485, %v3484
      %v3516 = vpack.c.bf16 %v3487, %v3486
      %v3517 = vpack.c.bf16 %v3489, %v3488
      %v3518 = vpack.c.bf16 %v3491, %v3490
      %v3519 = vpack.c.bf16 %v3493, %v3492
      %v3520 = vpack.c.bf16 %v3495, %v3494
      %v3521 = vpack.c.bf16 %v3497, %v3496
      %v3522 = vpack.c.bf16 %v3499, %v3498
      %v3523 = vpack.c.bf16 %v3501, %v3500
      %v3524 = vpack.c.bf16 %v3503, %v3502
      %v3525 = vpack.c.bf16 %v3505, %v3504
      %v3526 = vpack.c.bf16 %v3507, %v3506
      %v3527 = vpack.c.bf16 %v3509, %v3508
      %s3528 = scalar_lea.vmem %s5, 14
      %v3529 = vld [vmem:[%s3528] sm:$0x3]
      %v3531 = vsel %vm532, %v3510, 0
      %v3534 = vsel %vm532, %v3511, 0
      %v3537 = vsel %vm532, %v3512, 0
      %v3540 = vsel %vm532, %v3513, 0
      %v3543 = vsel %vm532, %v3514, 0
      %v3546 = vsel %vm532, %v3515, 0
      %v3549 = vsel %vm532, %v3516, 0
      %v3552 = vsel %vm532, %v3517, 0
      %v3555 = vsel %vm532, %v3518, 0
      %v3558 = vsel %vm532, %v3519, 0
      %v3561 = vsel %vm532, %v3520, 0
      %v3564 = vsel %vm532, %v3521, 0
      %v3567 = vsel %vm532, %v3522, 0
      %v3570 = vsel %vm532, %v3523, 0
      %v3573 = vsel %vm532, %v3524, 0
      %v3576 = vsel %vm532, %v3525, 0
      %v3579 = vsel %vm532, %v3526, 0
      %v3582 = vsel %vm532, %v3527, 0
      %v3585 = vsel %vm596, %v3529, 0
      %3587 = vmatprep.subr.bf16.mxu0 0
      %3588 = vmatpush1.bf16.msra.mxu0 0
      %3589 = vmatprep.subr.bf16.mxu0 0
      %3590 = vmatpush1.bf16.msra.mxu0 0
      %3591 = vmatprep.subr.bf16.mxu0 0
      %3592 = vmatpush1.bf16.msra.mxu0 0
      %3593 = vmatprep.subr.bf16.mxu0 0
      %3594 = vmatpush1.bf16.msra.mxu0 0
      %3595 = vmatprep.subr.bf16.mxu0 0
      %3596 = vmatpush1.bf16.msra.mxu0 0
      %3597 = vmatprep.subr.bf16.mxu0 0
      %3598 = vmatpush1.bf16.msra.mxu0 0
      %3599 = vmatprep.subr.bf16.mxu0 0
      %3600 = vmatpush1.bf16.msra.mxu0 0
      %3601 = vmatprep.subr.bf16.mxu0 0
      %3602 = vmatpush1.bf16.msra.mxu0 %v3585
      %3603 = vmatprep.subr.bf16.mxu0 0
      %3604 = vmatpush2.bf16.msra.mxu0 0
      %3605 = vmatprep.subr.bf16.mxu0 0
      %3606 = vmatpush2.bf16.msra.mxu0 0
      %3607 = vmatprep.subr.bf16.mxu0 0
      %3608 = vmatpush2.bf16.msra.mxu0 0
      %3609 = vmatprep.subr.bf16.mxu0 0
      %3610 = vmatpush2.bf16.msra.mxu0 0
      %3611 = vmatprep.subr.bf16.mxu0 0
      %3612 = vmatpush2.bf16.msra.mxu0 0
      %3613 = vmatprep.subr.bf16.mxu0 0
      %3614 = vmatpush2.bf16.msra.mxu0 0
      %3615 = vmatprep.subr.bf16.mxu0 0
      %3616 = vmatpush2.bf16.msra.mxu0 0
      %3617 = vmatprep.subr.bf16.mxu0 0
      %3618 = vmatpush2.bf16.msra.mxu0 0
      %3619 = vmatprep.mubr.bf16.mxu0 0
      %3620 = vmatmul.mubr.bf16.gmra.mxu0 %v3531
      %v3621 = vpop.f32.mrf.mxu0
      %v3622 = vadd.f32 0.0, %v3621
      %v3623 = vpop.f32.mrf.mxu0
      %v3624 = vpop.f32.mrf.mxu0
      %v3625 = vadd.f32 0.0, %v3624
      %v3626 = vpop.f32.mrf.mxu0
      %3627 = vmatprep.mubr.bf16.mxu0 0
      %3628 = vmatmul.mubr.bf16.gmra.mxu0 %v3534
      %v3629 = vpop.f32.mrf.mxu0
      %v3630 = vadd.f32 0.0, %v3629
      %v3631 = vpop.f32.mrf.mxu0
      %v3632 = vpop.f32.mrf.mxu0
      %v3633 = vadd.f32 0.0, %v3632
      %v3634 = vpop.f32.mrf.mxu0
      %3635 = vmatprep.mubr.bf16.mxu0 0
      %3636 = vmatmul.mubr.bf16.gmra.mxu0 %v3537
      %v3637 = vpop.f32.mrf.mxu0
      %v3638 = vadd.f32 0.0, %v3637
      %v3639 = vpop.f32.mrf.mxu0
      %v3640 = vpop.f32.mrf.mxu0
      %v3641 = vadd.f32 0.0, %v3640
      %v3642 = vpop.f32.mrf.mxu0
      %3643 = vmatprep.mubr.bf16.mxu0 0
      %3644 = vmatmul.mubr.bf16.gmra.mxu0 %v3540
      %v3645 = vpop.f32.mrf.mxu0
      %v3646 = vadd.f32 0.0, %v3645
      %v3647 = vpop.f32.mrf.mxu0
      %v3648 = vpop.f32.mrf.mxu0
      %v3649 = vadd.f32 0.0, %v3648
      %v3650 = vpop.f32.mrf.mxu0
      %3651 = vmatprep.mubr.bf16.mxu0 0
      %3652 = vmatmul.mubr.bf16.gmra.mxu0 %v3543
      %v3653 = vpop.f32.mrf.mxu0
      %v3654 = vadd.f32 0.0, %v3653
      %v3655 = vpop.f32.mrf.mxu0
      %v3656 = vpop.f32.mrf.mxu0
      %v3657 = vadd.f32 0.0, %v3656
      %v3658 = vpop.f32.mrf.mxu0
      %3659 = vmatprep.mubr.bf16.mxu0 0
      %3660 = vmatmul.mubr.bf16.gmra.mxu0 %v3546
      %v3661 = vpop.f32.mrf.mxu0
      %v3662 = vadd.f32 0.0, %v3661
      %v3663 = vpop.f32.mrf.mxu0
      %v3664 = vpop.f32.mrf.mxu0
      %v3665 = vadd.f32 0.0, %v3664
      %v3666 = vpop.f32.mrf.mxu0
      %3667 = vmatprep.mubr.bf16.mxu0 0
      %3668 = vmatmul.mubr.bf16.gmra.mxu0 %v3549
      %v3669 = vpop.f32.mrf.mxu0
      %v3670 = vadd.f32 0.0, %v3669
      %v3671 = vpop.f32.mrf.mxu0
      %v3672 = vpop.f32.mrf.mxu0
      %v3673 = vadd.f32 0.0, %v3672
      %v3674 = vpop.f32.mrf.mxu0
      %3675 = vmatprep.mubr.bf16.mxu0 0
      %3676 = vmatmul.mubr.bf16.gmra.mxu0 %v3552
      %v3677 = vpop.f32.mrf.mxu0
      %v3678 = vadd.f32 0.0, %v3677
      %v3679 = vpop.f32.mrf.mxu0
      %v3680 = vpop.f32.mrf.mxu0
      %v3681 = vadd.f32 0.0, %v3680
      %v3682 = vpop.f32.mrf.mxu0
      %3683 = vmatprep.mubr.bf16.mxu0 0
      %3684 = vmatmul.mubr.bf16.gmra.mxu0 %v3555
      %v3685 = vpop.f32.mrf.mxu0
      %v3686 = vadd.f32 0.0, %v3685
      %v3687 = vpop.f32.mrf.mxu0
      %v3688 = vpop.f32.mrf.mxu0
      %v3689 = vadd.f32 0.0, %v3688
      %v3690 = vpop.f32.mrf.mxu0
      %3691 = vmatprep.mubr.bf16.mxu0 0
      %3692 = vmatmul.mubr.bf16.gmra.mxu0 %v3558
      %v3693 = vpop.f32.mrf.mxu0
      %v3694 = vadd.f32 0.0, %v3693
      %v3695 = vpop.f32.mrf.mxu0
      %v3696 = vpop.f32.mrf.mxu0
      %v3697 = vadd.f32 0.0, %v3696
      %v3698 = vpop.f32.mrf.mxu0
      %3699 = vmatprep.mubr.bf16.mxu0 0
      %3700 = vmatmul.mubr.bf16.gmra.mxu0 %v3561
      %v3701 = vpop.f32.mrf.mxu0
      %v3702 = vadd.f32 0.0, %v3701
      %v3703 = vpop.f32.mrf.mxu0
      %v3704 = vpop.f32.mrf.mxu0
      %v3705 = vadd.f32 0.0, %v3704
      %v3706 = vpop.f32.mrf.mxu0
      %3707 = vmatprep.mubr.bf16.mxu0 0
      %3708 = vmatmul.mubr.bf16.gmra.mxu0 %v3564
      %v3709 = vpop.f32.mrf.mxu0
      %v3710 = vadd.f32 0.0, %v3709
      %v3711 = vpop.f32.mrf.mxu0
      %v3712 = vpop.f32.mrf.mxu0
      %v3713 = vadd.f32 0.0, %v3712
      %v3714 = vpop.f32.mrf.mxu0
      %3715 = vmatprep.mubr.bf16.mxu0 0
      %3716 = vmatmul.mubr.bf16.gmra.mxu0 %v3567
      %v3717 = vpop.f32.mrf.mxu0
      %v3718 = vadd.f32 0.0, %v3717
      %v3719 = vpop.f32.mrf.mxu0
      %v3720 = vpop.f32.mrf.mxu0
      %v3721 = vadd.f32 0.0, %v3720
      %v3722 = vpop.f32.mrf.mxu0
      %3723 = vmatprep.mubr.bf16.mxu0 0
      %3724 = vmatmul.mubr.bf16.gmra.mxu0 %v3570
      %v3725 = vpop.f32.mrf.mxu0
      %v3726 = vadd.f32 0.0, %v3725
      %v3727 = vpop.f32.mrf.mxu0
      %v3728 = vpop.f32.mrf.mxu0
      %v3729 = vadd.f32 0.0, %v3728
      %v3730 = vpop.f32.mrf.mxu0
      %3731 = vmatprep.mubr.bf16.mxu0 0
      %3732 = vmatmul.mubr.bf16.gmra.mxu0 %v3573
      %v3733 = vpop.f32.mrf.mxu0
      %v3734 = vadd.f32 0.0, %v3733
      %v3735 = vpop.f32.mrf.mxu0
      %v3736 = vpop.f32.mrf.mxu0
      %v3737 = vadd.f32 0.0, %v3736
      %v3738 = vpop.f32.mrf.mxu0
      %3739 = vmatprep.mubr.bf16.mxu0 0
      %3740 = vmatmul.mubr.bf16.gmra.mxu0 %v3576
      %v3741 = vpop.f32.mrf.mxu0
      %v3742 = vadd.f32 0.0, %v3741
      %v3743 = vpop.f32.mrf.mxu0
      %v3744 = vpop.f32.mrf.mxu0
      %v3745 = vadd.f32 0.0, %v3744
      %v3746 = vpop.f32.mrf.mxu0
      %3747 = vmatprep.mubr.bf16.mxu0 0
      %3748 = vmatmul.mubr.bf16.gmra.mxu0 %v3579
      %v3749 = vpop.f32.mrf.mxu0
      %v3750 = vadd.f32 0.0, %v3749
      %v3751 = vpop.f32.mrf.mxu0
      %v3752 = vpop.f32.mrf.mxu0
      %v3753 = vadd.f32 0.0, %v3752
      %v3754 = vpop.f32.mrf.mxu0
      %3755 = vmatprep.mubr.bf16.mxu0 0
      %3756 = vmatmul.mubr.bf16.gmra.mxu0 %v3582
      %v3757 = vpop.f32.mrf.mxu0
      %v3758 = vadd.f32 0.0, %v3757
      %v3759 = vpop.f32.mrf.mxu0
      %v3760 = vpop.f32.mrf.mxu0
      %v3761 = vadd.f32 0.0, %v3760
      %v3762 = vpop.f32.mrf.mxu0
      %3763 = vdwg.mxu0
      %v3764 = vadd.f32 %v3438, %v3622
      %v3765 = vadd.f32 %v3439, %v3625
      %v3766 = vadd.f32 %v3440, %v3630
      %v3767 = vadd.f32 %v3441, %v3633
      %v3768 = vadd.f32 %v3442, %v3638
      %v3769 = vadd.f32 %v3443, %v3641
      %v3770 = vadd.f32 %v3444, %v3646
      %v3771 = vadd.f32 %v3445, %v3649
      %v3772 = vadd.f32 %v3446, %v3654
      %v3773 = vadd.f32 %v3447, %v3657
      %v3774 = vadd.f32 %v3448, %v3662
      %v3775 = vadd.f32 %v3449, %v3665
      %v3776 = vadd.f32 %v3450, %v3670
      %v3777 = vadd.f32 %v3451, %v3673
      %v3778 = vadd.f32 %v3452, %v3678
      %v3779 = vadd.f32 %v3453, %v3681
      %v3780 = vadd.f32 %v3454, %v3686
      %v3781 = vadd.f32 %v3455, %v3689
      %v3782 = vadd.f32 %v3456, %v3694
      %v3783 = vadd.f32 %v3457, %v3697
      %v3784 = vadd.f32 %v3458, %v3702
      %v3785 = vadd.f32 %v3459, %v3705
      %v3786 = vadd.f32 %v3460, %v3710
      %v3787 = vadd.f32 %v3461, %v3713
      %v3788 = vadd.f32 %v3462, %v3718
      %v3789 = vadd.f32 %v3463, %v3721
      %v3790 = vadd.f32 %v3464, %v3726
      %v3791 = vadd.f32 %v3465, %v3729
      %v3792 = vadd.f32 %v3466, %v3734
      %v3793 = vadd.f32 %v3467, %v3737
      %v3794 = vadd.f32 %v3468, %v3742
      %v3795 = vadd.f32 %v3469, %v3745
      %v3796 = vadd.f32 %v3470, %v3750
      %v3797 = vadd.f32 %v3471, %v3753
      %v3798 = vadd.f32 %v3472, %v3758
      %v3799 = vadd.f32 %v3473, %v3761
      %v3800 = vld [vmem:[#allocation2 + $0x26] sm:$0xff]
      %v3801 = vld [vmem:[#allocation2 + $0x2e] sm:$0xff]
      %v3802 = vld [vmem:[#allocation2 + $0x36] sm:$0xff]
      %v3803 = vld [vmem:[#allocation2 + $0x3e] sm:$0xff]
      %v3804 = vld [vmem:[#allocation2 + $0x46] sm:$0xff]
      %v3805 = vld [vmem:[#allocation2 + $0x4e] sm:$0xff]
      %v3806 = vld [vmem:[#allocation2 + $0x56] sm:$0xff]
      %v3807 = vld [vmem:[#allocation2 + $0x5e] sm:$0xff]
      %v3808 = vld [vmem:[#allocation2 + $0x66] sm:$0xff]
      %v3809 = vld [vmem:[#allocation2 + $0x6e] sm:$0xff]
      %v3810 = vld [vmem:[#allocation2 + $0x76] sm:$0xff]
      %v3811 = vld [vmem:[#allocation2 + $0x7e] sm:$0xff]
      %v3812 = vld [vmem:[#allocation2 + $0x86] sm:$0xff]
      %v3813 = vld [vmem:[#allocation2 + $0x8e] sm:$0xff]
      %v3814 = vld [vmem:[#allocation2 + $0x96] sm:$0xff]
      %v3815 = vld [vmem:[#allocation2 + $0x9e] sm:$0xff]
      %v3816 = vld [vmem:[#allocation2 + $0xa6] sm:$0xff]
      %v3817 = vld [vmem:[#allocation2 + $0xae] sm:$0xff]
      %v3818 = vld [vmem:[#allocation2 + $0xb6] sm:$0xff]
      %v3819 = vld [vmem:[#allocation2 + $0xbe] sm:$0xff]
      %v3820 = vld [vmem:[#allocation2 + $0xc6] sm:$0xff]
      %v3821 = vld [vmem:[#allocation2 + $0xce] sm:$0xff]
      %v3822 = vld [vmem:[#allocation2 + $0xd6] sm:$0xff]
      %v3823 = vld [vmem:[#allocation2 + $0xde] sm:$0xff]
      %v3824 = vld [vmem:[#allocation2 + $0xe6] sm:$0xff]
      %v3825 = vld [vmem:[#allocation2 + $0xee] sm:$0xff]
      %v3826 = vld [vmem:[#allocation2 + $0xf6] sm:$0xff]
      %v3827 = vld [vmem:[#allocation2 + $0xfe] sm:$0xff]
      %v3828 = vld [vmem:[#allocation2 + $0x106] sm:$0xff]
      %v3829 = vld [vmem:[#allocation2 + $0x10e] sm:$0xff]
      %v3830 = vld [vmem:[#allocation2 + $0x116] sm:$0xff]
      %v3831 = vld [vmem:[#allocation2 + $0x11e] sm:$0xff]
      %v3832 = vld [vmem:[#allocation2 + $0x126] sm:$0xff]
      %v3833 = vld [vmem:[#allocation2 + $0x12e] sm:$0xff]
      %v3834 = vld [vmem:[#allocation2 + $0x136] sm:$0xff]
      %v3835 = vld [vmem:[#allocation2 + $0x13e] sm:$0xff]
      %v3836 = vpack.c.bf16 %v3801, %v3800
      %v3837 = vpack.c.bf16 %v3803, %v3802
      %v3838 = vpack.c.bf16 %v3805, %v3804
      %v3839 = vpack.c.bf16 %v3807, %v3806
      %v3840 = vpack.c.bf16 %v3809, %v3808
      %v3841 = vpack.c.bf16 %v3811, %v3810
      %v3842 = vpack.c.bf16 %v3813, %v3812
      %v3843 = vpack.c.bf16 %v3815, %v3814
      %v3844 = vpack.c.bf16 %v3817, %v3816
      %v3845 = vpack.c.bf16 %v3819, %v3818
      %v3846 = vpack.c.bf16 %v3821, %v3820
      %v3847 = vpack.c.bf16 %v3823, %v3822
      %v3848 = vpack.c.bf16 %v3825, %v3824
      %v3849 = vpack.c.bf16 %v3827, %v3826
      %v3850 = vpack.c.bf16 %v3829, %v3828
      %v3851 = vpack.c.bf16 %v3831, %v3830
      %v3852 = vpack.c.bf16 %v3833, %v3832
      %v3853 = vpack.c.bf16 %v3835, %v3834
      %s3854 = scalar_lea.vmem %s5, 16
      %v3855 = vld [vmem:[%s3854] sm:$0x3]
      %v3857 = vsel %vm532, %v3836, 0
      %v3860 = vsel %vm532, %v3837, 0
      %v3863 = vsel %vm532, %v3838, 0
      %v3866 = vsel %vm532, %v3839, 0
      %v3869 = vsel %vm532, %v3840, 0
      %v3872 = vsel %vm532, %v3841, 0
      %v3875 = vsel %vm532, %v3842, 0
      %v3878 = vsel %vm532, %v3843, 0
      %v3881 = vsel %vm532, %v3844, 0
      %v3884 = vsel %vm532, %v3845, 0
      %v3887 = vsel %vm532, %v3846, 0
      %v3890 = vsel %vm532, %v3847, 0
      %v3893 = vsel %vm532, %v3848, 0
      %v3896 = vsel %vm532, %v3849, 0
      %v3899 = vsel %vm532, %v3850, 0
      %v3902 = vsel %vm532, %v3851, 0
      %v3905 = vsel %vm532, %v3852, 0
      %v3908 = vsel %vm532, %v3853, 0
      %v3911 = vsel %vm596, %v3855, 0
      %3913 = vmatprep.subr.bf16.mxu0 0
      %3914 = vmatpush1.bf16.msra.mxu0 0
      %3915 = vmatprep.subr.bf16.mxu0 0
      %3916 = vmatpush1.bf16.msra.mxu0 0
      %3917 = vmatprep.subr.bf16.mxu0 0
      %3918 = vmatpush1.bf16.msra.mxu0 0
      %3919 = vmatprep.subr.bf16.mxu0 0
      %3920 = vmatpush1.bf16.msra.mxu0 0
      %3921 = vmatprep.subr.bf16.mxu0 0
      %3922 = vmatpush1.bf16.msra.mxu0 0
      %3923 = vmatprep.subr.bf16.mxu0 0
      %3924 = vmatpush1.bf16.msra.mxu0 0
      %3925 = vmatprep.subr.bf16.mxu0 0
      %3926 = vmatpush1.bf16.msra.mxu0 0
      %3927 = vmatprep.subr.bf16.mxu0 0
      %3928 = vmatpush1.bf16.msra.mxu0 %v3911
      %3929 = vmatprep.subr.bf16.mxu0 0
      %3930 = vmatpush2.bf16.msra.mxu0 0
      %3931 = vmatprep.subr.bf16.mxu0 0
      %3932 = vmatpush2.bf16.msra.mxu0 0
      %3933 = vmatprep.subr.bf16.mxu0 0
      %3934 = vmatpush2.bf16.msra.mxu0 0
      %3935 = vmatprep.subr.bf16.mxu0 0
      %3936 = vmatpush2.bf16.msra.mxu0 0
      %3937 = vmatprep.subr.bf16.mxu0 0
      %3938 = vmatpush2.bf16.msra.mxu0 0
      %3939 = vmatprep.subr.bf16.mxu0 0
      %3940 = vmatpush2.bf16.msra.mxu0 0
      %3941 = vmatprep.subr.bf16.mxu0 0
      %3942 = vmatpush2.bf16.msra.mxu0 0
      %3943 = vmatprep.subr.bf16.mxu0 0
      %3944 = vmatpush2.bf16.msra.mxu0 0
      %3945 = vmatprep.mubr.bf16.mxu0 0
      %3946 = vmatmul.mubr.bf16.gmra.mxu0 %v3857
      %v3947 = vpop.f32.mrf.mxu0
      %v3948 = vadd.f32 0.0, %v3947
      %v3949 = vpop.f32.mrf.mxu0
      %v3950 = vpop.f32.mrf.mxu0
      %v3951 = vadd.f32 0.0, %v3950
      %v3952 = vpop.f32.mrf.mxu0
      %3953 = vmatprep.mubr.bf16.mxu0 0
      %3954 = vmatmul.mubr.bf16.gmra.mxu0 %v3860
      %v3955 = vpop.f32.mrf.mxu0
      %v3956 = vadd.f32 0.0, %v3955
      %v3957 = vpop.f32.mrf.mxu0
      %v3958 = vpop.f32.mrf.mxu0
      %v3959 = vadd.f32 0.0, %v3958
      %v3960 = vpop.f32.mrf.mxu0
      %3961 = vmatprep.mubr.bf16.mxu0 0
      %3962 = vmatmul.mubr.bf16.gmra.mxu0 %v3863
      %v3963 = vpop.f32.mrf.mxu0
      %v3964 = vadd.f32 0.0, %v3963
      %v3965 = vpop.f32.mrf.mxu0
      %v3966 = vpop.f32.mrf.mxu0
      %v3967 = vadd.f32 0.0, %v3966
      %v3968 = vpop.f32.mrf.mxu0
      %3969 = vmatprep.mubr.bf16.mxu0 0
      %3970 = vmatmul.mubr.bf16.gmra.mxu0 %v3866
      %v3971 = vpop.f32.mrf.mxu0
      %v3972 = vadd.f32 0.0, %v3971
      %v3973 = vpop.f32.mrf.mxu0
      %v3974 = vpop.f32.mrf.mxu0
      %v3975 = vadd.f32 0.0, %v3974
      %v3976 = vpop.f32.mrf.mxu0
      %3977 = vmatprep.mubr.bf16.mxu0 0
      %3978 = vmatmul.mubr.bf16.gmra.mxu0 %v3869
      %v3979 = vpop.f32.mrf.mxu0
      %v3980 = vadd.f32 0.0, %v3979
      %v3981 = vpop.f32.mrf.mxu0
      %v3982 = vpop.f32.mrf.mxu0
      %v3983 = vadd.f32 0.0, %v3982
      %v3984 = vpop.f32.mrf.mxu0
      %3985 = vmatprep.mubr.bf16.mxu0 0
      %3986 = vmatmul.mubr.bf16.gmra.mxu0 %v3872
      %v3987 = vpop.f32.mrf.mxu0
      %v3988 = vadd.f32 0.0, %v3987
      %v3989 = vpop.f32.mrf.mxu0
      %v3990 = vpop.f32.mrf.mxu0
      %v3991 = vadd.f32 0.0, %v3990
      %v3992 = vpop.f32.mrf.mxu0
      %3993 = vmatprep.mubr.bf16.mxu0 0
      %3994 = vmatmul.mubr.bf16.gmra.mxu0 %v3875
      %v3995 = vpop.f32.mrf.mxu0
      %v3996 = vadd.f32 0.0, %v3995
      %v3997 = vpop.f32.mrf.mxu0
      %v3998 = vpop.f32.mrf.mxu0
      %v3999 = vadd.f32 0.0, %v3998
      %v4000 = vpop.f32.mrf.mxu0
      %4001 = vmatprep.mubr.bf16.mxu0 0
      %4002 = vmatmul.mubr.bf16.gmra.mxu0 %v3878
      %v4003 = vpop.f32.mrf.mxu0
      %v4004 = vadd.f32 0.0, %v4003
      %v4005 = vpop.f32.mrf.mxu0
      %v4006 = vpop.f32.mrf.mxu0
      %v4007 = vadd.f32 0.0, %v4006
      %v4008 = vpop.f32.mrf.mxu0
      %4009 = vmatprep.mubr.bf16.mxu0 0
      %4010 = vmatmul.mubr.bf16.gmra.mxu0 %v3881
      %v4011 = vpop.f32.mrf.mxu0
      %v4012 = vadd.f32 0.0, %v4011
      %v4013 = vpop.f32.mrf.mxu0
      %v4014 = vpop.f32.mrf.mxu0
      %v4015 = vadd.f32 0.0, %v4014
      %v4016 = vpop.f32.mrf.mxu0
      %4017 = vmatprep.mubr.bf16.mxu0 0
      %4018 = vmatmul.mubr.bf16.gmra.mxu0 %v3884
      %v4019 = vpop.f32.mrf.mxu0
      %v4020 = vadd.f32 0.0, %v4019
      %v4021 = vpop.f32.mrf.mxu0
      %v4022 = vpop.f32.mrf.mxu0
      %v4023 = vadd.f32 0.0, %v4022
      %v4024 = vpop.f32.mrf.mxu0
      %4025 = vmatprep.mubr.bf16.mxu0 0
      %4026 = vmatmul.mubr.bf16.gmra.mxu0 %v3887
      %v4027 = vpop.f32.mrf.mxu0
      %v4028 = vadd.f32 0.0, %v4027
      %v4029 = vpop.f32.mrf.mxu0
      %v4030 = vpop.f32.mrf.mxu0
      %v4031 = vadd.f32 0.0, %v4030
      %v4032 = vpop.f32.mrf.mxu0
      %4033 = vmatprep.mubr.bf16.mxu0 0
      %4034 = vmatmul.mubr.bf16.gmra.mxu0 %v3890
      %v4035 = vpop.f32.mrf.mxu0
      %v4036 = vadd.f32 0.0, %v4035
      %v4037 = vpop.f32.mrf.mxu0
      %v4038 = vpop.f32.mrf.mxu0
      %v4039 = vadd.f32 0.0, %v4038
      %v4040 = vpop.f32.mrf.mxu0
      %4041 = vmatprep.mubr.bf16.mxu0 0
      %4042 = vmatmul.mubr.bf16.gmra.mxu0 %v3893
      %v4043 = vpop.f32.mrf.mxu0
      %v4044 = vadd.f32 0.0, %v4043
      %v4045 = vpop.f32.mrf.mxu0
      %v4046 = vpop.f32.mrf.mxu0
      %v4047 = vadd.f32 0.0, %v4046
      %v4048 = vpop.f32.mrf.mxu0
      %4049 = vmatprep.mubr.bf16.mxu0 0
      %4050 = vmatmul.mubr.bf16.gmra.mxu0 %v3896
      %v4051 = vpop.f32.mrf.mxu0
      %v4052 = vadd.f32 0.0, %v4051
      %v4053 = vpop.f32.mrf.mxu0
      %v4054 = vpop.f32.mrf.mxu0
      %v4055 = vadd.f32 0.0, %v4054
      %v4056 = vpop.f32.mrf.mxu0
      %4057 = vmatprep.mubr.bf16.mxu0 0
      %4058 = vmatmul.mubr.bf16.gmra.mxu0 %v3899
      %v4059 = vpop.f32.mrf.mxu0
      %v4060 = vadd.f32 0.0, %v4059
      %v4061 = vpop.f32.mrf.mxu0
      %v4062 = vpop.f32.mrf.mxu0
      %v4063 = vadd.f32 0.0, %v4062
      %v4064 = vpop.f32.mrf.mxu0
      %4065 = vmatprep.mubr.bf16.mxu0 0
      %4066 = vmatmul.mubr.bf16.gmra.mxu0 %v3902
      %v4067 = vpop.f32.mrf.mxu0
      %v4068 = vadd.f32 0.0, %v4067
      %v4069 = vpop.f32.mrf.mxu0
      %v4070 = vpop.f32.mrf.mxu0
      %v4071 = vadd.f32 0.0, %v4070
      %v4072 = vpop.f32.mrf.mxu0
      %4073 = vmatprep.mubr.bf16.mxu0 0
      %4074 = vmatmul.mubr.bf16.gmra.mxu0 %v3905
      %v4075 = vpop.f32.mrf.mxu0
      %v4076 = vadd.f32 0.0, %v4075
      %v4077 = vpop.f32.mrf.mxu0
      %v4078 = vpop.f32.mrf.mxu0
      %v4079 = vadd.f32 0.0, %v4078
      %v4080 = vpop.f32.mrf.mxu0
      %4081 = vmatprep.mubr.bf16.mxu0 0
      %4082 = vmatmul.mubr.bf16.gmra.mxu0 %v3908
      %v4083 = vpop.f32.mrf.mxu0
      %v4084 = vadd.f32 0.0, %v4083
      %v4085 = vpop.f32.mrf.mxu0
      %v4086 = vpop.f32.mrf.mxu0
      %v4087 = vadd.f32 0.0, %v4086
      %v4088 = vpop.f32.mrf.mxu0
      %4089 = vdwg.mxu0
      %v4090 = vadd.f32 %v3764, %v3948
      %v4091 = vadd.f32 %v3765, %v3951
      %v4092 = vadd.f32 %v3766, %v3956
      %v4093 = vadd.f32 %v3767, %v3959
      %v4094 = vadd.f32 %v3768, %v3964
      %v4095 = vadd.f32 %v3769, %v3967
      %v4096 = vadd.f32 %v3770, %v3972
      %v4097 = vadd.f32 %v3771, %v3975
      %v4098 = vadd.f32 %v3772, %v3980
      %v4099 = vadd.f32 %v3773, %v3983
      %v4100 = vadd.f32 %v3774, %v3988
      %v4101 = vadd.f32 %v3775, %v3991
      %v4102 = vadd.f32 %v3776, %v3996
      %v4103 = vadd.f32 %v3777, %v3999
      %v4104 = vadd.f32 %v3778, %v4004
      %v4105 = vadd.f32 %v3779, %v4007
      %v4106 = vadd.f32 %v3780, %v4012
      %v4107 = vadd.f32 %v3781, %v4015
      %v4108 = vadd.f32 %v3782, %v4020
      %v4109 = vadd.f32 %v3783, %v4023
      %v4110 = vadd.f32 %v3784, %v4028
      %v4111 = vadd.f32 %v3785, %v4031
      %v4112 = vadd.f32 %v3786, %v4036
      %v4113 = vadd.f32 %v3787, %v4039
      %v4114 = vadd.f32 %v3788, %v4044
      %v4115 = vadd.f32 %v3789, %v4047
      %v4116 = vadd.f32 %v3790, %v4052
      %v4117 = vadd.f32 %v3791, %v4055
      %v4118 = vadd.f32 %v3792, %v4060
      %v4119 = vadd.f32 %v3793, %v4063
      %v4120 = vadd.f32 %v3794, %v4068
      %v4121 = vadd.f32 %v3795, %v4071
      %v4122 = vadd.f32 %v3796, %v4076
      %v4123 = vadd.f32 %v3797, %v4079
      %v4124 = vadd.f32 %v3798, %v4084
      %v4125 = vadd.f32 %v3799, %v4087
      %v4126 = vld [vmem:[%s6] sm:$0x1]
      %v4128 = vlaneseq
      %v4129 = vshrl.u32 %v4128, 7
      %v4130 = vsub.s32 0, %v4129
      %v4131 = vrot.slane %v4126, %v4130
      %v4133 = vmul.f32 %v4090, %v4131
      %v4134 = vmul.f32 %v4091, %v4131
      %v4135 = vmul.f32 %v4092, %v4131
      %v4136 = vmul.f32 %v4093, %v4131
      %v4137 = vmul.f32 %v4094, %v4131
      %v4138 = vmul.f32 %v4095, %v4131
      %v4139 = vmul.f32 %v4096, %v4131
      %v4140 = vmul.f32 %v4097, %v4131
      %v4141 = vmul.f32 %v4098, %v4131
      %v4142 = vmul.f32 %v4099, %v4131
      %v4143 = vmul.f32 %v4100, %v4131
      %v4144 = vmul.f32 %v4101, %v4131
      %v4145 = vmul.f32 %v4102, %v4131
      %v4146 = vmul.f32 %v4103, %v4131
      %v4147 = vmul.f32 %v4104, %v4131
      %v4148 = vmul.f32 %v4105, %v4131
      %v4149 = vmul.f32 %v4106, %v4131
      %v4150 = vmul.f32 %v4107, %v4131
      %v4151 = vmul.f32 %v4108, %v4131
      %v4152 = vmul.f32 %v4109, %v4131
      %v4153 = vmul.f32 %v4110, %v4131
      %v4154 = vmul.f32 %v4111, %v4131
      %v4155 = vmul.f32 %v4112, %v4131
      %v4156 = vmul.f32 %v4113, %v4131
      %v4157 = vmul.f32 %v4114, %v4131
      %v4158 = vmul.f32 %v4115, %v4131
      %v4159 = vmul.f32 %v4116, %v4131
      %v4160 = vmul.f32 %v4117, %v4131
      %v4161 = vmul.f32 %v4118, %v4131
      %v4162 = vmul.f32 %v4119, %v4131
      %v4163 = vmul.f32 %v4120, %v4131
      %v4164 = vmul.f32 %v4121, %v4131
      %v4165 = vmul.f32 %v4122, %v4131
      %v4166 = vmul.f32 %v4123, %v4131
      %v4167 = vmul.f32 %v4124, %v4131
      %v4168 = vmul.f32 %v4125, %v4131
      %v4169 = vld [vmem:[%s7] sm:$0x1]
      %v4171 = vlaneseq
      %v4172 = vshrl.u32 %v4171, 7
      %v4173 = vsub.s32 0, %v4172
      %v4174 = vrot.slane %v4169, %v4173
      %v4176 = vadd.f32 %v4133, %v4174
      %v4177 = vadd.f32 %v4134, %v4174
      %v4178 = vadd.f32 %v4135, %v4174
      %v4179 = vadd.f32 %v4136, %v4174
      %v4180 = vadd.f32 %v4137, %v4174
      %v4181 = vadd.f32 %v4138, %v4174
      %v4182 = vadd.f32 %v4139, %v4174
      %v4183 = vadd.f32 %v4140, %v4174
      %v4184 = vadd.f32 %v4141, %v4174
      %v4185 = vadd.f32 %v4142, %v4174
      %v4186 = vadd.f32 %v4143, %v4174
      %v4187 = vadd.f32 %v4144, %v4174
      %v4188 = vadd.f32 %v4145, %v4174
      %v4189 = vadd.f32 %v4146, %v4174
      %v4190 = vadd.f32 %v4147, %v4174
      %v4191 = vadd.f32 %v4148, %v4174
      %v4192 = vadd.f32 %v4149, %v4174
      %v4193 = vadd.f32 %v4150, %v4174
      %v4194 = vadd.f32 %v4151, %v4174
      %v4195 = vadd.f32 %v4152, %v4174
      %v4196 = vadd.f32 %v4153, %v4174
      %v4197 = vadd.f32 %v4154, %v4174
      %v4198 = vadd.f32 %v4155, %v4174
      %v4199 = vadd.f32 %v4156, %v4174
      %v4200 = vadd.f32 %v4157, %v4174
      %v4201 = vadd.f32 %v4158, %v4174
      %v4202 = vadd.f32 %v4159, %v4174
      %v4203 = vadd.f32 %v4160, %v4174
      %v4204 = vadd.f32 %v4161, %v4174
      %v4205 = vadd.f32 %v4162, %v4174
      %v4206 = vadd.f32 %v4163, %v4174
      %v4207 = vadd.f32 %v4164, %v4174
      %v4208 = vadd.f32 %v4165, %v4174
      %v4209 = vadd.f32 %v4166, %v4174
      %v4210 = vadd.f32 %v4167, %v4174
      %v4211 = vadd.f32 %v4168, %v4174
      %v4212 = vmax.f32 %v4176, 0.0
      %v4213 = vmax.f32 %v4177, 0.0
      %v4214 = vmax.f32 %v4178, 0.0
      %v4215 = vmax.f32 %v4179, 0.0
      %v4216 = vmax.f32 %v4180, 0.0
      %v4217 = vmax.f32 %v4181, 0.0
      %v4218 = vmax.f32 %v4182, 0.0
      %v4219 = vmax.f32 %v4183, 0.0
      %v4220 = vmax.f32 %v4184, 0.0
      %v4221 = vmax.f32 %v4185, 0.0
      %v4222 = vmax.f32 %v4186, 0.0
      %v4223 = vmax.f32 %v4187, 0.0
      %v4224 = vmax.f32 %v4188, 0.0
      %v4225 = vmax.f32 %v4189, 0.0
      %v4226 = vmax.f32 %v4190, 0.0
      %v4227 = vmax.f32 %v4191, 0.0
      %v4228 = vmax.f32 %v4192, 0.0
      %v4229 = vmax.f32 %v4193, 0.0
      %v4230 = vmax.f32 %v4194, 0.0
      %v4231 = vmax.f32 %v4195, 0.0
      %v4232 = vmax.f32 %v4196, 0.0
      %v4233 = vmax.f32 %v4197, 0.0
      %v4234 = vmax.f32 %v4198, 0.0
      %v4235 = vmax.f32 %v4199, 0.0
      %v4236 = vmax.f32 %v4200, 0.0
      %v4237 = vmax.f32 %v4201, 0.0
      %v4238 = vmax.f32 %v4202, 0.0
      %v4239 = vmax.f32 %v4203, 0.0
      %v4240 = vmax.f32 %v4204, 0.0
      %v4241 = vmax.f32 %v4205, 0.0
      %v4242 = vmax.f32 %v4206, 0.0
      %v4243 = vmax.f32 %v4207, 0.0
      %v4244 = vmax.f32 %v4208, 0.0
      %v4245 = vmax.f32 %v4209, 0.0
      %v4246 = vmax.f32 %v4210, 0.0
      %v4247 = vmax.f32 %v4211, 0.0
      %v4248 = vpack.c.bf16 %v4213, %v4212
      %v4249 = vpack.c.bf16 %v4215, %v4214
      %v4250 = vpack.c.bf16 %v4217, %v4216
      %v4251 = vpack.c.bf16 %v4219, %v4218
      %v4252 = vpack.c.bf16 %v4221, %v4220
      %v4253 = vpack.c.bf16 %v4223, %v4222
      %v4254 = vpack.c.bf16 %v4225, %v4224
      %v4255 = vpack.c.bf16 %v4227, %v4226
      %v4256 = vpack.c.bf16 %v4229, %v4228
      %v4257 = vpack.c.bf16 %v4231, %v4230
      %v4258 = vpack.c.bf16 %v4233, %v4232
      %v4259 = vpack.c.bf16 %v4235, %v4234
      %v4260 = vpack.c.bf16 %v4237, %v4236
      %v4261 = vpack.c.bf16 %v4239, %v4238
      %v4262 = vpack.c.bf16 %v4241, %v4240
      %v4263 = vpack.c.bf16 %v4243, %v4242
      %v4264 = vpack.c.bf16 %v4245, %v4244
      %v4265 = vpack.c.bf16 %v4247, %v4246
      %v4266 = vld [vmem:[%s8] sm:$0x3]
      %v4268 = vsel %vm532, %v4248, 0
      %v4271 = vsel %vm532, %v4249, 0
      %v4274 = vsel %vm532, %v4250, 0
      %v4277 = vsel %vm532, %v4251, 0
      %v4280 = vsel %vm532, %v4252, 0
      %v4283 = vsel %vm532, %v4253, 0
      %v4286 = vsel %vm532, %v4254, 0
      %v4289 = vsel %vm532, %v4255, 0
      %v4292 = vsel %vm532, %v4256, 0
      %v4295 = vsel %vm532, %v4257, 0
      %v4298 = vsel %vm532, %v4258, 0
      %v4301 = vsel %vm532, %v4259, 0
      %v4304 = vsel %vm532, %v4260, 0
      %v4307 = vsel %vm532, %v4261, 0
      %v4310 = vsel %vm532, %v4262, 0
      %v4313 = vsel %vm532, %v4263, 0
      %v4316 = vsel %vm532, %v4264, 0
      %v4319 = vsel %vm532, %v4265, 0
      %v4322 = vsel %vm596, %v4266, 0
      %4324 = vmatprep.subr.bf16.mxu0 0
      %4325 = vmatpush1.bf16.msra.mxu0 0
      %4326 = vmatprep.subr.bf16.mxu0 0
      %4327 = vmatpush1.bf16.msra.mxu0 0
      %4328 = vmatprep.subr.bf16.mxu0 0
      %4329 = vmatpush1.bf16.msra.mxu0 0
      %4330 = vmatprep.subr.bf16.mxu0 0
      %4331 = vmatpush1.bf16.msra.mxu0 0
      %4332 = vmatprep.subr.bf16.mxu0 0
      %4333 = vmatpush1.bf16.msra.mxu0 0
      %4334 = vmatprep.subr.bf16.mxu0 0
      %4335 = vmatpush1.bf16.msra.mxu0 0
      %4336 = vmatprep.subr.bf16.mxu0 0
      %4337 = vmatpush1.bf16.msra.mxu0 0
      %4338 = vmatprep.subr.bf16.mxu0 0
      %4339 = vmatpush1.bf16.msra.mxu0 %v4322
      %4340 = vmatprep.subr.bf16.mxu0 0
      %4341 = vmatpush2.bf16.msra.mxu0 0
      %4342 = vmatprep.subr.bf16.mxu0 0
      %4343 = vmatpush2.bf16.msra.mxu0 0
      %4344 = vmatprep.subr.bf16.mxu0 0
      %4345 = vmatpush2.bf16.msra.mxu0 0
      %4346 = vmatprep.subr.bf16.mxu0 0
      %4347 = vmatpush2.bf16.msra.mxu0 0
      %4348 = vmatprep.subr.bf16.mxu0 0
      %4349 = vmatpush2.bf16.msra.mxu0 0
      %4350 = vmatprep.subr.bf16.mxu0 0
      %4351 = vmatpush2.bf16.msra.mxu0 0
      %4352 = vmatprep.subr.bf16.mxu0 0
      %4353 = vmatpush2.bf16.msra.mxu0 0
      %4354 = vmatprep.subr.bf16.mxu0 0
      %4355 = vmatpush2.bf16.msra.mxu0 0
      %4356 = vmatprep.mubr.bf16.mxu0 0
      %4357 = vmatmul.mubr.bf16.gmra.mxu0 %v4268
      %v4358 = vpop.f32.mrf.mxu0
      %v4359 = vadd.f32 0.0, %v4358
      %v4360 = vpop.f32.mrf.mxu0
      %v4361 = vpop.f32.mrf.mxu0
      %v4362 = vadd.f32 0.0, %v4361
      %v4363 = vpop.f32.mrf.mxu0
      %4364 = vmatprep.mubr.bf16.mxu0 0
      %4365 = vmatmul.mubr.bf16.gmra.mxu0 %v4271
      %v4366 = vpop.f32.mrf.mxu0
      %v4367 = vadd.f32 0.0, %v4366
      %v4368 = vpop.f32.mrf.mxu0
      %v4369 = vpop.f32.mrf.mxu0
      %v4370 = vadd.f32 0.0, %v4369
      %v4371 = vpop.f32.mrf.mxu0
      %4372 = vmatprep.mubr.bf16.mxu0 0
      %4373 = vmatmul.mubr.bf16.gmra.mxu0 %v4274
      %v4374 = vpop.f32.mrf.mxu0
      %v4375 = vadd.f32 0.0, %v4374
      %v4376 = vpop.f32.mrf.mxu0
      %v4377 = vpop.f32.mrf.mxu0
      %v4378 = vadd.f32 0.0, %v4377
      %v4379 = vpop.f32.mrf.mxu0
      %4380 = vmatprep.mubr.bf16.mxu0 0
      %4381 = vmatmul.mubr.bf16.gmra.mxu0 %v4277
      %v4382 = vpop.f32.mrf.mxu0
      %v4383 = vadd.f32 0.0, %v4382
      %v4384 = vpop.f32.mrf.mxu0
      %v4385 = vpop.f32.mrf.mxu0
      %v4386 = vadd.f32 0.0, %v4385
      %v4387 = vpop.f32.mrf.mxu0
      %4388 = vmatprep.mubr.bf16.mxu0 0
      %4389 = vmatmul.mubr.bf16.gmra.mxu0 %v4280
      %v4390 = vpop.f32.mrf.mxu0
      %v4391 = vadd.f32 0.0, %v4390
      %v4392 = vpop.f32.mrf.mxu0
      %v4393 = vpop.f32.mrf.mxu0
      %v4394 = vadd.f32 0.0, %v4393
      %v4395 = vpop.f32.mrf.mxu0
      %4396 = vmatprep.mubr.bf16.mxu0 0
      %4397 = vmatmul.mubr.bf16.gmra.mxu0 %v4283
      %v4398 = vpop.f32.mrf.mxu0
      %v4399 = vadd.f32 0.0, %v4398
      %v4400 = vpop.f32.mrf.mxu0
      %v4401 = vpop.f32.mrf.mxu0
      %v4402 = vadd.f32 0.0, %v4401
      %v4403 = vpop.f32.mrf.mxu0
      %4404 = vmatprep.mubr.bf16.mxu0 0
      %4405 = vmatmul.mubr.bf16.gmra.mxu0 %v4286
      %v4406 = vpop.f32.mrf.mxu0
      %v4407 = vadd.f32 0.0, %v4406
      %v4408 = vpop.f32.mrf.mxu0
      %v4409 = vpop.f32.mrf.mxu0
      %v4410 = vadd.f32 0.0, %v4409
      %v4411 = vpop.f32.mrf.mxu0
      %4412 = vmatprep.mubr.bf16.mxu0 0
      %4413 = vmatmul.mubr.bf16.gmra.mxu0 %v4289
      %v4414 = vpop.f32.mrf.mxu0
      %v4415 = vadd.f32 0.0, %v4414
      %v4416 = vpop.f32.mrf.mxu0
      %v4417 = vpop.f32.mrf.mxu0
      %v4418 = vadd.f32 0.0, %v4417
      %v4419 = vpop.f32.mrf.mxu0
      %4420 = vmatprep.mubr.bf16.mxu0 0
      %4421 = vmatmul.mubr.bf16.gmra.mxu0 %v4292
      %v4422 = vpop.f32.mrf.mxu0
      %v4423 = vadd.f32 0.0, %v4422
      %v4424 = vpop.f32.mrf.mxu0
      %v4425 = vpop.f32.mrf.mxu0
      %v4426 = vadd.f32 0.0, %v4425
      %v4427 = vpop.f32.mrf.mxu0
      %4428 = vmatprep.mubr.bf16.mxu0 0
      %4429 = vmatmul.mubr.bf16.gmra.mxu0 %v4295
      %v4430 = vpop.f32.mrf.mxu0
      %v4431 = vadd.f32 0.0, %v4430
      %v4432 = vpop.f32.mrf.mxu0
      %v4433 = vpop.f32.mrf.mxu0
      %v4434 = vadd.f32 0.0, %v4433
      %v4435 = vpop.f32.mrf.mxu0
      %4436 = vmatprep.mubr.bf16.mxu0 0
      %4437 = vmatmul.mubr.bf16.gmra.mxu0 %v4298
      %v4438 = vpop.f32.mrf.mxu0
      %v4439 = vadd.f32 0.0, %v4438
      %v4440 = vpop.f32.mrf.mxu0
      %v4441 = vpop.f32.mrf.mxu0
      %v4442 = vadd.f32 0.0, %v4441
      %v4443 = vpop.f32.mrf.mxu0
      %4444 = vmatprep.mubr.bf16.mxu0 0
      %4445 = vmatmul.mubr.bf16.gmra.mxu0 %v4301
      %v4446 = vpop.f32.mrf.mxu0
      %v4447 = vadd.f32 0.0, %v4446
      %v4448 = vpop.f32.mrf.mxu0
      %v4449 = vpop.f32.mrf.mxu0
      %v4450 = vadd.f32 0.0, %v4449
      %v4451 = vpop.f32.mrf.mxu0
      %4452 = vmatprep.mubr.bf16.mxu0 0
      %4453 = vmatmul.mubr.bf16.gmra.mxu0 %v4304
      %v4454 = vpop.f32.mrf.mxu0
      %v4455 = vadd.f32 0.0, %v4454
      %v4456 = vpop.f32.mrf.mxu0
      %v4457 = vpop.f32.mrf.mxu0
      %v4458 = vadd.f32 0.0, %v4457
      %v4459 = vpop.f32.mrf.mxu0
      %4460 = vmatprep.mubr.bf16.mxu0 0
      %4461 = vmatmul.mubr.bf16.gmra.mxu0 %v4307
      %v4462 = vpop.f32.mrf.mxu0
      %v4463 = vadd.f32 0.0, %v4462
      %v4464 = vpop.f32.mrf.mxu0
      %v4465 = vpop.f32.mrf.mxu0
      %v4466 = vadd.f32 0.0, %v4465
      %v4467 = vpop.f32.mrf.mxu0
      %4468 = vmatprep.mubr.bf16.mxu0 0
      %4469 = vmatmul.mubr.bf16.gmra.mxu0 %v4310
      %v4470 = vpop.f32.mrf.mxu0
      %v4471 = vadd.f32 0.0, %v4470
      %v4472 = vpop.f32.mrf.mxu0
      %v4473 = vpop.f32.mrf.mxu0
      %v4474 = vadd.f32 0.0, %v4473
      %v4475 = vpop.f32.mrf.mxu0
      %4476 = vmatprep.mubr.bf16.mxu0 0
      %4477 = vmatmul.mubr.bf16.gmra.mxu0 %v4313
      %v4478 = vpop.f32.mrf.mxu0
      %v4479 = vadd.f32 0.0, %v4478
      %v4480 = vpop.f32.mrf.mxu0
      %v4481 = vpop.f32.mrf.mxu0
      %v4482 = vadd.f32 0.0, %v4481
      %v4483 = vpop.f32.mrf.mxu0
      %4484 = vmatprep.mubr.bf16.mxu0 0
      %4485 = vmatmul.mubr.bf16.gmra.mxu0 %v4316
      %v4486 = vpop.f32.mrf.mxu0
      %v4487 = vadd.f32 0.0, %v4486
      %v4488 = vpop.f32.mrf.mxu0
      %v4489 = vpop.f32.mrf.mxu0
      %v4490 = vadd.f32 0.0, %v4489
      %v4491 = vpop.f32.mrf.mxu0
      %4492 = vmatprep.mubr.bf16.mxu0 0
      %4493 = vmatmul.mubr.bf16.gmra.mxu0 %v4319
      %v4494 = vpop.f32.mrf.mxu0
      %v4495 = vadd.f32 0.0, %v4494
      %v4496 = vpop.f32.mrf.mxu0
      %v4497 = vpop.f32.mrf.mxu0
      %v4498 = vadd.f32 0.0, %v4497
      %v4499 = vpop.f32.mrf.mxu0
      %4500 = vdwg.mxu0
      %v4501 = vld [vmem:[%s9] sm:$0x1]
      %v4503 = vlaneseq
      %v4504 = vshrl.u32 %v4503, 7
      %v4505 = vsub.s32 0, %v4504
      %v4506 = vrot.slane %v4501, %v4505
      %v4508 = vmul.f32 %v4359, %v4506
      %v4509 = vmul.f32 %v4362, %v4506
      %v4510 = vmul.f32 %v4367, %v4506
      %v4511 = vmul.f32 %v4370, %v4506
      %v4512 = vmul.f32 %v4375, %v4506
      %v4513 = vmul.f32 %v4378, %v4506
      %v4514 = vmul.f32 %v4383, %v4506
      %v4515 = vmul.f32 %v4386, %v4506
      %v4516 = vmul.f32 %v4391, %v4506
      %v4517 = vmul.f32 %v4394, %v4506
      %v4518 = vmul.f32 %v4399, %v4506
      %v4519 = vmul.f32 %v4402, %v4506
      %v4520 = vmul.f32 %v4407, %v4506
      %v4521 = vmul.f32 %v4410, %v4506
      %v4522 = vmul.f32 %v4415, %v4506
      %v4523 = vmul.f32 %v4418, %v4506
      %v4524 = vmul.f32 %v4423, %v4506
      %v4525 = vmul.f32 %v4426, %v4506
      %v4526 = vmul.f32 %v4431, %v4506
      %v4527 = vmul.f32 %v4434, %v4506
      %v4528 = vmul.f32 %v4439, %v4506
      %v4529 = vmul.f32 %v4442, %v4506
      %v4530 = vmul.f32 %v4447, %v4506
      %v4531 = vmul.f32 %v4450, %v4506
      %v4532 = vmul.f32 %v4455, %v4506
      %v4533 = vmul.f32 %v4458, %v4506
      %v4534 = vmul.f32 %v4463, %v4506
      %v4535 = vmul.f32 %v4466, %v4506
      %v4536 = vmul.f32 %v4471, %v4506
      %v4537 = vmul.f32 %v4474, %v4506
      %v4538 = vmul.f32 %v4479, %v4506
      %v4539 = vmul.f32 %v4482, %v4506
      %v4540 = vmul.f32 %v4487, %v4506
      %v4541 = vmul.f32 %v4490, %v4506
      %v4542 = vmul.f32 %v4495, %v4506
      %v4543 = vmul.f32 %v4498, %v4506
      %v4544 = vld [vmem:[%s10] sm:$0x1]
      %v4546 = vlaneseq
      %v4547 = vshrl.u32 %v4546, 7
      %v4548 = vsub.s32 0, %v4547
      %v4549 = vrot.slane %v4544, %v4548
      %v4551 = vadd.f32 %v4508, %v4549
      %v4552 = vadd.f32 %v4509, %v4549
      %v4553 = vadd.f32 %v4510, %v4549
      %v4554 = vadd.f32 %v4511, %v4549
      %v4555 = vadd.f32 %v4512, %v4549
      %v4556 = vadd.f32 %v4513, %v4549
      %v4557 = vadd.f32 %v4514, %v4549
      %v4558 = vadd.f32 %v4515, %v4549
      %v4559 = vadd.f32 %v4516, %v4549
      %v4560 = vadd.f32 %v4517, %v4549
      %v4561 = vadd.f32 %v4518, %v4549
      %v4562 = vadd.f32 %v4519, %v4549
      %v4563 = vadd.f32 %v4520, %v4549
      %v4564 = vadd.f32 %v4521, %v4549
      %v4565 = vadd.f32 %v4522, %v4549
      %v4566 = vadd.f32 %v4523, %v4549
      %v4567 = vadd.f32 %v4524, %v4549
      %v4568 = vadd.f32 %v4525, %v4549
      %v4569 = vadd.f32 %v4526, %v4549
      %v4570 = vadd.f32 %v4527, %v4549
      %v4571 = vadd.f32 %v4528, %v4549
      %v4572 = vadd.f32 %v4529, %v4549
      %v4573 = vadd.f32 %v4530, %v4549
      %v4574 = vadd.f32 %v4531, %v4549
      %v4575 = vadd.f32 %v4532, %v4549
      %v4576 = vadd.f32 %v4533, %v4549
      %v4577 = vadd.f32 %v4534, %v4549
      %v4578 = vadd.f32 %v4535, %v4549
      %v4579 = vadd.f32 %v4536, %v4549
      %v4580 = vadd.f32 %v4537, %v4549
      %v4581 = vadd.f32 %v4538, %v4549
      %v4582 = vadd.f32 %v4539, %v4549
      %v4583 = vadd.f32 %v4540, %v4549
      %v4584 = vadd.f32 %v4541, %v4549
      %v4585 = vadd.f32 %v4542, %v4549
      %v4586 = vadd.f32 %v4543, %v4549
      %v4587 = vld [vmem:[%s462 + $0x13] sm:$0xff]
      %v4588 = vld [vmem:[%s462 + $0x1b] sm:$0xff]
      %v4589 = vld [vmem:[%s462 + $0x23] sm:$0xff]
      %v4590 = vld [vmem:[%s462 + $0x2b] sm:$0xff]
      %v4591 = vld [vmem:[%s462 + $0x33] sm:$0xff]
      %v4592 = vld [vmem:[%s462 + $0x3b] sm:$0xff]
      %v4593 = vld [vmem:[%s462 + $0x43] sm:$0xff]
      %v4594 = vld [vmem:[%s462 + $0x4b] sm:$0xff]
      %v4595 = vld [vmem:[%s462 + $0x53] sm:$0xff]
      %v4596 = vld [vmem:[%s462 + $0x5b] sm:$0xff]
      %v4597 = vld [vmem:[%s462 + $0x63] sm:$0xff]
      %v4598 = vld [vmem:[%s462 + $0x6b] sm:$0xff]
      %v4599 = vld [vmem:[%s462 + $0x73] sm:$0xff]
      %v4600 = vld [vmem:[%s462 + $0x7b] sm:$0xff]
      %v4601 = vld [vmem:[%s462 + $0x83] sm:$0xff]
      %v4602 = vld [vmem:[%s462 + $0x8b] sm:$0xff]
      %v4603 = vld [vmem:[%s462 + $0x93] sm:$0xff]
      %v4604 = vld [vmem:[%s462 + $0x9b] sm:$0xff]
      %v4605 = vld [vmem:[%s462 + $0xa3] sm:$0xff]
      %v4606 = vld [vmem:[%s462 + $0xab] sm:$0xff]
      %v4607 = vld [vmem:[%s462 + $0xb3] sm:$0xff]
      %v4608 = vld [vmem:[%s462 + $0xbb] sm:$0xff]
      %v4609 = vld [vmem:[%s462 + $0xc3] sm:$0xff]
      %v4610 = vld [vmem:[%s462 + $0xcb] sm:$0xff]
      %v4611 = vld [vmem:[%s462 + $0xd3] sm:$0xff]
      %v4612 = vld [vmem:[%s462 + $0xdb] sm:$0xff]
      %v4613 = vld [vmem:[%s462 + $0xe3] sm:$0xff]
      %v4614 = vld [vmem:[%s462 + $0xeb] sm:$0xff]
      %v4615 = vld [vmem:[%s462 + $0xf3] sm:$0xff]
      %v4616 = vld [vmem:[%s462 + $0xfb] sm:$0xff]
      %v4617 = vld [vmem:[%s462 + $0x103] sm:$0xff]
      %v4618 = vld [vmem:[%s462 + $0x10b] sm:$0xff]
      %v4619 = vld [vmem:[%s462 + $0x113] sm:$0xff]
      %v4620 = vld [vmem:[%s462 + $0x11b] sm:$0xff]
      %v4621 = vld [vmem:[%s462 + $0x123] sm:$0xff]
      %v4622 = vld [vmem:[%s462 + $0x12b] sm:$0xff]
      %v4623 = vpack.c.bf16 %v4588, %v4587
      %v4624 = vpack.c.bf16 %v4590, %v4589
      %v4625 = vpack.c.bf16 %v4592, %v4591
      %v4626 = vpack.c.bf16 %v4594, %v4593
      %v4627 = vpack.c.bf16 %v4596, %v4595
      %v4628 = vpack.c.bf16 %v4598, %v4597
      %v4629 = vpack.c.bf16 %v4600, %v4599
      %v4630 = vpack.c.bf16 %v4602, %v4601
      %v4631 = vpack.c.bf16 %v4604, %v4603
      %v4632 = vpack.c.bf16 %v4606, %v4605
      %v4633 = vpack.c.bf16 %v4608, %v4607
      %v4634 = vpack.c.bf16 %v4610, %v4609
      %v4635 = vpack.c.bf16 %v4612, %v4611
      %v4636 = vpack.c.bf16 %v4614, %v4613
      %v4637 = vpack.c.bf16 %v4616, %v4615
      %v4638 = vpack.c.bf16 %v4618, %v4617
      %v4639 = vpack.c.bf16 %v4620, %v4619
      %v4640 = vpack.c.bf16 %v4622, %v4621
      %v4641 = vld [vmem:[%s11] sm:$0x3]
      %v4643 = vsel %vm532, %v4623, 0
      %v4646 = vsel %vm532, %v4624, 0
      %v4649 = vsel %vm532, %v4625, 0
      %v4652 = vsel %vm532, %v4626, 0
      %v4655 = vsel %vm532, %v4627, 0
      %v4658 = vsel %vm532, %v4628, 0
      %v4661 = vsel %vm532, %v4629, 0
      %v4664 = vsel %vm532, %v4630, 0
      %v4667 = vsel %vm532, %v4631, 0
      %v4670 = vsel %vm532, %v4632, 0
      %v4673 = vsel %vm532, %v4633, 0
      %v4676 = vsel %vm532, %v4634, 0
      %v4679 = vsel %vm532, %v4635, 0
      %v4682 = vsel %vm532, %v4636, 0
      %v4685 = vsel %vm532, %v4637, 0
      %v4688 = vsel %vm532, %v4638, 0
      %v4691 = vsel %vm532, %v4639, 0
      %v4694 = vsel %vm532, %v4640, 0
      %v4697 = vsel %vm596, %v4641, 0
      %4699 = vmatprep.subr.bf16.mxu0 0
      %4700 = vmatpush1.bf16.msra.mxu0 0
      %4701 = vmatprep.subr.bf16.mxu0 0
      %4702 = vmatpush1.bf16.msra.mxu0 0
      %4703 = vmatprep.subr.bf16.mxu0 0
      %4704 = vmatpush1.bf16.msra.mxu0 0
      %4705 = vmatprep.subr.bf16.mxu0 0
      %4706 = vmatpush1.bf16.msra.mxu0 0
      %4707 = vmatprep.subr.bf16.mxu0 0
      %4708 = vmatpush1.bf16.msra.mxu0 0
      %4709 = vmatprep.subr.bf16.mxu0 0
      %4710 = vmatpush1.bf16.msra.mxu0 0
      %4711 = vmatprep.subr.bf16.mxu0 0
      %4712 = vmatpush1.bf16.msra.mxu0 0
      %4713 = vmatprep.subr.bf16.mxu0 0
      %4714 = vmatpush1.bf16.msra.mxu0 %v4697
      %4715 = vmatprep.subr.bf16.mxu0 0
      %4716 = vmatpush2.bf16.msra.mxu0 0
      %4717 = vmatprep.subr.bf16.mxu0 0
      %4718 = vmatpush2.bf16.msra.mxu0 0
      %4719 = vmatprep.subr.bf16.mxu0 0
      %4720 = vmatpush2.bf16.msra.mxu0 0
      %4721 = vmatprep.subr.bf16.mxu0 0
      %4722 = vmatpush2.bf16.msra.mxu0 0
      %4723 = vmatprep.subr.bf16.mxu0 0
      %4724 = vmatpush2.bf16.msra.mxu0 0
      %4725 = vmatprep.subr.bf16.mxu0 0
      %4726 = vmatpush2.bf16.msra.mxu0 0
      %4727 = vmatprep.subr.bf16.mxu0 0
      %4728 = vmatpush2.bf16.msra.mxu0 0
      %4729 = vmatprep.subr.bf16.mxu0 0
      %4730 = vmatpush2.bf16.msra.mxu0 0
      %4731 = vmatprep.mubr.bf16.mxu0 0
      %4732 = vmatmul.mubr.bf16.gmra.mxu0 %v4643
      %v4733 = vpop.f32.mrf.mxu0
      %v4734 = vadd.f32 0.0, %v4733
      %v4735 = vpop.f32.mrf.mxu0
      %v4736 = vpop.f32.mrf.mxu0
      %v4737 = vadd.f32 0.0, %v4736
      %v4738 = vpop.f32.mrf.mxu0
      %4739 = vmatprep.mubr.bf16.mxu0 0
      %4740 = vmatmul.mubr.bf16.gmra.mxu0 %v4646
      %v4741 = vpop.f32.mrf.mxu0
      %v4742 = vadd.f32 0.0, %v4741
      %v4743 = vpop.f32.mrf.mxu0
      %v4744 = vpop.f32.mrf.mxu0
      %v4745 = vadd.f32 0.0, %v4744
      %v4746 = vpop.f32.mrf.mxu0
      %4747 = vmatprep.mubr.bf16.mxu0 0
      %4748 = vmatmul.mubr.bf16.gmra.mxu0 %v4649
      %v4749 = vpop.f32.mrf.mxu0
      %v4750 = vadd.f32 0.0, %v4749
      %v4751 = vpop.f32.mrf.mxu0
      %v4752 = vpop.f32.mrf.mxu0
      %v4753 = vadd.f32 0.0, %v4752
      %v4754 = vpop.f32.mrf.mxu0
      %4755 = vmatprep.mubr.bf16.mxu0 0
      %4756 = vmatmul.mubr.bf16.gmra.mxu0 %v4652
      %v4757 = vpop.f32.mrf.mxu0
      %v4758 = vadd.f32 0.0, %v4757
      %v4759 = vpop.f32.mrf.mxu0
      %v4760 = vpop.f32.mrf.mxu0
      %v4761 = vadd.f32 0.0, %v4760
      %v4762 = vpop.f32.mrf.mxu0
      %4763 = vmatprep.mubr.bf16.mxu0 0
      %4764 = vmatmul.mubr.bf16.gmra.mxu0 %v4655
      %v4765 = vpop.f32.mrf.mxu0
      %v4766 = vadd.f32 0.0, %v4765
      %v4767 = vpop.f32.mrf.mxu0
      %v4768 = vpop.f32.mrf.mxu0
      %v4769 = vadd.f32 0.0, %v4768
      %v4770 = vpop.f32.mrf.mxu0
      %4771 = vmatprep.mubr.bf16.mxu0 0
      %4772 = vmatmul.mubr.bf16.gmra.mxu0 %v4658
      %v4773 = vpop.f32.mrf.mxu0
      %v4774 = vadd.f32 0.0, %v4773
      %v4775 = vpop.f32.mrf.mxu0
      %v4776 = vpop.f32.mrf.mxu0
      %v4777 = vadd.f32 0.0, %v4776
      %v4778 = vpop.f32.mrf.mxu0
      %4779 = vmatprep.mubr.bf16.mxu0 0
      %4780 = vmatmul.mubr.bf16.gmra.mxu0 %v4661
      %v4781 = vpop.f32.mrf.mxu0
      %v4782 = vadd.f32 0.0, %v4781
      %v4783 = vpop.f32.mrf.mxu0
      %v4784 = vpop.f32.mrf.mxu0
      %v4785 = vadd.f32 0.0, %v4784
      %v4786 = vpop.f32.mrf.mxu0
      %4787 = vmatprep.mubr.bf16.mxu0 0
      %4788 = vmatmul.mubr.bf16.gmra.mxu0 %v4664
      %v4789 = vpop.f32.mrf.mxu0
      %v4790 = vadd.f32 0.0, %v4789
      %v4791 = vpop.f32.mrf.mxu0
      %v4792 = vpop.f32.mrf.mxu0
      %v4793 = vadd.f32 0.0, %v4792
      %v4794 = vpop.f32.mrf.mxu0
      %4795 = vmatprep.mubr.bf16.mxu0 0
      %4796 = vmatmul.mubr.bf16.gmra.mxu0 %v4667
      %v4797 = vpop.f32.mrf.mxu0
      %v4798 = vadd.f32 0.0, %v4797
      %v4799 = vpop.f32.mrf.mxu0
      %v4800 = vpop.f32.mrf.mxu0
      %v4801 = vadd.f32 0.0, %v4800
      %v4802 = vpop.f32.mrf.mxu0
      %4803 = vmatprep.mubr.bf16.mxu0 0
      %4804 = vmatmul.mubr.bf16.gmra.mxu0 %v4670
      %v4805 = vpop.f32.mrf.mxu0
      %v4806 = vadd.f32 0.0, %v4805
      %v4807 = vpop.f32.mrf.mxu0
      %v4808 = vpop.f32.mrf.mxu0
      %v4809 = vadd.f32 0.0, %v4808
      %v4810 = vpop.f32.mrf.mxu0
      %4811 = vmatprep.mubr.bf16.mxu0 0
      %4812 = vmatmul.mubr.bf16.gmra.mxu0 %v4673
      %v4813 = vpop.f32.mrf.mxu0
      %v4814 = vadd.f32 0.0, %v4813
      %v4815 = vpop.f32.mrf.mxu0
      %v4816 = vpop.f32.mrf.mxu0
      %v4817 = vadd.f32 0.0, %v4816
      %v4818 = vpop.f32.mrf.mxu0
      %4819 = vmatprep.mubr.bf16.mxu0 0
      %4820 = vmatmul.mubr.bf16.gmra.mxu0 %v4676
      %v4821 = vpop.f32.mrf.mxu0
      %v4822 = vadd.f32 0.0, %v4821
      %v4823 = vpop.f32.mrf.mxu0
      %v4824 = vpop.f32.mrf.mxu0
      %v4825 = vadd.f32 0.0, %v4824
      %v4826 = vpop.f32.mrf.mxu0
      %4827 = vmatprep.mubr.bf16.mxu0 0
      %4828 = vmatmul.mubr.bf16.gmra.mxu0 %v4679
      %v4829 = vpop.f32.mrf.mxu0
      %v4830 = vadd.f32 0.0, %v4829
      %v4831 = vpop.f32.mrf.mxu0
      %v4832 = vpop.f32.mrf.mxu0
      %v4833 = vadd.f32 0.0, %v4832
      %v4834 = vpop.f32.mrf.mxu0
      %4835 = vmatprep.mubr.bf16.mxu0 0
      %4836 = vmatmul.mubr.bf16.gmra.mxu0 %v4682
      %v4837 = vpop.f32.mrf.mxu0
      %v4838 = vadd.f32 0.0, %v4837
      %v4839 = vpop.f32.mrf.mxu0
      %v4840 = vpop.f32.mrf.mxu0
      %v4841 = vadd.f32 0.0, %v4840
      %v4842 = vpop.f32.mrf.mxu0
      %4843 = vmatprep.mubr.bf16.mxu0 0
      %4844 = vmatmul.mubr.bf16.gmra.mxu0 %v4685
      %v4845 = vpop.f32.mrf.mxu0
      %v4846 = vadd.f32 0.0, %v4845
      %v4847 = vpop.f32.mrf.mxu0
      %v4848 = vpop.f32.mrf.mxu0
      %v4849 = vadd.f32 0.0, %v4848
      %v4850 = vpop.f32.mrf.mxu0
      %4851 = vmatprep.mubr.bf16.mxu0 0
      %4852 = vmatmul.mubr.bf16.gmra.mxu0 %v4688
      %v4853 = vpop.f32.mrf.mxu0
      %v4854 = vadd.f32 0.0, %v4853
      %v4855 = vpop.f32.mrf.mxu0
      %v4856 = vpop.f32.mrf.mxu0
      %v4857 = vadd.f32 0.0, %v4856
      %v4858 = vpop.f32.mrf.mxu0
      %4859 = vmatprep.mubr.bf16.mxu0 0
      %4860 = vmatmul.mubr.bf16.gmra.mxu0 %v4691
      %v4861 = vpop.f32.mrf.mxu0
      %v4862 = vadd.f32 0.0, %v4861
      %v4863 = vpop.f32.mrf.mxu0
      %v4864 = vpop.f32.mrf.mxu0
      %v4865 = vadd.f32 0.0, %v4864
      %v4866 = vpop.f32.mrf.mxu0
      %4867 = vmatprep.mubr.bf16.mxu0 0
      %4868 = vmatmul.mubr.bf16.gmra.mxu0 %v4694
      %v4869 = vpop.f32.mrf.mxu0
      %v4870 = vadd.f32 0.0, %v4869
      %v4871 = vpop.f32.mrf.mxu0
      %v4872 = vpop.f32.mrf.mxu0
      %v4873 = vadd.f32 0.0, %v4872
      %v4874 = vpop.f32.mrf.mxu0
      %4875 = vdwg.mxu0
      %v4876 = vld [vmem:[%s12] sm:$0x1]
      %v4878 = vlaneseq
      %v4879 = vshrl.u32 %v4878, 7
      %v4880 = vsub.s32 0, %v4879
      %v4881 = vrot.slane %v4876, %v4880
      %v4883 = vmul.f32 %v4734, %v4881
      %v4884 = vmul.f32 %v4737, %v4881
      %v4885 = vmul.f32 %v4742, %v4881
      %v4886 = vmul.f32 %v4745, %v4881
      %v4887 = vmul.f32 %v4750, %v4881
      %v4888 = vmul.f32 %v4753, %v4881
      %v4889 = vmul.f32 %v4758, %v4881
      %v4890 = vmul.f32 %v4761, %v4881
      %v4891 = vmul.f32 %v4766, %v4881
      %v4892 = vmul.f32 %v4769, %v4881
      %v4893 = vmul.f32 %v4774, %v4881
      %v4894 = vmul.f32 %v4777, %v4881
      %v4895 = vmul.f32 %v4782, %v4881
      %v4896 = vmul.f32 %v4785, %v4881
      %v4897 = vmul.f32 %v4790, %v4881
      %v4898 = vmul.f32 %v4793, %v4881
      %v4899 = vmul.f32 %v4798, %v4881
      %v4900 = vmul.f32 %v4801, %v4881
      %v4901 = vmul.f32 %v4806, %v4881
      %v4902 = vmul.f32 %v4809, %v4881
      %v4903 = vmul.f32 %v4814, %v4881
      %v4904 = vmul.f32 %v4817, %v4881
      %v4905 = vmul.f32 %v4822, %v4881
      %v4906 = vmul.f32 %v4825, %v4881
      %v4907 = vmul.f32 %v4830, %v4881
      %v4908 = vmul.f32 %v4833, %v4881
      %v4909 = vmul.f32 %v4838, %v4881
      %v4910 = vmul.f32 %v4841, %v4881
      %v4911 = vmul.f32 %v4846, %v4881
      %v4912 = vmul.f32 %v4849, %v4881
      %v4913 = vmul.f32 %v4854, %v4881
      %v4914 = vmul.f32 %v4857, %v4881
      %v4915 = vmul.f32 %v4862, %v4881
      %v4916 = vmul.f32 %v4865, %v4881
      %v4917 = vmul.f32 %v4870, %v4881
      %v4918 = vmul.f32 %v4873, %v4881
      %v4919 = vld [vmem:[%s13] sm:$0x1]
      %v4921 = vlaneseq
      %v4922 = vshrl.u32 %v4921, 7
      %v4923 = vsub.s32 0, %v4922
      %v4924 = vrot.slane %v4919, %v4923
      %v4926 = vadd.f32 %v4883, %v4924
      %v4927 = vadd.f32 %v4884, %v4924
      %v4928 = vadd.f32 %v4885, %v4924
      %v4929 = vadd.f32 %v4886, %v4924
      %v4930 = vadd.f32 %v4887, %v4924
      %v4931 = vadd.f32 %v4888, %v4924
      %v4932 = vadd.f32 %v4889, %v4924
      %v4933 = vadd.f32 %v4890, %v4924
      %v4934 = vadd.f32 %v4891, %v4924
      %v4935 = vadd.f32 %v4892, %v4924
      %v4936 = vadd.f32 %v4893, %v4924
      %v4937 = vadd.f32 %v4894, %v4924
      %v4938 = vadd.f32 %v4895, %v4924
      %v4939 = vadd.f32 %v4896, %v4924
      %v4940 = vadd.f32 %v4897, %v4924
      %v4941 = vadd.f32 %v4898, %v4924
      %v4942 = vadd.f32 %v4899, %v4924
      %v4943 = vadd.f32 %v4900, %v4924
      %v4944 = vadd.f32 %v4901, %v4924
      %v4945 = vadd.f32 %v4902, %v4924
      %v4946 = vadd.f32 %v4903, %v4924
      %v4947 = vadd.f32 %v4904, %v4924
      %v4948 = vadd.f32 %v4905, %v4924
      %v4949 = vadd.f32 %v4906, %v4924
      %v4950 = vadd.f32 %v4907, %v4924
      %v4951 = vadd.f32 %v4908, %v4924
      %v4952 = vadd.f32 %v4909, %v4924
      %v4953 = vadd.f32 %v4910, %v4924
      %v4954 = vadd.f32 %v4911, %v4924
      %v4955 = vadd.f32 %v4912, %v4924
      %v4956 = vadd.f32 %v4913, %v4924
      %v4957 = vadd.f32 %v4914, %v4924
      %v4958 = vadd.f32 %v4915, %v4924
      %v4959 = vadd.f32 %v4916, %v4924
      %v4960 = vadd.f32 %v4917, %v4924
      %v4961 = vadd.f32 %v4918, %v4924
      %v4962 = vadd.f32 %v4551, %v4926
      %v4963 = vadd.f32 %v4552, %v4927
      %v4964 = vadd.f32 %v4553, %v4928
      %v4965 = vadd.f32 %v4554, %v4929
      %v4966 = vadd.f32 %v4555, %v4930
      %v4967 = vadd.f32 %v4556, %v4931
      %v4968 = vadd.f32 %v4557, %v4932
      %v4969 = vadd.f32 %v4558, %v4933
      %v4970 = vadd.f32 %v4559, %v4934
      %v4971 = vadd.f32 %v4560, %v4935
      %v4972 = vadd.f32 %v4561, %v4936
      %v4973 = vadd.f32 %v4562, %v4937
      %v4974 = vadd.f32 %v4563, %v4938
      %v4975 = vadd.f32 %v4564, %v4939
      %v4976 = vadd.f32 %v4565, %v4940
      %v4977 = vadd.f32 %v4566, %v4941
      %v4978 = vadd.f32 %v4567, %v4942
      %v4979 = vadd.f32 %v4568, %v4943
      %v4980 = vadd.f32 %v4569, %v4944
      %v4981 = vadd.f32 %v4570, %v4945
      %v4982 = vadd.f32 %v4571, %v4946
      %v4983 = vadd.f32 %v4572, %v4947
      %v4984 = vadd.f32 %v4573, %v4948
      %v4985 = vadd.f32 %v4574, %v4949
      %v4986 = vadd.f32 %v4575, %v4950
      %v4987 = vadd.f32 %v4576, %v4951
      %v4988 = vadd.f32 %v4577, %v4952
      %v4989 = vadd.f32 %v4578, %v4953
      %v4990 = vadd.f32 %v4579, %v4954
      %v4991 = vadd.f32 %v4580, %v4955
      %v4992 = vadd.f32 %v4581, %v4956
      %v4993 = vadd.f32 %v4582, %v4957
      %v4994 = vadd.f32 %v4583, %v4958
      %v4995 = vadd.f32 %v4584, %v4959
      %v4996 = vadd.f32 %v4585, %v4960
      %v4997 = vadd.f32 %v4586, %v4961
      %v4998 = vmax.f32 %v4962, 0.0
      %v4999 = vmax.f32 %v4963, 0.0
      %v5000 = vmax.f32 %v4964, 0.0
      %v5001 = vmax.f32 %v4965, 0.0
      %v5002 = vmax.f32 %v4966, 0.0
      %v5003 = vmax.f32 %v4967, 0.0
      %v5004 = vmax.f32 %v4968, 0.0
      %v5005 = vmax.f32 %v4969, 0.0
      %v5006 = vmax.f32 %v4970, 0.0
      %v5007 = vmax.f32 %v4971, 0.0
      %v5008 = vmax.f32 %v4972, 0.0
      %v5009 = vmax.f32 %v4973, 0.0
      %v5010 = vmax.f32 %v4974, 0.0
      %v5011 = vmax.f32 %v4975, 0.0
      %v5012 = vmax.f32 %v4976, 0.0
      %v5013 = vmax.f32 %v4977, 0.0
      %v5014 = vmax.f32 %v4978, 0.0
      %v5015 = vmax.f32 %v4979, 0.0
      %v5016 = vmax.f32 %v4980, 0.0
      %v5017 = vmax.f32 %v4981, 0.0
      %v5018 = vmax.f32 %v4982, 0.0
      %v5019 = vmax.f32 %v4983, 0.0
      %v5020 = vmax.f32 %v4984, 0.0
      %v5021 = vmax.f32 %v4985, 0.0
      %v5022 = vmax.f32 %v4986, 0.0
      %v5023 = vmax.f32 %v4987, 0.0
      %v5024 = vmax.f32 %v4988, 0.0
      %v5025 = vmax.f32 %v4989, 0.0
      %v5026 = vmax.f32 %v4990, 0.0
      %v5027 = vmax.f32 %v4991, 0.0
      %v5028 = vmax.f32 %v4992, 0.0
      %v5029 = vmax.f32 %v4993, 0.0
      %v5030 = vmax.f32 %v4994, 0.0
      %v5031 = vmax.f32 %v4995, 0.0
      %v5032 = vmax.f32 %v4996, 0.0
      %v5033 = vmax.f32 %v4997, 0.0
      %vm5034 = vcmask 130048
      %5035 = vst.msk [vmem:[%s467] sm:$0xff] %vm5034, %v4998
      %5036 = vst.msk [vmem:[%s467 + $0x8] sm:$0xff] %vm5034, %v4999
      %5037 = vst.msk [vmem:[%s467 + $0x10] sm:$0xff] %vm5034, %v5000
      %5038 = vst.msk [vmem:[%s467 + $0x18] sm:$0xff] %vm5034, %v5001
      %5039 = vst.msk [vmem:[%s467 + $0x20] sm:$0xff] %vm5034, %v5002
      %5040 = vst.msk [vmem:[%s467 + $0x28] sm:$0xff] %vm5034, %v5003
      %5041 = vst.msk [vmem:[%s467 + $0x30] sm:$0xff] %vm5034, %v5004
      %5042 = vst.msk [vmem:[%s467 + $0x38] sm:$0xff] %vm5034, %v5005
      %5043 = vst.msk [vmem:[%s467 + $0x40] sm:$0xff] %vm5034, %v5006
      %5044 = vst.msk [vmem:[%s467 + $0x48] sm:$0xff] %vm5034, %v5007
      %5045 = vst.msk [vmem:[%s467 + $0x50] sm:$0xff] %vm5034, %v5008
      %5046 = vst.msk [vmem:[%s467 + $0x58] sm:$0xff] %vm5034, %v5009
      %5047 = vst.msk [vmem:[%s467 + $0x60] sm:$0xff] %vm5034, %v5010
      %5048 = vst.msk [vmem:[%s467 + $0x68] sm:$0xff] %vm5034, %v5011
      %5049 = vst.msk [vmem:[%s467 + $0x70] sm:$0xff] %vm5034, %v5012
      %5050 = vst.msk [vmem:[%s467 + $0x78] sm:$0xff] %vm5034, %v5013
      %5051 = vst.msk [vmem:[%s467 + $0x80] sm:$0xff] %vm5034, %v5014
      %5052 = vst.msk [vmem:[%s467 + $0x88] sm:$0xff] %vm5034, %v5015
      %5053 = vst.msk [vmem:[%s467 + $0x90] sm:$0xff] %vm5034, %v5016
      %5054 = vst.msk [vmem:[%s467 + $0x98] sm:$0xff] %vm5034, %v5017
      %5055 = vst.msk [vmem:[%s467 + $0xa0] sm:$0xff] %vm5034, %v5018
      %5056 = vst.msk [vmem:[%s467 + $0xa8] sm:$0xff] %vm5034, %v5019
      %5057 = vst.msk [vmem:[%s467 + $0xb0] sm:$0xff] %vm5034, %v5020
      %5058 = vst.msk [vmem:[%s467 + $0xb8] sm:$0xff] %vm5034, %v5021
      %5059 = vst.msk [vmem:[%s467 + $0xc0] sm:$0xff] %vm5034, %v5022
      %5060 = vst.msk [vmem:[%s467 + $0xc8] sm:$0xff] %vm5034, %v5023
      %5061 = vst.msk [vmem:[%s467 + $0xd0] sm:$0xff] %vm5034, %v5024
      %5062 = vst.msk [vmem:[%s467 + $0xd8] sm:$0xff] %vm5034, %v5025
      %5063 = vst.msk [vmem:[%s467 + $0xe0] sm:$0xff] %vm5034, %v5026
      %5064 = vst.msk [vmem:[%s467 + $0xe8] sm:$0xff] %vm5034, %v5027
      %5065 = vst.msk [vmem:[%s467 + $0xf0] sm:$0xff] %vm5034, %v5028
      %5066 = vst.msk [vmem:[%s467 + $0xf8] sm:$0xff] %vm5034, %v5029
      %5067 = vst.msk [vmem:[%s467 + $0x100] sm:$0xff] %vm5034, %v5030
      %5068 = vst.msk [vmem:[%s467 + $0x108] sm:$0xff] %vm5034, %v5031
      %5069 = vst.msk [vmem:[%s467 + $0x110] sm:$0xff] %vm5034, %v5032
      %5070 = vst.msk [vmem:[%s467 + $0x118] sm:$0xff] %vm5034, %v5033
      %p5071 = scmp.lt.s32.totalorder %s25, 1
      %s5072 = scalar_select %p5071, %s25, 1
      %s5073 = smul.addr %s5072, 36
      %s5074 = smul.addr %s5073, 8
      %s5075 = scalar_lea.vmem %s14, %s5074
      // Predicated region
      $region77: #{bottleneck_forward.1} parent=75 // pred_check
        %p5076 = pneg %p342
      $region78: #{bottleneck_forward.1} parent=75 // pred_check_branch
        %5078 = sbr.rel (%p5076) target = $region80
      $region79: #{bottleneck_forward.1} parent=75 // pred_region
        _
      $region80: #{bottleneck_forward.1} parent=75 // pred_fallthru
        _
    $region76: #{bottleneck_forward.1} parent=5 // pred_fallthru
      _
    %p5079 = scmp.le.s32.totalorder 2, %s20
    // Predicated region
    $region81: #{bottleneck_forward.1} parent=5 // pred_check
      %p5080 = pneg %p5079
    $region82: #{bottleneck_forward.1} parent=5 // pred_check_branch
      %5082 = sbr.rel (%p5080) target = $region84
    $region83: #{bottleneck_forward.1} parent=5 // pred_region
      %s5083 = ssub.s32 %s20, 2
      // Predicated region
      $region85: #{bottleneck_forward.1} parent=83 // pred_check
        %p5084 = pneg %p348
      $region86: #{bottleneck_forward.1} parent=83 // pred_check_branch
        %5086 = sbr.rel (%p5084) target = $region88
      $region87: #{bottleneck_forward.1} parent=83 // pred_region
        %p5087 = scmp.lt.s32.totalorder %s26, 1
        %s5088 = scalar_select %p5087, %s26, 1
        %s5089 = smul.addr %s5088, 36
        %s5090 = smul.addr %s5089, 8
        %s5091 = scalar_lea.vmem %s14, %s5090
      $region88: #{bottleneck_forward.1} parent=83 // pred_fallthru
        _
    $region84: #{bottleneck_forward.1} parent=5 // pred_fallthru
      _
  $region6: #{bottleneck_forward.1} parent=0 // loop_footer
    %s24 = sadd.s32 1, %s20
  $region7: #{bottleneck_forward.1} parent=0 // loop_footer_branch
    %19 = sbr.rel target = $region3
  $region8: #{bottleneck_forward.1} parent=0 // loop_exit
    _

</llo_original>
